<compile_context>
chip_gen: v7x
topology: tpu7x:2x2x1
jax: 0.10.0
libtpu: 0.0.40
codegen_flags: <defaults>
</compile_context>

<pallas_src>
import jax
import jax.numpy as jnp
from jax.experimental import pallas as pl
from jax.experimental.pallas import tpu as pltpu

BN_EPS = 1e-5


def _vmem_limit_bytes():
    """Generation-aware scoped-VMEM limit (v5e/v6e: 128 MiB phys, v7x: 64 MiB)."""
    try:
        cap = int(pltpu.get_tpu_info().vmem_capacity_bytes)
    except Exception:
        cap = 64 * 1024 * 1024
    return min((cap * 3) // 4, 100 * 1024 * 1024)


# -----------------------------------------------------------------------------
# Fused BasicBlock kernel: one image per grid step, everything stays in VMEM.
# -----------------------------------------------------------------------------
def _basic_block_kernel(x_ref,
                        w1_ref, fcw1_ref, fcb1_ref, hw1_ref, hb1_ref, bn1s_ref, bn1b_ref,
                        w2_ref, fcw2_ref, fcb2_ref, hw2_ref, hb2_ref, bn2s_ref, bn2b_ref,
                        o_ref, pad1_ref, pad2_ref):
    _, H, W, C = x_ref.shape
    O = o_ref.shape[-1]
    HW = H * W

    x = x_ref[0]                                   # (H, W, C) f32, read from HBM once
    x_flat = x.reshape(HW, C)                      # used for GAP and the residual add

    def attention(pooled, fcw_ref, fcb_ref, hw_ref, hb_ref, cin):
        # GAP -> 1x1 fc (attention-BN folded offline into fcw/fcb) -> ReLU ->
        # one fused head matmul -> sigmoid -> split channel/filter/spatial.
        a = jnp.dot(pooled, fcw_ref[...], preferred_element_type=jnp.float32)
        a = jnp.maximum(a + fcb_ref[...], 0.0)
        h = jax.nn.sigmoid(
            jnp.dot(a, hw_ref[...], preferred_element_type=jnp.float32) + hb_ref[...])
        return h[:, :cin], h[:, cin:cin + O], h[:, cin + O:]   # ch(1,cin) fi(1,O) sp(1,9)

    def conv3x3(pad_ref, inp_hwc, ch, sp, w_ref, cin):
        # Channel attention applied ONCE to the input, then zero-padded into a
        # VMEM scratch (no HBM padded copy).  Scratch is re-zeroed every call
        # so megacore grid splitting stays correct.
        pad_ref[...] = jnp.zeros_like(pad_ref)
        pad_ref[1:H + 1, 1:W + 1, :] = (inp_hwc * ch).astype(jnp.bfloat16)
        xs = pad_ref[...]                                         # (H+2, Wpad, cin) bf16
        # 9 shifted views lane-concatenated -> one K = 9*cin MXU matmul.
        patches = jnp.concatenate(
            [xs[kh:kh + H, kw:kw + W, :].reshape(HW, cin)
             for kh in range(3) for kw in range(3)], axis=1)      # (HW, 9*cin) bf16
        # Spatial attention folded into the small per-tap weight (weight-side).
        wk = jnp.concatenate(
            [(w_ref[k] * sp[0:1, k:k + 1]).astype(jnp.bfloat16) for k in range(9)],
            axis=0)                                               # (9*cin, O) bf16
        return jnp.dot(patches, wk, preferred_element_type=jnp.float32)   # (HW, O) f32

    # ---- odconv1 -> bn1 -> relu (all resident in VMEM) ----------------------
    pooled1 = jnp.mean(x_flat, axis=0, keepdims=True)             # (1, C) GAP, no re-read
    ch1, fi1, sp1 = attention(pooled1, fcw1_ref, fcb1_ref, hw1_ref, hb1_ref, C)
    acc1 = conv3x3(pad1_ref, x, ch1, sp1, w1_ref, C)
    out1 = jnp.maximum(acc1 * (fi1 * bn1s_ref[...]) + bn1b_ref[...], 0.0)   # (HW, O)

    # ---- odconv2 -> bn2 -> +identity -> relu --------------------------------
    pooled2 = jnp.mean(out1, axis=0, keepdims=True)               # GAP of VMEM-resident out1
    ch2, fi2, sp2 = attention(pooled2, fcw2_ref, fcb2_ref, hw2_ref, hb2_ref, O)
    acc2 = conv3x3(pad2_ref, out1.reshape(H, W, O), ch2, sp2, w2_ref, O)
    out2 = acc2 * (fi2 * bn2s_ref[...]) + bn2b_ref[...] + x_flat  # residual from VMEM
    o_ref[0] = jnp.maximum(out2, 0.0)


# -----------------------------------------------------------------------------
# Wrapper
# -----------------------------------------------------------------------------
def _basic_block_pallas(x_nhwc, params):
    B, H, W, C = x_nhwc.shape
    p1, p2 = params["conv1"], params["conv2"]
    O = p1["w"].shape[-1]
    assert C == O and p2["w"].shape[1] == O and p2["w"].shape[2] == O, (
        "BasicBlock with downsample=None / stride=1 requires inplanes == planes")
    A1 = p1["fcw"].shape[-1]
    A2 = p2["fcw"].shape[-1]
    H1 = C + O + 9                         # fused attention-head width, conv1
    H2 = O + O + 9                         # fused attention-head width, conv2
    HW = H * W
    Hp = H + 2
    Wpad = ((W + 2 + 7) // 8) * 8          # sublane-aligned padded width in VMEM
    c2 = lambda b: (0, 0)
    c3 = lambda b: (0, 0, 0)

    out = pl.pallas_call(
        _basic_block_kernel,
        grid=(B,),
        in_specs=[
            pl.BlockSpec((1, H, W, C), lambda b: (b, 0, 0, 0)),     # image (read once)
            pl.BlockSpec((9, C, O), c3),                            # conv1 taps (bf16)
            pl.BlockSpec((C, A1), c2), pl.BlockSpec((1, A1), c2),   # conv1 attn fc (+BN folded)
            pl.BlockSpec((A1, H1), c2), pl.BlockSpec((1, H1), c2),  # conv1 fused heads
            pl.BlockSpec((1, O), c2), pl.BlockSpec((1, O), c2),     # bn1 scale / bias
            pl.BlockSpec((9, O, O), c3),                            # conv2 taps (bf16)
            pl.BlockSpec((O, A2), c2), pl.BlockSpec((1, A2), c2),   # conv2 attn fc (+BN folded)
            pl.BlockSpec((A2, H2), c2), pl.BlockSpec((1, H2), c2),  # conv2 fused heads
            pl.BlockSpec((1, O), c2), pl.BlockSpec((1, O), c2),     # bn2 scale / bias
        ],
        out_specs=pl.BlockSpec((1, HW, O), lambda b: (b, 0, 0)),
        out_shape=jax.ShapeDtypeStruct((B, HW, O), jnp.float32),
        scratch_shapes=[pltpu.VMEM((Hp, Wpad, C), jnp.bfloat16),    # padded conv1 input
                        pltpu.VMEM((Hp, Wpad, O), jnp.bfloat16)],   # padded conv2 input
        compiler_params=pltpu.CompilerParams(
            dimension_semantics=("parallel",),        # v7x megacore splits the batch
            vmem_limit_bytes=_vmem_limit_bytes()),
    )(x_nhwc, p1["w"], p1["fcw"], p1["fcb"], p1["hw"], p1["hb"],
      params["bn1_scale"], params["bn1_bias"],
      p2["w"], p2["fcw"], p2["fcb"], p2["hw"], p2["hb"],
      params["bn2_scale"], params["bn2_bias"])
    return out.reshape(B, H, W, O)                   # free XLA reshape (same bytes)


# -----------------------------------------------------------------------------
# Parameter setup (arrays only -- safe to pass through jax.jit).
# -----------------------------------------------------------------------------
def init_odconv_params(key, c_in, c_out, reduction=0.0625):
    A = max(int(c_in * reduction), 16)               # attention_channel (min 16)
    k = jax.random.split(key, 5)
    # conv weight (O, C, 3, 3) -> per-tap (9, C, O), tap index = kh*3 + kw, bf16 at rest
    w = jax.random.normal(k[0], (c_out, c_in, 3, 3), jnp.float32) * (2.0 / (9 * c_in)) ** 0.5
    w_taps = jnp.transpose(w, (2, 3, 1, 0)).reshape(9, c_in, c_out).astype(jnp.bfloat16)
    att_bn_scale = 1.0 / (1.0 + BN_EPS) ** 0.5       # eval-mode attention BN folded into fc
    chw = jax.random.normal(k[2], (A, c_in), jnp.float32) * (2.0 / A) ** 0.5
    fiw = jax.random.normal(k[3], (A, c_out), jnp.float32) * (2.0 / A) ** 0.5
    spw = jax.random.normal(k[4], (A, 9), jnp.float32) * (2.0 / A) ** 0.5
    return dict(
        w=w_taps,
        fcw=jax.random.normal(k[1], (c_in, A), jnp.float32) * (2.0 / c_in) ** 0.5 * att_bn_scale,
        fcb=jnp.zeros((1, A), jnp.float32),
        # channel / filter / spatial heads fused into one matmul: (A, C + O + 9)
        hw=jnp.concatenate([chw, fiw, spw], axis=1),
        hb=jnp.zeros((1, c_in + c_out + 9), jnp.float32),
    )


def init_basic_block_params(key, inplanes, planes):
    k1, k2 = jax.random.split(key)
    bn_scale = jnp.full((1, planes), 1.0 / (1.0 + BN_EPS) ** 0.5, jnp.float32)  # eval-mode BN
    bn_bias = jnp.zeros((1, planes), jnp.float32)
    return dict(
        conv1=init_odconv_params(k1, inplanes, planes),
        conv2=init_odconv_params(k2, planes, planes),
        bn1_scale=bn_scale, bn1_bias=bn_bias,
        bn2_scale=bn_scale, bn2_bias=bn_bias,
    )


def basic_block_forward_nhwc(x_nhwc, params):
    """Preferred entry point: NHWC in/out, no extra transpose HBM passes."""
    return _basic_block_pallas(x_nhwc.astype(jnp.float32), params)


def basic_block_forward(x_nchw, params):
    """BasicBlock.forward (downsample=None, stride=1); NCHW in / NCHW out."""
    x = jnp.transpose(x_nchw, (0, 2, 3, 1))
    y = basic_block_forward_nhwc(x, params)
    return jnp.transpose(y, (0, 3, 1, 2))


if __name__ == "__main__":
    B, C, H, W = 2, 16, 16, 16              # inplanes = planes = 16, stride = 1
    key = jax.random.PRNGKey(0)
    kx, kp = jax.random.split(key)
    x = jax.random.normal(kx, (B, C, H, W), jnp.float32)       # NCHW like PyTorch
    params = init_basic_block_params(kp, inplanes=C, planes=C)

    y = jax.jit(basic_block_forward)(x, params)
    jax.block_until_ready(y)
    assert y.shape == (B, C, H, W) and y.dtype == jnp.float32
    print("KERNEL_OK")
</pallas_src>

<mosaic_0001>
module attributes {stable_mosaic.version = 11 : i64} {
  func.func @_basic_block_kernel(%arg0: i32, %arg1: memref<1x16x16x16xf32, #tpu.memory_space<vmem>>, %arg2: memref<9x16x16xbf16, #tpu.memory_space<vmem>>, %arg3: memref<16x16xf32, #tpu.memory_space<vmem>>, %arg4: memref<1x16xf32, #tpu.memory_space<vmem>>, %arg5: memref<16x41xf32, #tpu.memory_space<vmem>>, %arg6: memref<1x41xf32, #tpu.memory_space<vmem>>, %arg7: memref<1x16xf32, #tpu.memory_space<vmem>>, %arg8: memref<1x16xf32, #tpu.memory_space<vmem>>, %arg9: memref<9x16x16xbf16, #tpu.memory_space<vmem>>, %arg10: memref<16x16xf32, #tpu.memory_space<vmem>>, %arg11: memref<1x16xf32, #tpu.memory_space<vmem>>, %arg12: memref<16x41xf32, #tpu.memory_space<vmem>>, %arg13: memref<1x41xf32, #tpu.memory_space<vmem>>, %arg14: memref<1x16xf32, #tpu.memory_space<vmem>>, %arg15: memref<1x16xf32, #tpu.memory_space<vmem>>, %arg16: memref<1x256x16xf32, #tpu.memory_space<vmem>>, %arg17: memref<18x24x16xbf16, #tpu.memory_space<vmem>>, %arg18: memref<18x24x16xbf16, #tpu.memory_space<vmem>>) attributes {dimension_semantics = [#tpu.dimension_semantics<parallel>], iteration_bounds = array<i64: 2>, scalar_prefetch = 0 : i64, scratch_operands = 2 : i64, tpu.core_type = #tpu.core_type<tc>, window_params = [{transform_indices = @transform_0, window_bounds = array<i64: 1, 16, 16, 16>}, {pipeline_mode = #tpu.pipeline_mode<synchronous>, transform_indices = @transform_1, window_bounds = array<i64: 9, 16, 16>}, {pipeline_mode = #tpu.pipeline_mode<synchronous>, transform_indices = @transform_2, window_bounds = array<i64: 16, 16>}, {pipeline_mode = #tpu.pipeline_mode<synchronous>, transform_indices = @transform_3, window_bounds = array<i64: 1, 16>}, {pipeline_mode = #tpu.pipeline_mode<synchronous>, transform_indices = @transform_4, window_bounds = array<i64: 16, 41>}, {pipeline_mode = #tpu.pipeline_mode<synchronous>, transform_indices = @transform_5, window_bounds = array<i64: 1, 41>}, {pipeline_mode = #tpu.pipeline_mode<synchronous>, transform_indices = @transform_6, window_bounds = array<i64: 1, 16>}, {pipeline_mode = #tpu.pipeline_mode<synchronous>, transform_indices = @transform_7, window_bounds = array<i64: 1, 16>}, {pipeline_mode = #tpu.pipeline_mode<synchronous>, transform_indices = @transform_8, window_bounds = array<i64: 9, 16, 16>}, {pipeline_mode = #tpu.pipeline_mode<synchronous>, transform_indices = @transform_9, window_bounds = array<i64: 16, 16>}, {pipeline_mode = #tpu.pipeline_mode<synchronous>, transform_indices = @transform_10, window_bounds = array<i64: 1, 16>}, {pipeline_mode = #tpu.pipeline_mode<synchronous>, transform_indices = @transform_11, window_bounds = array<i64: 16, 41>}, {pipeline_mode = #tpu.pipeline_mode<synchronous>, transform_indices = @transform_12, window_bounds = array<i64: 1, 41>}, {pipeline_mode = #tpu.pipeline_mode<synchronous>, transform_indices = @transform_13, window_bounds = array<i64: 1, 16>}, {pipeline_mode = #tpu.pipeline_mode<synchronous>, transform_indices = @transform_14, window_bounds = array<i64: 1, 16>}, {transform_indices = @transform_15, window_bounds = array<i64: 1, 256, 16>}]} {
    %c0 = arith.constant 0 : index
    %c0_0 = arith.constant 0 : index
    %c0_1 = arith.constant 0 : index
    %c0_2 = arith.constant 0 : index
    %0 = vector.load %arg1[%c0, %c0_0, %c0_1, %c0_2] : memref<1x16x16x16xf32, #tpu.memory_space<vmem>>, vector<1x16x16x16xf32>
    %1 = vector.shape_cast %0 : vector<1x16x16x16xf32> to vector<16x16x16xf32>
    %2 = vector.shape_cast %1 : vector<16x16x16xf32> to vector<256x16xf32>
    %cst = arith.constant dense<0.000000e+00> : vector<16xf32>
    %3 = vector.multi_reduction <add>, %2, %cst [0] : vector<256x16xf32> to vector<16xf32>
    %4 = vector.shape_cast %3 : vector<16xf32> to vector<1x16xf32>
    %cst_3 = arith.constant 2.560000e+02 : f32
    %5 = vector.broadcast %cst_3 : f32 to vector<1x16xf32>
    %6 = arith.divf %4, %5 : vector<1x16xf32>
    %c0_4 = arith.constant 0 : index
    %c0_5 = arith.constant 0 : index
    %7 = vector.load %arg3[%c0_4, %c0_5] : memref<16x16xf32, #tpu.memory_space<vmem>>, vector<16x16xf32>
    %cst_6 = arith.constant dense<0.000000e+00> : vector<1x16xf32>
    %8 = tpu.matmul %6, %7, %cst_6 {dimension_numbers = #tpu.dot_dimension_numbers<[1], [0], [0], [1], [0, 0, 1, 1], [], []>} : vector<1x16xf32>, vector<16x16xf32>, vector<1x16xf32> -> vector<1x16xf32>
    %c0_7 = arith.constant 0 : index
    %c0_8 = arith.constant 0 : index
    %9 = vector.load %arg4[%c0_7, %c0_8] : memref<1x16xf32, #tpu.memory_space<vmem>>, vector<1x16xf32>
    %10 = arith.addf %8, %9 : vector<1x16xf32>
    %cst_9 = arith.constant 0.000000e+00 : f32
    %11 = vector.broadcast %cst_9 : f32 to vector<1x16xf32>
    %12 = arith.maximumf %10, %11 : vector<1x16xf32>
    %c0_10 = arith.constant 0 : index
    %c0_11 = arith.constant 0 : index
    %13 = vector.load %arg5[%c0_10, %c0_11] : memref<16x41xf32, #tpu.memory_space<vmem>>, vector<16x41xf32>
    %cst_12 = arith.constant dense<0.000000e+00> : vector<1x41xf32>
    %14 = tpu.matmul %12, %13, %cst_12 {dimension_numbers = #tpu.dot_dimension_numbers<[1], [0], [0], [1], [0, 0, 1, 1], [], []>} : vector<1x16xf32>, vector<16x41xf32>, vector<1x41xf32> -> vector<1x41xf32>
    %c0_13 = arith.constant 0 : index
    %c0_14 = arith.constant 0 : index
    %15 = vector.load %arg6[%c0_13, %c0_14] : memref<1x41xf32, #tpu.memory_space<vmem>>, vector<1x41xf32>
    %16 = arith.addf %14, %15 : vector<1x41xf32>
    %17 = arith.negf %16 : vector<1x41xf32>
    %18 = math.exp %17 : vector<1x41xf32>
    %cst_15 = arith.constant 1.000000e+00 : f32
    %19 = vector.broadcast %cst_15 : f32 to vector<1x41xf32>
    %20 = arith.addf %19, %18 : vector<1x41xf32>
    %21 = arith.divf %19, %20 : vector<1x41xf32>
    %22 = vector.extract_strided_slice %21 {offsets = [0, 0], sizes = [1, 16], strides = [1, 1]} : vector<1x41xf32> to vector<1x16xf32>
    %23 = vector.extract_strided_slice %21 {offsets = [0, 16], sizes = [1, 16], strides = [1, 1]} : vector<1x41xf32> to vector<1x16xf32>
    %24 = vector.extract_strided_slice %21 {offsets = [0, 32], sizes = [1, 9], strides = [1, 1]} : vector<1x41xf32> to vector<1x9xf32>
    %cst_16 = arith.constant 0.000000e+00 : bf16
    %25 = vector.broadcast %cst_16 : bf16 to vector<18x24x16xbf16>
    %c0_17 = arith.constant 0 : index
    %c0_18 = arith.constant 0 : index
    %c0_19 = arith.constant 0 : index
    %26 = vector.load %arg17[%c0_17, %c0_18, %c0_19] : memref<18x24x16xbf16, #tpu.memory_space<vmem>>, vector<18x24x16xbf16>
    tpu.vector_store %arg17[%c0_17, %c0_18, %c0_19], %25 {strides = array<i32>} : memref<18x24x16xbf16, #tpu.memory_space<vmem>>, vector<18x24x16xbf16>,
    %27 = vector.shape_cast %22 : vector<1x16xf32> to vector<1x1x16xf32>
    %28 = vector.broadcast %27 : vector<1x1x16xf32> to vector<16x16x16xf32>
    %29 = arith.mulf %1, %28 : vector<16x16x16xf32>
    %30 = arith.truncf %29 : vector<16x16x16xf32> to vector<16x16x16xbf16>
    %c1 = arith.constant 1 : index
    %c1_20 = arith.constant 1 : index
    %c0_21 = arith.constant 0 : index
    %31 = vector.load %arg17[%c1, %c1_20, %c0_21] : memref<18x24x16xbf16, #tpu.memory_space<vmem>>, vector<16x16x16xbf16>
    tpu.vector_store %arg17[%c1, %c1_20, %c0_21], %30 {strides = array<i32>} : memref<18x24x16xbf16, #tpu.memory_space<vmem>>, vector<16x16x16xbf16>,
    %c0_22 = arith.constant 0 : index
    %c0_23 = arith.constant 0 : index
    %c0_24 = arith.constant 0 : index
    %32 = vector.load %arg17[%c0_22, %c0_23, %c0_24] : memref<18x24x16xbf16, #tpu.memory_space<vmem>>, vector<18x24x16xbf16>
    %33 = vector.extract_strided_slice %32 {offsets = [0, 0, 0], sizes = [16, 16, 16], strides = [1, 1, 1]} : vector<18x24x16xbf16> to vector<16x16x16xbf16>
    %34 = vector.shape_cast %33 : vector<16x16x16xbf16> to vector<256x16xbf16>
    %35 = vector.extract_strided_slice %32 {offsets = [0, 1, 0], sizes = [16, 16, 16], strides = [1, 1, 1]} : vector<18x24x16xbf16> to vector<16x16x16xbf16>
    %36 = vector.shape_cast %35 : vector<16x16x16xbf16> to vector<256x16xbf16>
    %37 = vector.extract_strided_slice %32 {offsets = [0, 2, 0], sizes = [16, 16, 16], strides = [1, 1, 1]} : vector<18x24x16xbf16> to vector<16x16x16xbf16>
    %38 = vector.shape_cast %37 : vector<16x16x16xbf16> to vector<256x16xbf16>
    %39 = vector.extract_strided_slice %32 {offsets = [1, 0, 0], sizes = [16, 16, 16], strides = [1, 1, 1]} : vector<18x24x16xbf16> to vector<16x16x16xbf16>
    %40 = vector.shape_cast %39 : vector<16x16x16xbf16> to vector<256x16xbf16>
    %41 = vector.extract_strided_slice %32 {offsets = [1, 1, 0], sizes = [16, 16, 16], strides = [1, 1, 1]} : vector<18x24x16xbf16> to vector<16x16x16xbf16>
    %42 = vector.shape_cast %41 : vector<16x16x16xbf16> to vector<256x16xbf16>
    %43 = vector.extract_strided_slice %32 {offsets = [1, 2, 0], sizes = [16, 16, 16], strides = [1, 1, 1]} : vector<18x24x16xbf16> to vector<16x16x16xbf16>
    %44 = vector.shape_cast %43 : vector<16x16x16xbf16> to vector<256x16xbf16>
    %45 = vector.extract_strided_slice %32 {offsets = [2, 0, 0], sizes = [16, 16, 16], strides = [1, 1, 1]} : vector<18x24x16xbf16> to vector<16x16x16xbf16>
    %46 = vector.shape_cast %45 : vector<16x16x16xbf16> to vector<256x16xbf16>
    %47 = vector.extract_strided_slice %32 {offsets = [2, 1, 0], sizes = [16, 16, 16], strides = [1, 1, 1]} : vector<18x24x16xbf16> to vector<16x16x16xbf16>
    %48 = vector.shape_cast %47 : vector<16x16x16xbf16> to vector<256x16xbf16>
    %49 = vector.extract_strided_slice %32 {offsets = [2, 2, 0], sizes = [16, 16, 16], strides = [1, 1, 1]} : vector<18x24x16xbf16> to vector<16x16x16xbf16>
    %50 = vector.shape_cast %49 : vector<16x16x16xbf16> to vector<256x16xbf16>
    %51 = tpu.concatenate %34, %36, %38, %40, %42, %44, %46, %48, %50 in 1 : vector<256x16xbf16>, vector<256x16xbf16>, vector<256x16xbf16>, vector<256x16xbf16>, vector<256x16xbf16>, vector<256x16xbf16>, vector<256x16xbf16>, vector<256x16xbf16>, vector<256x16xbf16> -> vector<256x144xbf16>
    %c0_25 = arith.constant 0 : index
    %c0_26 = arith.constant 0 : index
    %c0_27 = arith.constant 0 : index
    %52 = vector.load %arg2[%c0_25, %c0_26, %c0_27] : memref<9x16x16xbf16, #tpu.memory_space<vmem>>, vector<1x16x16xbf16>
    %53 = vector.shape_cast %52 : vector<1x16x16xbf16> to vector<16x16xbf16>
    %54 = vector.extract_strided_slice %24 {offsets = [0, 0], sizes = [1, 1], strides = [1, 1]} : vector<1x9xf32> to vector<1x1xf32>
    %55 = arith.extf %53 : vector<16x16xbf16> to vector<16x16xf32>
    %56 = vector.broadcast %54 : vector<1x1xf32> to vector<16x16xf32>
    %57 = arith.mulf %55, %56 : vector<16x16xf32>
    %58 = arith.truncf %57 : vector<16x16xf32> to vector<16x16xbf16>
    %c1_28 = arith.constant 1 : index
    %c0_29 = arith.constant 0 : index
    %c0_30 = arith.constant 0 : index
    %59 = vector.load %arg2[%c1_28, %c0_29, %c0_30] : memref<9x16x16xbf16, #tpu.memory_space<vmem>>, vector<1x16x16xbf16>
    %60 = vector.shape_cast %59 : vector<1x16x16xbf16> to vector<16x16xbf16>
    %61 = vector.extract_strided_slice %24 {offsets = [0, 1], sizes = [1, 1], strides = [1, 1]} : vector<1x9xf32> to vector<1x1xf32>
    %62 = arith.extf %60 : vector<16x16xbf16> to vector<16x16xf32>
    %63 = vector.broadcast %61 : vector<1x1xf32> to vector<16x16xf32>
    %64 = arith.mulf %62, %63 : vector<16x16xf32>
    %65 = arith.truncf %64 : vector<16x16xf32> to vector<16x16xbf16>
    %c2 = arith.constant 2 : index
    %c0_31 = arith.constant 0 : index
    %c0_32 = arith.constant 0 : index
    %66 = vector.load %arg2[%c2, %c0_31, %c0_32] : memref<9x16x16xbf16, #tpu.memory_space<vmem>>, vector<1x16x16xbf16>
    %67 = vector.shape_cast %66 : vector<1x16x16xbf16> to vector<16x16xbf16>
    %68 = vector.extract_strided_slice %24 {offsets = [0, 2], sizes = [1, 1], strides = [1, 1]} : vector<1x9xf32> to vector<1x1xf32>
    %69 = arith.extf %67 : vector<16x16xbf16> to vector<16x16xf32>
    %70 = vector.broadcast %68 : vector<1x1xf32> to vector<16x16xf32>
    %71 = arith.mulf %69, %70 : vector<16x16xf32>
    %72 = arith.truncf %71 : vector<16x16xf32> to vector<16x16xbf16>
    %c3 = arith.constant 3 : index
    %c0_33 = arith.constant 0 : index
    %c0_34 = arith.constant 0 : index
    %73 = vector.load %arg2[%c3, %c0_33, %c0_34] : memref<9x16x16xbf16, #tpu.memory_space<vmem>>, vector<1x16x16xbf16>
    %74 = vector.shape_cast %73 : vector<1x16x16xbf16> to vector<16x16xbf16>
    %75 = vector.extract_strided_slice %24 {offsets = [0, 3], sizes = [1, 1], strides = [1, 1]} : vector<1x9xf32> to vector<1x1xf32>
    %76 = arith.extf %74 : vector<16x16xbf16> to vector<16x16xf32>
    %77 = vector.broadcast %75 : vector<1x1xf32> to vector<16x16xf32>
    %78 = arith.mulf %76, %77 : vector<16x16xf32>
    %79 = arith.truncf %78 : vector<16x16xf32> to vector<16x16xbf16>
    %c4 = arith.constant 4 : index
    %c0_35 = arith.constant 0 : index
    %c0_36 = arith.constant 0 : index
    %80 = vector.load %arg2[%c4, %c0_35, %c0_36] : memref<9x16x16xbf16, #tpu.memory_space<vmem>>, vector<1x16x16xbf16>
    %81 = vector.shape_cast %80 : vector<1x16x16xbf16> to vector<16x16xbf16>
    %82 = vector.extract_strided_slice %24 {offsets = [0, 4], sizes = [1, 1], strides = [1, 1]} : vector<1x9xf32> to vector<1x1xf32>
    %83 = arith.extf %81 : vector<16x16xbf16> to vector<16x16xf32>
    %84 = vector.broadcast %82 : vector<1x1xf32> to vector<16x16xf32>
    %85 = arith.mulf %83, %84 : vector<16x16xf32>
    %86 = arith.truncf %85 : vector<16x16xf32> to vector<16x16xbf16>
    %c5 = arith.constant 5 : index
    %c0_37 = arith.constant 0 : index
    %c0_38 = arith.constant 0 : index
    %87 = vector.load %arg2[%c5, %c0_37, %c0_38] : memref<9x16x16xbf16, #tpu.memory_space<vmem>>, vector<1x16x16xbf16>
    %88 = vector.shape_cast %87 : vector<1x16x16xbf16> to vector<16x16xbf16>
    %89 = vector.extract_strided_slice %24 {offsets = [0, 5], sizes = [1, 1], strides = [1, 1]} : vector<1x9xf32> to vector<1x1xf32>
    %90 = arith.extf %88 : vector<16x16xbf16> to vector<16x16xf32>
    %91 = vector.broadcast %89 : vector<1x1xf32> to vector<16x16xf32>
    %92 = arith.mulf %90, %91 : vector<16x16xf32>
    %93 = arith.truncf %92 : vector<16x16xf32> to vector<16x16xbf16>
    %c6 = arith.constant 6 : index
    %c0_39 = arith.constant 0 : index
    %c0_40 = arith.constant 0 : index
    %94 = vector.load %arg2[%c6, %c0_39, %c0_40] : memref<9x16x16xbf16, #tpu.memory_space<vmem>>, vector<1x16x16xbf16>
    %95 = vector.shape_cast %94 : vector<1x16x16xbf16> to vector<16x16xbf16>
    %96 = vector.extract_strided_slice %24 {offsets = [0, 6], sizes = [1, 1], strides = [1, 1]} : vector<1x9xf32> to vector<1x1xf32>
    %97 = arith.extf %95 : vector<16x16xbf16> to vector<16x16xf32>
    %98 = vector.broadcast %96 : vector<1x1xf32> to vector<16x16xf32>
    %99 = arith.mulf %97, %98 : vector<16x16xf32>
    %100 = arith.truncf %99 : vector<16x16xf32> to vector<16x16xbf16>
    %c7 = arith.constant 7 : index
    %c0_41 = arith.constant 0 : index
    %c0_42 = arith.constant 0 : index
    %101 = vector.load %arg2[%c7, %c0_41, %c0_42] : memref<9x16x16xbf16, #tpu.memory_space<vmem>>, vector<1x16x16xbf16>
    %102 = vector.shape_cast %101 : vector<1x16x16xbf16> to vector<16x16xbf16>
    %103 = vector.extract_strided_slice %24 {offsets = [0, 7], sizes = [1, 1], strides = [1, 1]} : vector<1x9xf32> to vector<1x1xf32>
    %104 = arith.extf %102 : vector<16x16xbf16> to vector<16x16xf32>
    %105 = vector.broadcast %103 : vector<1x1xf32> to vector<16x16xf32>
    %106 = arith.mulf %104, %105 : vector<16x16xf32>
    %107 = arith.truncf %106 : vector<16x16xf32> to vector<16x16xbf16>
    %c8 = arith.constant 8 : index
    %c0_43 = arith.constant 0 : index
    %c0_44 = arith.constant 0 : index
    %108 = vector.load %arg2[%c8, %c0_43, %c0_44] : memref<9x16x16xbf16, #tpu.memory_space<vmem>>, vector<1x16x16xbf16>
    %109 = vector.shape_cast %108 : vector<1x16x16xbf16> to vector<16x16xbf16>
    %110 = vector.extract_strided_slice %24 {offsets = [0, 8], sizes = [1, 1], strides = [1, 1]} : vector<1x9xf32> to vector<1x1xf32>
    %111 = arith.extf %109 : vector<16x16xbf16> to vector<16x16xf32>
    %112 = vector.broadcast %110 : vector<1x1xf32> to vector<16x16xf32>
    %113 = arith.mulf %111, %112 : vector<16x16xf32>
    %114 = arith.truncf %113 : vector<16x16xf32> to vector<16x16xbf16>
    %115 = tpu.concatenate %58, %65, %72, %79, %86, %93, %100, %107, %114 in 0 : vector<16x16xbf16>, vector<16x16xbf16>, vector<16x16xbf16>, vector<16x16xbf16>, vector<16x16xbf16>, vector<16x16xbf16>, vector<16x16xbf16>, vector<16x16xbf16>, vector<16x16xbf16> -> vector<144x16xbf16>
    %cst_45 = arith.constant dense<0.000000e+00> : vector<256x16xf32>
    %116 = tpu.matmul %51, %115, %cst_45 {dimension_numbers = #tpu.dot_dimension_numbers<[1], [0], [0], [1], [0, 0, 1, 1], [], []>} : vector<256x144xbf16>, vector<144x16xbf16>, vector<256x16xf32> -> vector<256x16xf32>
    %c0_46 = arith.constant 0 : index
    %c0_47 = arith.constant 0 : index
    %117 = vector.load %arg7[%c0_46, %c0_47] : memref<1x16xf32, #tpu.memory_space<vmem>>, vector<1x16xf32>
    %118 = arith.mulf %23, %117 : vector<1x16xf32>
    %119 = vector.broadcast %118 : vector<1x16xf32> to vector<256x16xf32>
    %120 = arith.mulf %116, %119 : vector<256x16xf32>
    %c0_48 = arith.constant 0 : index
    %c0_49 = arith.constant 0 : index
    %121 = vector.load %arg8[%c0_48, %c0_49] : memref<1x16xf32, #tpu.memory_space<vmem>>, vector<1x16xf32>
    %122 = vector.broadcast %121 : vector<1x16xf32> to vector<256x16xf32>
    %123 = arith.addf %120, %122 : vector<256x16xf32>
    %cst_50 = arith.constant 0.000000e+00 : f32
    %124 = vector.broadcast %cst_50 : f32 to vector<256x16xf32>
    %125 = arith.maximumf %123, %124 : vector<256x16xf32>
    %cst_51 = arith.constant dense<0.000000e+00> : vector<16xf32>
    %126 = vector.multi_reduction <add>, %125, %cst_51 [0] : vector<256x16xf32> to vector<16xf32>
    %127 = vector.shape_cast %126 : vector<16xf32> to vector<1x16xf32>
    %cst_52 = arith.constant 2.560000e+02 : f32
    %128 = vector.broadcast %cst_52 : f32 to vector<1x16xf32>
    %129 = arith.divf %127, %128 : vector<1x16xf32>
    %c0_53 = arith.constant 0 : index
    %c0_54 = arith.constant 0 : index
    %130 = vector.load %arg10[%c0_53, %c0_54] : memref<16x16xf32, #tpu.memory_space<vmem>>, vector<16x16xf32>
    %cst_55 = arith.constant dense<0.000000e+00> : vector<1x16xf32>
    %131 = tpu.matmul %129, %130, %cst_55 {dimension_numbers = #tpu.dot_dimension_numbers<[1], [0], [0], [1], [0, 0, 1, 1], [], []>} : vector<1x16xf32>, vector<16x16xf32>, vector<1x16xf32> -> vector<1x16xf32>
    %c0_56 = arith.constant 0 : index
    %c0_57 = arith.constant 0 : index
    %132 = vector.load %arg11[%c0_56, %c0_57] : memref<1x16xf32, #tpu.memory_space<vmem>>, vector<1x16xf32>
    %133 = arith.addf %131, %132 : vector<1x16xf32>
    %cst_58 = arith.constant 0.000000e+00 : f32
    %134 = vector.broadcast %cst_58 : f32 to vector<1x16xf32>
    %135 = arith.maximumf %133, %134 : vector<1x16xf32>
    %c0_59 = arith.constant 0 : index
    %c0_60 = arith.constant 0 : index
    %136 = vector.load %arg12[%c0_59, %c0_60] : memref<16x41xf32, #tpu.memory_space<vmem>>, vector<16x41xf32>
    %cst_61 = arith.constant dense<0.000000e+00> : vector<1x41xf32>
    %137 = tpu.matmul %135, %136, %cst_61 {dimension_numbers = #tpu.dot_dimension_numbers<[1], [0], [0], [1], [0, 0, 1, 1], [], []>} : vector<1x16xf32>, vector<16x41xf32>, vector<1x41xf32> -> vector<1x41xf32>
    %c0_62 = arith.constant 0 : index
    %c0_63 = arith.constant 0 : index
    %138 = vector.load %arg13[%c0_62, %c0_63] : memref<1x41xf32, #tpu.memory_space<vmem>>, vector<1x41xf32>
    %139 = arith.addf %137, %138 : vector<1x41xf32>
    %140 = arith.negf %139 : vector<1x41xf32>
    %141 = math.exp %140 : vector<1x41xf32>
    %cst_64 = arith.constant 1.000000e+00 : f32
    %142 = vector.broadcast %cst_64 : f32 to vector<1x41xf32>
    %143 = arith.addf %142, %141 : vector<1x41xf32>
    %144 = arith.divf %142, %143 : vector<1x41xf32>
    %145 = vector.extract_strided_slice %144 {offsets = [0, 0], sizes = [1, 16], strides = [1, 1]} : vector<1x41xf32> to vector<1x16xf32>
    %146 = vector.extract_strided_slice %144 {offsets = [0, 16], sizes = [1, 16], strides = [1, 1]} : vector<1x41xf32> to vector<1x16xf32>
    %147 = vector.extract_strided_slice %144 {offsets = [0, 32], sizes = [1, 9], strides = [1, 1]} : vector<1x41xf32> to vector<1x9xf32>
    %148 = vector.shape_cast %125 : vector<256x16xf32> to vector<16x16x16xf32>
    %cst_65 = arith.constant 0.000000e+00 : bf16
    %149 = vector.broadcast %cst_65 : bf16 to vector<18x24x16xbf16>
    %c0_66 = arith.constant 0 : index
    %c0_67 = arith.constant 0 : index
    %c0_68 = arith.constant 0 : index
    %150 = vector.load %arg18[%c0_66, %c0_67, %c0_68] : memref<18x24x16xbf16, #tpu.memory_space<vmem>>, vector<18x24x16xbf16>
    tpu.vector_store %arg18[%c0_66, %c0_67, %c0_68], %149 {strides = array<i32>} : memref<18x24x16xbf16, #tpu.memory_space<vmem>>, vector<18x24x16xbf16>,
    %151 = vector.shape_cast %145 : vector<1x16xf32> to vector<1x1x16xf32>
    %152 = vector.broadcast %151 : vector<1x1x16xf32> to vector<16x16x16xf32>
    %153 = arith.mulf %148, %152 : vector<16x16x16xf32>
    %154 = arith.truncf %153 : vector<16x16x16xf32> to vector<16x16x16xbf16>
    %c1_69 = arith.constant 1 : index
    %c1_70 = arith.constant 1 : index
    %c0_71 = arith.constant 0 : index
    %155 = vector.load %arg18[%c1_69, %c1_70, %c0_71] : memref<18x24x16xbf16, #tpu.memory_space<vmem>>, vector<16x16x16xbf16>
    tpu.vector_store %arg18[%c1_69, %c1_70, %c0_71], %154 {strides = array<i32>} : memref<18x24x16xbf16, #tpu.memory_space<vmem>>, vector<16x16x16xbf16>,
    %c0_72 = arith.constant 0 : index
    %c0_73 = arith.constant 0 : index
    %c0_74 = arith.constant 0 : index
    %156 = vector.load %arg18[%c0_72, %c0_73, %c0_74] : memref<18x24x16xbf16, #tpu.memory_space<vmem>>, vector<18x24x16xbf16>
    %157 = vector.extract_strided_slice %156 {offsets = [0, 0, 0], sizes = [16, 16, 16], strides = [1, 1, 1]} : vector<18x24x16xbf16> to vector<16x16x16xbf16>
    %158 = vector.shape_cast %157 : vector<16x16x16xbf16> to vector<256x16xbf16>
    %159 = vector.extract_strided_slice %156 {offsets = [0, 1, 0], sizes = [16, 16, 16], strides = [1, 1, 1]} : vector<18x24x16xbf16> to vector<16x16x16xbf16>
    %160 = vector.shape_cast %159 : vector<16x16x16xbf16> to vector<256x16xbf16>
    %161 = vector.extract_strided_slice %156 {offsets = [0, 2, 0], sizes = [16, 16, 16], strides = [1, 1, 1]} : vector<18x24x16xbf16> to vector<16x16x16xbf16>
    %162 = vector.shape_cast %161 : vector<16x16x16xbf16> to vector<256x16xbf16>
    %163 = vector.extract_strided_slice %156 {offsets = [1, 0, 0], sizes = [16, 16, 16], strides = [1, 1, 1]} : vector<18x24x16xbf16> to vector<16x16x16xbf16>
    %164 = vector.shape_cast %163 : vector<16x16x16xbf16> to vector<256x16xbf16>
    %165 = vector.extract_strided_slice %156 {offsets = [1, 1, 0], sizes = [16, 16, 16], strides = [1, 1, 1]} : vector<18x24x16xbf16> to vector<16x16x16xbf16>
    %166 = vector.shape_cast %165 : vector<16x16x16xbf16> to vector<256x16xbf16>
    %167 = vector.extract_strided_slice %156 {offsets = [1, 2, 0], sizes = [16, 16, 16], strides = [1, 1, 1]} : vector<18x24x16xbf16> to vector<16x16x16xbf16>
    %168 = vector.shape_cast %167 : vector<16x16x16xbf16> to vector<256x16xbf16>
    %169 = vector.extract_strided_slice %156 {offsets = [2, 0, 0], sizes = [16, 16, 16], strides = [1, 1, 1]} : vector<18x24x16xbf16> to vector<16x16x16xbf16>
    %170 = vector.shape_cast %169 : vector<16x16x16xbf16> to vector<256x16xbf16>
    %171 = vector.extract_strided_slice %156 {offsets = [2, 1, 0], sizes = [16, 16, 16], strides = [1, 1, 1]} : vector<18x24x16xbf16> to vector<16x16x16xbf16>
    %172 = vector.shape_cast %171 : vector<16x16x16xbf16> to vector<256x16xbf16>
    %173 = vector.extract_strided_slice %156 {offsets = [2, 2, 0], sizes = [16, 16, 16], strides = [1, 1, 1]} : vector<18x24x16xbf16> to vector<16x16x16xbf16>
    %174 = vector.shape_cast %173 : vector<16x16x16xbf16> to vector<256x16xbf16>
    %175 = tpu.concatenate %158, %160, %162, %164, %166, %168, %170, %172, %174 in 1 : vector<256x16xbf16>, vector<256x16xbf16>, vector<256x16xbf16>, vector<256x16xbf16>, vector<256x16xbf16>, vector<256x16xbf16>, vector<256x16xbf16>, vector<256x16xbf16>, vector<256x16xbf16> -> vector<256x144xbf16>
    %c0_75 = arith.constant 0 : index
    %c0_76 = arith.constant 0 : index
    %c0_77 = arith.constant 0 : index
    %176 = vector.load %arg9[%c0_75, %c0_76, %c0_77] : memref<9x16x16xbf16, #tpu.memory_space<vmem>>, vector<1x16x16xbf16>
    %177 = vector.shape_cast %176 : vector<1x16x16xbf16> to vector<16x16xbf16>
    %178 = vector.extract_strided_slice %147 {offsets = [0, 0], sizes = [1, 1], strides = [1, 1]} : vector<1x9xf32> to vector<1x1xf32>
    %179 = arith.extf %177 : vector<16x16xbf16> to vector<16x16xf32>
    %180 = vector.broadcast %178 : vector<1x1xf32> to vector<16x16xf32>
    %181 = arith.mulf %179, %180 : vector<16x16xf32>
    %182 = arith.truncf %181 : vector<16x16xf32> to vector<16x16xbf16>
    %c1_78 = arith.constant 1 : index
    %c0_79 = arith.constant 0 : index
    %c0_80 = arith.constant 0 : index
    %183 = vector.load %arg9[%c1_78, %c0_79, %c0_80] : memref<9x16x16xbf16, #tpu.memory_space<vmem>>, vector<1x16x16xbf16>
    %184 = vector.shape_cast %183 : vector<1x16x16xbf16> to vector<16x16xbf16>
    %185 = vector.extract_strided_slice %147 {offsets = [0, 1], sizes = [1, 1], strides = [1, 1]} : vector<1x9xf32> to vector<1x1xf32>
    %186 = arith.extf %184 : vector<16x16xbf16> to vector<16x16xf32>
    %187 = vector.broadcast %185 : vector<1x1xf32> to vector<16x16xf32>
    %188 = arith.mulf %186, %187 : vector<16x16xf32>
    %189 = arith.truncf %188 : vector<16x16xf32> to vector<16x16xbf16>
    %c2_81 = arith.constant 2 : index
    %c0_82 = arith.constant 0 : index
    %c0_83 = arith.constant 0 : index
    %190 = vector.load %arg9[%c2_81, %c0_82, %c0_83] : memref<9x16x16xbf16, #tpu.memory_space<vmem>>, vector<1x16x16xbf16>
    %191 = vector.shape_cast %190 : vector<1x16x16xbf16> to vector<16x16xbf16>
    %192 = vector.extract_strided_slice %147 {offsets = [0, 2], sizes = [1, 1], strides = [1, 1]} : vector<1x9xf32> to vector<1x1xf32>
    %193 = arith.extf %191 : vector<16x16xbf16> to vector<16x16xf32>
    %194 = vector.broadcast %192 : vector<1x1xf32> to vector<16x16xf32>
    %195 = arith.mulf %193, %194 : vector<16x16xf32>
    %196 = arith.truncf %195 : vector<16x16xf32> to vector<16x16xbf16>
    %c3_84 = arith.constant 3 : index
    %c0_85 = arith.constant 0 : index
    %c0_86 = arith.constant 0 : index
    %197 = vector.load %arg9[%c3_84, %c0_85, %c0_86] : memref<9x16x16xbf16, #tpu.memory_space<vmem>>, vector<1x16x16xbf16>
    %198 = vector.shape_cast %197 : vector<1x16x16xbf16> to vector<16x16xbf16>
    %199 = vector.extract_strided_slice %147 {offsets = [0, 3], sizes = [1, 1], strides = [1, 1]} : vector<1x9xf32> to vector<1x1xf32>
    %200 = arith.extf %198 : vector<16x16xbf16> to vector<16x16xf32>
    %201 = vector.broadcast %199 : vector<1x1xf32> to vector<16x16xf32>
    %202 = arith.mulf %200, %201 : vector<16x16xf32>
    %203 = arith.truncf %202 : vector<16x16xf32> to vector<16x16xbf16>
    %c4_87 = arith.constant 4 : index
    %c0_88 = arith.constant 0 : index
    %c0_89 = arith.constant 0 : index
    %204 = vector.load %arg9[%c4_87, %c0_88, %c0_89] : memref<9x16x16xbf16, #tpu.memory_space<vmem>>, vector<1x16x16xbf16>
    %205 = vector.shape_cast %204 : vector<1x16x16xbf16> to vector<16x16xbf16>
    %206 = vector.extract_strided_slice %147 {offsets = [0, 4], sizes = [1, 1], strides = [1, 1]} : vector<1x9xf32> to vector<1x1xf32>
    %207 = arith.extf %205 : vector<16x16xbf16> to vector<16x16xf32>
    %208 = vector.broadcast %206 : vector<1x1xf32> to vector<16x16xf32>
    %209 = arith.mulf %207, %208 : vector<16x16xf32>
    %210 = arith.truncf %209 : vector<16x16xf32> to vector<16x16xbf16>
    %c5_90 = arith.constant 5 : index
    %c0_91 = arith.constant 0 : index
    %c0_92 = arith.constant 0 : index
    %211 = vector.load %arg9[%c5_90, %c0_91, %c0_92] : memref<9x16x16xbf16, #tpu.memory_space<vmem>>, vector<1x16x16xbf16>
    %212 = vector.shape_cast %211 : vector<1x16x16xbf16> to vector<16x16xbf16>
    %213 = vector.extract_strided_slice %147 {offsets = [0, 5], sizes = [1, 1], strides = [1, 1]} : vector<1x9xf32> to vector<1x1xf32>
    %214 = arith.extf %212 : vector<16x16xbf16> to vector<16x16xf32>
    %215 = vector.broadcast %213 : vector<1x1xf32> to vector<16x16xf32>
    %216 = arith.mulf %214, %215 : vector<16x16xf32>
    %217 = arith.truncf %216 : vector<16x16xf32> to vector<16x16xbf16>
    %c6_93 = arith.constant 6 : index
    %c0_94 = arith.constant 0 : index
    %c0_95 = arith.constant 0 : index
    %218 = vector.load %arg9[%c6_93, %c0_94, %c0_95] : memref<9x16x16xbf16, #tpu.memory_space<vmem>>, vector<1x16x16xbf16>
    %219 = vector.shape_cast %218 : vector<1x16x16xbf16> to vector<16x16xbf16>
    %220 = vector.extract_strided_slice %147 {offsets = [0, 6], sizes = [1, 1], strides = [1, 1]} : vector<1x9xf32> to vector<1x1xf32>
    %221 = arith.extf %219 : vector<16x16xbf16> to vector<16x16xf32>
    %222 = vector.broadcast %220 : vector<1x1xf32> to vector<16x16xf32>
    %223 = arith.mulf %221, %222 : vector<16x16xf32>
    %224 = arith.truncf %223 : vector<16x16xf32> to vector<16x16xbf16>
    %c7_96 = arith.constant 7 : index
    %c0_97 = arith.constant 0 : index
    %c0_98 = arith.constant 0 : index
    %225 = vector.load %arg9[%c7_96, %c0_97, %c0_98] : memref<9x16x16xbf16, #tpu.memory_space<vmem>>, vector<1x16x16xbf16>
    %226 = vector.shape_cast %225 : vector<1x16x16xbf16> to vector<16x16xbf16>
    %227 = vector.extract_strided_slice %147 {offsets = [0, 7], sizes = [1, 1], strides = [1, 1]} : vector<1x9xf32> to vector<1x1xf32>
    %228 = arith.extf %226 : vector<16x16xbf16> to vector<16x16xf32>
    %229 = vector.broadcast %227 : vector<1x1xf32> to vector<16x16xf32>
    %230 = arith.mulf %228, %229 : vector<16x16xf32>
    %231 = arith.truncf %230 : vector<16x16xf32> to vector<16x16xbf16>
    %c8_99 = arith.constant 8 : index
    %c0_100 = arith.constant 0 : index
    %c0_101 = arith.constant 0 : index
    %232 = vector.load %arg9[%c8_99, %c0_100, %c0_101] : memref<9x16x16xbf16, #tpu.memory_space<vmem>>, vector<1x16x16xbf16>
    %233 = vector.shape_cast %232 : vector<1x16x16xbf16> to vector<16x16xbf16>
    %234 = vector.extract_strided_slice %147 {offsets = [0, 8], sizes = [1, 1], strides = [1, 1]} : vector<1x9xf32> to vector<1x1xf32>
    %235 = arith.extf %233 : vector<16x16xbf16> to vector<16x16xf32>
    %236 = vector.broadcast %234 : vector<1x1xf32> to vector<16x16xf32>
    %237 = arith.mulf %235, %236 : vector<16x16xf32>
    %238 = arith.truncf %237 : vector<16x16xf32> to vector<16x16xbf16>
    %239 = tpu.concatenate %182, %189, %196, %203, %210, %217, %224, %231, %238 in 0 : vector<16x16xbf16>, vector<16x16xbf16>, vector<16x16xbf16>, vector<16x16xbf16>, vector<16x16xbf16>, vector<16x16xbf16>, vector<16x16xbf16>, vector<16x16xbf16>, vector<16x16xbf16> -> vector<144x16xbf16>
    %cst_102 = arith.constant dense<0.000000e+00> : vector<256x16xf32>
    %240 = tpu.matmul %175, %239, %cst_102 {dimension_numbers = #tpu.dot_dimension_numbers<[1], [0], [0], [1], [0, 0, 1, 1], [], []>} : vector<256x144xbf16>, vector<144x16xbf16>, vector<256x16xf32> -> vector<256x16xf32>
    %c0_103 = arith.constant 0 : index
    %c0_104 = arith.constant 0 : index
    %241 = vector.load %arg14[%c0_103, %c0_104] : memref<1x16xf32, #tpu.memory_space<vmem>>, vector<1x16xf32>
    %242 = arith.mulf %146, %241 : vector<1x16xf32>
    %243 = vector.broadcast %242 : vector<1x16xf32> to vector<256x16xf32>
    %244 = arith.mulf %240, %243 : vector<256x16xf32>
    %c0_105 = arith.constant 0 : index
    %c0_106 = arith.constant 0 : index
    %245 = vector.load %arg15[%c0_105, %c0_106] : memref<1x16xf32, #tpu.memory_space<vmem>>, vector<1x16xf32>
    %246 = vector.broadcast %245 : vector<1x16xf32> to vector<256x16xf32>
    %247 = arith.addf %244, %246 : vector<256x16xf32>
    %248 = arith.addf %247, %2 : vector<256x16xf32>
    %cst_107 = arith.constant 0.000000e+00 : f32
    %249 = vector.broadcast %cst_107 : f32 to vector<256x16xf32>
    %250 = arith.maximumf %248, %249 : vector<256x16xf32>
    %c0_108 = arith.constant 0 : index
    %c0_109 = arith.constant 0 : index
    %c0_110 = arith.constant 0 : index
    %251 = vector.load %arg16[%c0_108, %c0_109, %c0_110] : memref<1x256x16xf32, #tpu.memory_space<vmem>>, vector<1x256x16xf32>
    %252 = vector.shape_cast %251 : vector<1x256x16xf32> to vector<256x16xf32>
    %253 = vector.shape_cast %250 : vector<256x16xf32> to vector<1x256x16xf32>
    tpu.vector_store %arg16[%c0_108, %c0_109, %c0_110], %253 {strides = array<i32>} : memref<1x256x16xf32, #tpu.memory_space<vmem>>, vector<1x256x16xf32>,
    return
  }
  func.func @transform_0(%arg0: i32) -> (i32, i32, i32, i32) {
    %c0_i32 = arith.constant 0 : i32
    %c0_i32_0 = arith.constant 0 : i32
    %c0_i32_1 = arith.constant 0 : i32
    %c0_i32_2 = arith.constant 0 : i32
    return %arg0, %c0_i32, %c0_i32_0, %c0_i32_1 : i32, i32, i32, i32
  }
  func.func @transform_1(%arg0: i32) -> (i32, i32, i32) {
    %c0_i32 = arith.constant 0 : i32
    %c0_i32_0 = arith.constant 0 : i32
    %c0_i32_1 = arith.constant 0 : i32
    %c0_i32_2 = arith.constant 0 : i32
    return %c0_i32, %c0_i32_0, %c0_i32_1 : i32, i32, i32
  }
  func.func @transform_2(%arg0: i32) -> (i32, i32) {
    %c0_i32 = arith.constant 0 : i32
    %c0_i32_0 = arith.constant 0 : i32
    %c0_i32_1 = arith.constant 0 : i32
    return %c0_i32, %c0_i32_0 : i32, i32
  }
  func.func @transform_3(%arg0: i32) -> (i32, i32) {
    %c0_i32 = arith.constant 0 : i32
    %c0_i32_0 = arith.constant 0 : i32
    %c0_i32_1 = arith.constant 0 : i32
    return %c0_i32, %c0_i32_0 : i32, i32
  }
  func.func @transform_4(%arg0: i32) -> (i32, i32) {
    %c0_i32 = arith.constant 0 : i32
    %c0_i32_0 = arith.constant 0 : i32
    %c0_i32_1 = arith.constant 0 : i32
    return %c0_i32, %c0_i32_0 : i32, i32
  }
  func.func @transform_5(%arg0: i32) -> (i32, i32) {
    %c0_i32 = arith.constant 0 : i32
    %c0_i32_0 = arith.constant 0 : i32
    %c0_i32_1 = arith.constant 0 : i32
    return %c0_i32, %c0_i32_0 : i32, i32
  }
  func.func @transform_6(%arg0: i32) -> (i32, i32) {
    %c0_i32 = arith.constant 0 : i32
    %c0_i32_0 = arith.constant 0 : i32
    %c0_i32_1 = arith.constant 0 : i32
    return %c0_i32, %c0_i32_0 : i32, i32
  }
  func.func @transform_7(%arg0: i32) -> (i32, i32) {
    %c0_i32 = arith.constant 0 : i32
    %c0_i32_0 = arith.constant 0 : i32
    %c0_i32_1 = arith.constant 0 : i32
    return %c0_i32, %c0_i32_0 : i32, i32
  }
  func.func @transform_8(%arg0: i32) -> (i32, i32, i32) {
    %c0_i32 = arith.constant 0 : i32
    %c0_i32_0 = arith.constant 0 : i32
    %c0_i32_1 = arith.constant 0 : i32
    %c0_i32_2 = arith.constant 0 : i32
    return %c0_i32, %c0_i32_0, %c0_i32_1 : i32, i32, i32
  }
  func.func @transform_9(%arg0: i32) -> (i32, i32) {
    %c0_i32 = arith.constant 0 : i32
    %c0_i32_0 = arith.constant 0 : i32
    %c0_i32_1 = arith.constant 0 : i32
    return %c0_i32, %c0_i32_0 : i32, i32
  }
  func.func @transform_10(%arg0: i32) -> (i32, i32) {
    %c0_i32 = arith.constant 0 : i32
    %c0_i32_0 = arith.constant 0 : i32
    %c0_i32_1 = arith.constant 0 : i32
    return %c0_i32, %c0_i32_0 : i32, i32
  }
  func.func @transform_11(%arg0: i32) -> (i32, i32) {
    %c0_i32 = arith.constant 0 : i32
    %c0_i32_0 = arith.constant 0 : i32
    %c0_i32_1 = arith.constant 0 : i32
    return %c0_i32, %c0_i32_0 : i32, i32
  }
  func.func @transform_12(%arg0: i32) -> (i32, i32) {
    %c0_i32 = arith.constant 0 : i32
    %c0_i32_0 = arith.constant 0 : i32
    %c0_i32_1 = arith.constant 0 : i32
    return %c0_i32, %c0_i32_0 : i32, i32
  }
  func.func @transform_13(%arg0: i32) -> (i32, i32) {
    %c0_i32 = arith.constant 0 : i32
    %c0_i32_0 = arith.constant 0 : i32
    %c0_i32_1 = arith.constant 0 : i32
    return %c0_i32, %c0_i32_0 : i32, i32
  }
  func.func @transform_14(%arg0: i32) -> (i32, i32) {
    %c0_i32 = arith.constant 0 : i32
    %c0_i32_0 = arith.constant 0 : i32
    %c0_i32_1 = arith.constant 0 : i32
    return %c0_i32, %c0_i32_0 : i32, i32
  }
  func.func @transform_15(%arg0: i32) -> (i32, i32, i32) {
    %c0_i32 = arith.constant 0 : i32
    %c0_i32_0 = arith.constant 0 : i32
    %c0_i32_1 = arith.constant 0 : i32
    return %arg0, %c0_i32, %c0_i32_0 : i32, i32, i32
  }
}

</mosaic_0001>

<llo_original>
// kernel: basic_block_forward.1
$region0: #{basic_block_forward.1}
  #allocation0 [shape = 'u32[]', space=smem, size = 0x4, offset = 0x4, fixed_abs, tag = 'smem constant byte address 0x4 - core index']
  #allocation1 [shape = 'u32[144,128]{1,0:T(1,128)}', space=vmem, size = 0x12000, scoped, tag = 'internal scratch']
  #allocation2 [shape = 'bf16[18,24,16]{2,1,0:T(8,128)(2,1)}', space=vmem, size = 0x1b000, scoped, tag = 'scratch operand']
  #allocation3 [shape = 'bf16[18,24,16]{2,1,0:T(8,128)(2,1)}', space=vmem, size = 0x1b000, scoped, tag = 'scratch operand']
  %s0 = inlined_call_operand.vmem [shape: f32[2,16,16,16], index: 0, kind: input, shape index: {}]
  %s1 = inlined_call_operand.vmem [shape: bf16[9,16,16], index: 1, kind: input, shape index: {}]
  %s2 = inlined_call_operand.vmem [shape: f32[16,16], index: 2, kind: input, shape index: {}]
  %s3 = inlined_call_operand.vmem [shape: f32[1,16], index: 3, kind: input, shape index: {}]
  %s4 = inlined_call_operand.vmem [shape: f32[16,41], index: 4, kind: input, shape index: {}]
  %s5 = inlined_call_operand.vmem [shape: f32[1,41], index: 5, kind: input, shape index: {}]
  %s6 = inlined_call_operand.vmem [shape: f32[1,16], index: 6, kind: input, shape index: {}]
  %s7 = inlined_call_operand.vmem [shape: f32[1,16], index: 7, kind: input, shape index: {}]
  %s8 = inlined_call_operand.vmem [shape: bf16[9,16,16], index: 8, kind: input, shape index: {}]
  %s9 = inlined_call_operand.vmem [shape: f32[16,16], index: 9, kind: input, shape index: {}]
  %s10 = inlined_call_operand.vmem [shape: f32[1,16], index: 10, kind: input, shape index: {}]
  %s11 = inlined_call_operand.vmem [shape: f32[16,41], index: 11, kind: input, shape index: {}]
  %s12 = inlined_call_operand.vmem [shape: f32[1,41], index: 12, kind: input, shape index: {}]
  %s13 = inlined_call_operand.vmem [shape: f32[1,16], index: 13, kind: input, shape index: {}]
  %s14 = inlined_call_operand.vmem [shape: f32[1,16], index: 14, kind: input, shape index: {}]
  %s15 = inlined_call_operand.vmem [shape: f32[2,256,16], index: 15, kind: output, shape index: {}]
  %s16 = sld [smem:[#allocation0]]
  $region93: #{basic_block_forward.1} parent=0
    _
  %s18 = ssub.s32 1, %s16
  %s19 = scalar_select 0, %s18, %s16
  loop: start=0, step=1, limit=4
  $region2: #{basic_block_forward.1} parent=0 // loop_pre_header
    _
  $region3: #{basic_block_forward.1} parent=0 // loop_header
    %s21 = sphi 0, %s25
    %p22 = scmp.ge.s32.totalorder %s21, 4
    %s31 = sphi 0, %s33
    %s34 = sphi 0, %s31
    %s35 = sphi 0, %s34
    %s51 = sphi 0, %s35
    %s55 = sphi 0, %s55
    %s57 = sphi 0, %s55
    %s58 = sphi 0, %s57
    %s72 = sphi 0, %s58
    %s76 = sphi 0, %s76
    %s78 = sphi 0, %s76
    %s79 = sphi 0, %s78
    %s93 = sphi 0, %s79
    %s97 = sphi 0, %s97
    %s99 = sphi 0, %s97
    %s100 = sphi 0, %s99
    %s114 = sphi 0, %s100
    %s118 = sphi 0, %s118
    %s120 = sphi 0, %s118
    %s121 = sphi 0, %s120
    %s135 = sphi 0, %s121
    %s139 = sphi 0, %s139
    %s141 = sphi 0, %s139
    %s142 = sphi 0, %s141
    %s156 = sphi 0, %s142
    %s160 = sphi 0, %s160
    %s162 = sphi 0, %s160
    %s163 = sphi 0, %s162
    %s177 = sphi 0, %s163
    %s181 = sphi 0, %s181
    %s183 = sphi 0, %s181
    %s184 = sphi 0, %s183
    %s198 = sphi 0, %s184
    %s202 = sphi 0, %s202
    %s204 = sphi 0, %s202
    %s205 = sphi 0, %s204
    %s219 = sphi 0, %s205
    %s223 = sphi 0, %s223
    %s225 = sphi 0, %s223
    %s226 = sphi 0, %s225
    %s240 = sphi 0, %s226
    %s244 = sphi 0, %s244
    %s246 = sphi 0, %s244
    %s247 = sphi 0, %s246
    %s261 = sphi 0, %s247
    %s265 = sphi 0, %s265
    %s267 = sphi 0, %s265
    %s268 = sphi 0, %s267
    %s282 = sphi 0, %s268
    %s286 = sphi 0, %s286
    %s288 = sphi 0, %s286
    %s289 = sphi 0, %s288
    %s303 = sphi 0, %s289
    %s307 = sphi 0, %s307
    %s309 = sphi 0, %s307
    %s310 = sphi 0, %s309
    %s324 = sphi 0, %s310
    %s328 = sphi 0, %s328
    %s330 = sphi 0, %s328
    %s331 = sphi 0, %s330
    %s345 = sphi 0, %s331
    %s351 = sphi 0, %s353
    %s354 = sphi 0, %s351
    %s355 = sphi 0, %s354
    %s371 = sphi 0, %s355
  $region4: #{basic_block_forward.1} parent=0 // loop_header_branch
    %24 = sbr.rel (%p22) target = $region8
  $region5: #{basic_block_forward.1} parent=0 // loop_body
    %s26 = ssub.s32 %s21, 1
    %s27 = ssub.s32 %s21, 2
    %s28 = sadd.s32 %s21, 1
    %s29 = ssub.s32 %s21, %s28
    %p30 = scmp.eq.s32.totalorder %s29, 0
    %s32 = sadd.s32 %s31, 1
    %s33 = scalar_select %p30, %s31, %s32
    %p36 = pneg %p30
    %p37 = scmp.eq.s32.totalorder %s21, 1
    %p38 = por %p36, %p37
    %p39 = scmp.ne.s32.totalorder %s31, %s34
    %p40 = scmp.eq.s32.totalorder %s21, 0
    %p41 = por %p39, %p40
    %p42 = scmp.ne.s32.totalorder %s31, %s34
    %p43 = scmp.eq.s32.totalorder %s26, 1
    %p44 = por %p42, %p43
    %p45 = scmp.ne.s32.totalorder %s34, %s35
    %p46 = scmp.eq.s32.totalorder %s26, 0
    %p47 = por %p45, %p46
    %p48 = scmp.ne.s32.totalorder %s34, %s35
    %p49 = scmp.eq.s32.totalorder %s27, 1
    %p50 = por %p48, %p49
    %p52 = scmp.ne.s32.totalorder %s35, %s51
    %p53 = scmp.eq.s32.totalorder %s27, 0
    %p54 = por %p52, %p53
    %s56 = sadd.s32 %s55, 1
    %p59 = scmp.eq.s32.totalorder %s21, 1
    %p60 = scmp.ne.s32.totalorder %s55, %s57
    %p61 = scmp.eq.s32.totalorder %s21, 0
    %p62 = por %p60, %p61
    %p63 = scmp.ne.s32.totalorder %s55, %s57
    %p64 = scmp.eq.s32.totalorder %s26, 1
    %p65 = por %p63, %p64
    %p66 = scmp.ne.s32.totalorder %s57, %s58
    %p67 = scmp.eq.s32.totalorder %s26, 0
    %p68 = por %p66, %p67
    %p69 = scmp.ne.s32.totalorder %s57, %s58
    %p70 = scmp.eq.s32.totalorder %s27, 1
    %p71 = por %p69, %p70
    %p73 = scmp.ne.s32.totalorder %s58, %s72
    %p74 = scmp.eq.s32.totalorder %s27, 0
    %p75 = por %p73, %p74
    %s77 = sadd.s32 %s76, 1
    %p80 = scmp.eq.s32.totalorder %s21, 1
    %p81 = scmp.ne.s32.totalorder %s76, %s78
    %p82 = scmp.eq.s32.totalorder %s21, 0
    %p83 = por %p81, %p82
    %p84 = scmp.ne.s32.totalorder %s76, %s78
    %p85 = scmp.eq.s32.totalorder %s26, 1
    %p86 = por %p84, %p85
    %p87 = scmp.ne.s32.totalorder %s78, %s79
    %p88 = scmp.eq.s32.totalorder %s26, 0
    %p89 = por %p87, %p88
    %p90 = scmp.ne.s32.totalorder %s78, %s79
    %p91 = scmp.eq.s32.totalorder %s27, 1
    %p92 = por %p90, %p91
    %p94 = scmp.ne.s32.totalorder %s79, %s93
    %p95 = scmp.eq.s32.totalorder %s27, 0
    %p96 = por %p94, %p95
    %s98 = sadd.s32 %s97, 1
    %p101 = scmp.eq.s32.totalorder %s21, 1
    %p102 = scmp.ne.s32.totalorder %s97, %s99
    %p103 = scmp.eq.s32.totalorder %s21, 0
    %p104 = por %p102, %p103
    %p105 = scmp.ne.s32.totalorder %s97, %s99
    %p106 = scmp.eq.s32.totalorder %s26, 1
    %p107 = por %p105, %p106
    %p108 = scmp.ne.s32.totalorder %s99, %s100
    %p109 = scmp.eq.s32.totalorder %s26, 0
    %p110 = por %p108, %p109
    %p111 = scmp.ne.s32.totalorder %s99, %s100
    %p112 = scmp.eq.s32.totalorder %s27, 1
    %p113 = por %p111, %p112
    %p115 = scmp.ne.s32.totalorder %s100, %s114
    %p116 = scmp.eq.s32.totalorder %s27, 0
    %p117 = por %p115, %p116
    %s119 = sadd.s32 %s118, 1
    %p122 = scmp.eq.s32.totalorder %s21, 1
    %p123 = scmp.ne.s32.totalorder %s118, %s120
    %p124 = scmp.eq.s32.totalorder %s21, 0
    %p125 = por %p123, %p124
    %p126 = scmp.ne.s32.totalorder %s118, %s120
    %p127 = scmp.eq.s32.totalorder %s26, 1
    %p128 = por %p126, %p127
    %p129 = scmp.ne.s32.totalorder %s120, %s121
    %p130 = scmp.eq.s32.totalorder %s26, 0
    %p131 = por %p129, %p130
    %p132 = scmp.ne.s32.totalorder %s120, %s121
    %p133 = scmp.eq.s32.totalorder %s27, 1
    %p134 = por %p132, %p133
    %p136 = scmp.ne.s32.totalorder %s121, %s135
    %p137 = scmp.eq.s32.totalorder %s27, 0
    %p138 = por %p136, %p137
    %s140 = sadd.s32 %s139, 1
    %p143 = scmp.eq.s32.totalorder %s21, 1
    %p144 = scmp.ne.s32.totalorder %s139, %s141
    %p145 = scmp.eq.s32.totalorder %s21, 0
    %p146 = por %p144, %p145
    %p147 = scmp.ne.s32.totalorder %s139, %s141
    %p148 = scmp.eq.s32.totalorder %s26, 1
    %p149 = por %p147, %p148
    %p150 = scmp.ne.s32.totalorder %s141, %s142
    %p151 = scmp.eq.s32.totalorder %s26, 0
    %p152 = por %p150, %p151
    %p153 = scmp.ne.s32.totalorder %s141, %s142
    %p154 = scmp.eq.s32.totalorder %s27, 1
    %p155 = por %p153, %p154
    %p157 = scmp.ne.s32.totalorder %s142, %s156
    %p158 = scmp.eq.s32.totalorder %s27, 0
    %p159 = por %p157, %p158
    %s161 = sadd.s32 %s160, 1
    %p164 = scmp.eq.s32.totalorder %s21, 1
    %p165 = scmp.ne.s32.totalorder %s160, %s162
    %p166 = scmp.eq.s32.totalorder %s21, 0
    %p167 = por %p165, %p166
    %p168 = scmp.ne.s32.totalorder %s160, %s162
    %p169 = scmp.eq.s32.totalorder %s26, 1
    %p170 = por %p168, %p169
    %p171 = scmp.ne.s32.totalorder %s162, %s163
    %p172 = scmp.eq.s32.totalorder %s26, 0
    %p173 = por %p171, %p172
    %p174 = scmp.ne.s32.totalorder %s162, %s163
    %p175 = scmp.eq.s32.totalorder %s27, 1
    %p176 = por %p174, %p175
    %p178 = scmp.ne.s32.totalorder %s163, %s177
    %p179 = scmp.eq.s32.totalorder %s27, 0
    %p180 = por %p178, %p179
    %s182 = sadd.s32 %s181, 1
    %p185 = scmp.eq.s32.totalorder %s21, 1
    %p186 = scmp.ne.s32.totalorder %s181, %s183
    %p187 = scmp.eq.s32.totalorder %s21, 0
    %p188 = por %p186, %p187
    %p189 = scmp.ne.s32.totalorder %s181, %s183
    %p190 = scmp.eq.s32.totalorder %s26, 1
    %p191 = por %p189, %p190
    %p192 = scmp.ne.s32.totalorder %s183, %s184
    %p193 = scmp.eq.s32.totalorder %s26, 0
    %p194 = por %p192, %p193
    %p195 = scmp.ne.s32.totalorder %s183, %s184
    %p196 = scmp.eq.s32.totalorder %s27, 1
    %p197 = por %p195, %p196
    %p199 = scmp.ne.s32.totalorder %s184, %s198
    %p200 = scmp.eq.s32.totalorder %s27, 0
    %p201 = por %p199, %p200
    %s203 = sadd.s32 %s202, 1
    %p206 = scmp.eq.s32.totalorder %s21, 1
    %p207 = scmp.ne.s32.totalorder %s202, %s204
    %p208 = scmp.eq.s32.totalorder %s21, 0
    %p209 = por %p207, %p208
    %p210 = scmp.ne.s32.totalorder %s202, %s204
    %p211 = scmp.eq.s32.totalorder %s26, 1
    %p212 = por %p210, %p211
    %p213 = scmp.ne.s32.totalorder %s204, %s205
    %p214 = scmp.eq.s32.totalorder %s26, 0
    %p215 = por %p213, %p214
    %p216 = scmp.ne.s32.totalorder %s204, %s205
    %p217 = scmp.eq.s32.totalorder %s27, 1
    %p218 = por %p216, %p217
    %p220 = scmp.ne.s32.totalorder %s205, %s219
    %p221 = scmp.eq.s32.totalorder %s27, 0
    %p222 = por %p220, %p221
    %s224 = sadd.s32 %s223, 1
    %p227 = scmp.eq.s32.totalorder %s21, 1
    %p228 = scmp.ne.s32.totalorder %s223, %s225
    %p229 = scmp.eq.s32.totalorder %s21, 0
    %p230 = por %p228, %p229
    %p231 = scmp.ne.s32.totalorder %s223, %s225
    %p232 = scmp.eq.s32.totalorder %s26, 1
    %p233 = por %p231, %p232
    %p234 = scmp.ne.s32.totalorder %s225, %s226
    %p235 = scmp.eq.s32.totalorder %s26, 0
    %p236 = por %p234, %p235
    %p237 = scmp.ne.s32.totalorder %s225, %s226
    %p238 = scmp.eq.s32.totalorder %s27, 1
    %p239 = por %p237, %p238
    %p241 = scmp.ne.s32.totalorder %s226, %s240
    %p242 = scmp.eq.s32.totalorder %s27, 0
    %p243 = por %p241, %p242
    %s245 = sadd.s32 %s244, 1
    %p248 = scmp.eq.s32.totalorder %s21, 1
    %p249 = scmp.ne.s32.totalorder %s244, %s246
    %p250 = scmp.eq.s32.totalorder %s21, 0
    %p251 = por %p249, %p250
    %p252 = scmp.ne.s32.totalorder %s244, %s246
    %p253 = scmp.eq.s32.totalorder %s26, 1
    %p254 = por %p252, %p253
    %p255 = scmp.ne.s32.totalorder %s246, %s247
    %p256 = scmp.eq.s32.totalorder %s26, 0
    %p257 = por %p255, %p256
    %p258 = scmp.ne.s32.totalorder %s246, %s247
    %p259 = scmp.eq.s32.totalorder %s27, 1
    %p260 = por %p258, %p259
    %p262 = scmp.ne.s32.totalorder %s247, %s261
    %p263 = scmp.eq.s32.totalorder %s27, 0
    %p264 = por %p262, %p263
    %s266 = sadd.s32 %s265, 1
    %p269 = scmp.eq.s32.totalorder %s21, 1
    %p270 = scmp.ne.s32.totalorder %s265, %s267
    %p271 = scmp.eq.s32.totalorder %s21, 0
    %p272 = por %p270, %p271
    %p273 = scmp.ne.s32.totalorder %s265, %s267
    %p274 = scmp.eq.s32.totalorder %s26, 1
    %p275 = por %p273, %p274
    %p276 = scmp.ne.s32.totalorder %s267, %s268
    %p277 = scmp.eq.s32.totalorder %s26, 0
    %p278 = por %p276, %p277
    %p279 = scmp.ne.s32.totalorder %s267, %s268
    %p280 = scmp.eq.s32.totalorder %s27, 1
    %p281 = por %p279, %p280
    %p283 = scmp.ne.s32.totalorder %s268, %s282
    %p284 = scmp.eq.s32.totalorder %s27, 0
    %p285 = por %p283, %p284
    %s287 = sadd.s32 %s286, 1
    %p290 = scmp.eq.s32.totalorder %s21, 1
    %p291 = scmp.ne.s32.totalorder %s286, %s288
    %p292 = scmp.eq.s32.totalorder %s21, 0
    %p293 = por %p291, %p292
    %p294 = scmp.ne.s32.totalorder %s286, %s288
    %p295 = scmp.eq.s32.totalorder %s26, 1
    %p296 = por %p294, %p295
    %p297 = scmp.ne.s32.totalorder %s288, %s289
    %p298 = scmp.eq.s32.totalorder %s26, 0
    %p299 = por %p297, %p298
    %p300 = scmp.ne.s32.totalorder %s288, %s289
    %p301 = scmp.eq.s32.totalorder %s27, 1
    %p302 = por %p300, %p301
    %p304 = scmp.ne.s32.totalorder %s289, %s303
    %p305 = scmp.eq.s32.totalorder %s27, 0
    %p306 = por %p304, %p305
    %s308 = sadd.s32 %s307, 1
    %p311 = scmp.eq.s32.totalorder %s21, 1
    %p312 = scmp.ne.s32.totalorder %s307, %s309
    %p313 = scmp.eq.s32.totalorder %s21, 0
    %p314 = por %p312, %p313
    %p315 = scmp.ne.s32.totalorder %s307, %s309
    %p316 = scmp.eq.s32.totalorder %s26, 1
    %p317 = por %p315, %p316
    %p318 = scmp.ne.s32.totalorder %s309, %s310
    %p319 = scmp.eq.s32.totalorder %s26, 0
    %p320 = por %p318, %p319
    %p321 = scmp.ne.s32.totalorder %s309, %s310
    %p322 = scmp.eq.s32.totalorder %s27, 1
    %p323 = por %p321, %p322
    %p325 = scmp.ne.s32.totalorder %s310, %s324
    %p326 = scmp.eq.s32.totalorder %s27, 0
    %p327 = por %p325, %p326
    %s329 = sadd.s32 %s328, 1
    %p332 = scmp.eq.s32.totalorder %s21, 1
    %p333 = scmp.ne.s32.totalorder %s328, %s330
    %p334 = scmp.eq.s32.totalorder %s21, 0
    %p335 = por %p333, %p334
    %p336 = scmp.ne.s32.totalorder %s328, %s330
    %p337 = scmp.eq.s32.totalorder %s26, 1
    %p338 = por %p336, %p337
    %p339 = scmp.ne.s32.totalorder %s330, %s331
    %p340 = scmp.eq.s32.totalorder %s26, 0
    %p341 = por %p339, %p340
    %p342 = scmp.ne.s32.totalorder %s330, %s331
    %p343 = scmp.eq.s32.totalorder %s27, 1
    %p344 = por %p342, %p343
    %p346 = scmp.ne.s32.totalorder %s331, %s345
    %p347 = scmp.eq.s32.totalorder %s27, 0
    %p348 = por %p346, %p347
    %s349 = ssub.s32 %s21, %s28
    %p350 = scmp.eq.s32.totalorder %s349, 0
    %s352 = sadd.s32 %s351, 1
    %s353 = scalar_select %p350, %s351, %s352
    %p356 = pneg %p350
    %p357 = scmp.eq.s32.totalorder %s21, 1
    %p358 = por %p356, %p357
    %p359 = scmp.ne.s32.totalorder %s351, %s354
    %p360 = scmp.eq.s32.totalorder %s21, 0
    %p361 = por %p359, %p360
    %p362 = scmp.ne.s32.totalorder %s351, %s354
    %p363 = scmp.eq.s32.totalorder %s26, 1
    %p364 = por %p362, %p363
    %p365 = scmp.ne.s32.totalorder %s354, %s355
    %p366 = scmp.eq.s32.totalorder %s26, 0
    %p367 = por %p365, %p366
    %p368 = scmp.ne.s32.totalorder %s354, %s355
    %p369 = scmp.eq.s32.totalorder %s27, 1
    %p370 = por %p368, %p369
    %p372 = scmp.ne.s32.totalorder %s355, %s371
    %p373 = scmp.eq.s32.totalorder %s27, 0
    %p374 = por %p372, %p373
    %p375 = scmp.le.s32.totalorder 1, %s21
    %p376 = scmp.lt.s32.totalorder %s21, 3
    %p377 = pnand %p375, %p376
    %p378 = pneg %p377
    // Predicated region
    $region9: #{basic_block_forward.1} parent=5 // pred_check
      _
    $region10: #{basic_block_forward.1} parent=5 // pred_check_branch
      %380 = sbr.rel (%p377) target = $region12
    $region11: #{basic_block_forward.1} parent=5 // pred_region
      %s381 = ssub.s32 %s21, 1
      // Predicated region
      $region13: #{basic_block_forward.1} parent=11 // pred_check
        %p382 = pneg %p68
      $region14: #{basic_block_forward.1} parent=11 // pred_check_branch
        %384 = sbr.rel (%p382) target = $region16
      $region15: #{basic_block_forward.1} parent=11 // pred_region
        _
      $region16: #{basic_block_forward.1} parent=11 // pred_fallthru
        _
      // Predicated region
      $region17: #{basic_block_forward.1} parent=11 // pred_check
        %p385 = pneg %p89
      $region18: #{basic_block_forward.1} parent=11 // pred_check_branch
        %387 = sbr.rel (%p385) target = $region20
      $region19: #{basic_block_forward.1} parent=11 // pred_region
        _
      $region20: #{basic_block_forward.1} parent=11 // pred_fallthru
        _
      // Predicated region
      $region21: #{basic_block_forward.1} parent=11 // pred_check
        %p388 = pneg %p110
      $region22: #{basic_block_forward.1} parent=11 // pred_check_branch
        %390 = sbr.rel (%p388) target = $region24
      $region23: #{basic_block_forward.1} parent=11 // pred_region
        _
      $region24: #{basic_block_forward.1} parent=11 // pred_fallthru
        _
      // Predicated region
      $region25: #{basic_block_forward.1} parent=11 // pred_check
        %p391 = pneg %p131
      $region26: #{basic_block_forward.1} parent=11 // pred_check_branch
        %393 = sbr.rel (%p391) target = $region28
      $region27: #{basic_block_forward.1} parent=11 // pred_region
        _
      $region28: #{basic_block_forward.1} parent=11 // pred_fallthru
        _
      // Predicated region
      $region29: #{basic_block_forward.1} parent=11 // pred_check
        %p394 = pneg %p152
      $region30: #{basic_block_forward.1} parent=11 // pred_check_branch
        %396 = sbr.rel (%p394) target = $region32
      $region31: #{basic_block_forward.1} parent=11 // pred_region
        _
      $region32: #{basic_block_forward.1} parent=11 // pred_fallthru
        _
      // Predicated region
      $region33: #{basic_block_forward.1} parent=11 // pred_check
        %p397 = pneg %p173
      $region34: #{basic_block_forward.1} parent=11 // pred_check_branch
        %399 = sbr.rel (%p397) target = $region36
      $region35: #{basic_block_forward.1} parent=11 // pred_region
        _
      $region36: #{basic_block_forward.1} parent=11 // pred_fallthru
        _
      // Predicated region
      $region37: #{basic_block_forward.1} parent=11 // pred_check
        %p400 = pneg %p194
      $region38: #{basic_block_forward.1} parent=11 // pred_check_branch
        %402 = sbr.rel (%p400) target = $region40
      $region39: #{basic_block_forward.1} parent=11 // pred_region
        _
      $region40: #{basic_block_forward.1} parent=11 // pred_fallthru
        _
      // Predicated region
      $region41: #{basic_block_forward.1} parent=11 // pred_check
        %p403 = pneg %p215
      $region42: #{basic_block_forward.1} parent=11 // pred_check_branch
        %405 = sbr.rel (%p403) target = $region44
      $region43: #{basic_block_forward.1} parent=11 // pred_region
        _
      $region44: #{basic_block_forward.1} parent=11 // pred_fallthru
        _
      // Predicated region
      $region45: #{basic_block_forward.1} parent=11 // pred_check
        %p406 = pneg %p236
      $region46: #{basic_block_forward.1} parent=11 // pred_check_branch
        %408 = sbr.rel (%p406) target = $region48
      $region47: #{basic_block_forward.1} parent=11 // pred_region
        _
      $region48: #{basic_block_forward.1} parent=11 // pred_fallthru
        _
      // Predicated region
      $region49: #{basic_block_forward.1} parent=11 // pred_check
        %p409 = pneg %p257
      $region50: #{basic_block_forward.1} parent=11 // pred_check_branch
        %411 = sbr.rel (%p409) target = $region52
      $region51: #{basic_block_forward.1} parent=11 // pred_region
        _
      $region52: #{basic_block_forward.1} parent=11 // pred_fallthru
        _
      // Predicated region
      $region53: #{basic_block_forward.1} parent=11 // pred_check
        %p412 = pneg %p278
      $region54: #{basic_block_forward.1} parent=11 // pred_check_branch
        %414 = sbr.rel (%p412) target = $region56
      $region55: #{basic_block_forward.1} parent=11 // pred_region
        _
      $region56: #{basic_block_forward.1} parent=11 // pred_fallthru
        _
      // Predicated region
      $region57: #{basic_block_forward.1} parent=11 // pred_check
        %p415 = pneg %p299
      $region58: #{basic_block_forward.1} parent=11 // pred_check_branch
        %417 = sbr.rel (%p415) target = $region60
      $region59: #{basic_block_forward.1} parent=11 // pred_region
        _
      $region60: #{basic_block_forward.1} parent=11 // pred_fallthru
        _
      // Predicated region
      $region61: #{basic_block_forward.1} parent=11 // pred_check
        %p418 = pneg %p320
      $region62: #{basic_block_forward.1} parent=11 // pred_check_branch
        %420 = sbr.rel (%p418) target = $region64
      $region63: #{basic_block_forward.1} parent=11 // pred_region
        _
      $region64: #{basic_block_forward.1} parent=11 // pred_fallthru
        _
      // Predicated region
      $region65: #{basic_block_forward.1} parent=11 // pred_check
        %p421 = pneg %p341
      $region66: #{basic_block_forward.1} parent=11 // pred_check_branch
        %423 = sbr.rel (%p421) target = $region68
      $region67: #{basic_block_forward.1} parent=11 // pred_region
        _
      $region68: #{basic_block_forward.1} parent=11 // pred_fallthru
        _
    $region12: #{basic_block_forward.1} parent=5 // pred_fallthru
      _
    %p424 = scmp.lt.s32.totalorder %s21, 2
    // Predicated region
    $region69: #{basic_block_forward.1} parent=5 // pred_check
      %p425 = pneg %p424
    $region70: #{basic_block_forward.1} parent=5 // pred_check_branch
      %427 = sbr.rel (%p425) target = $region72
    $region71: #{basic_block_forward.1} parent=5 // pred_region
      // Predicated region
      $region73: #{basic_block_forward.1} parent=71 // pred_check
        %p428 = pneg %p41
      $region74: #{basic_block_forward.1} parent=71 // pred_check_branch
        %430 = sbr.rel (%p428) target = $region76
      $region75: #{basic_block_forward.1} parent=71 // pred_region
        %p431 = scmp.lt.s32.totalorder %s21, 1
        %s432 = scalar_select %p431, %s21, 1
        %s433 = smul.addr %s432, 32
        %s434 = smul.addr %s433, 8
        %s435 = scalar_lea.vmem %s0, %s434
      $region76: #{basic_block_forward.1} parent=71 // pred_fallthru
        _
    $region72: #{basic_block_forward.1} parent=5 // pred_fallthru
      _
    %p436 = scmp.le.s32.totalorder 1, %s21
    %p437 = scmp.lt.s32.totalorder %s21, 3
    %p438 = pnand %p436, %p437
    %p439 = pneg %p438
    // Predicated region
    $region77: #{basic_block_forward.1} parent=5 // pred_check
      _
    $region78: #{basic_block_forward.1} parent=5 // pred_check_branch
      %441 = sbr.rel (%p438) target = $region80
    $region79: #{basic_block_forward.1} parent=5 // pred_region
      %s442 = ssub.s32 %s21, 1
      %p443 = scmp.lt.s32.totalorder %s26, 1
      %s444 = scalar_select %p443, %s26, 1
      %s445 = smul.addr %s444, 32
      %s446 = smul.addr %s445, 8
      %s447 = scalar_lea.vmem %s0, %s446
      %p448 = pneg %p47
      %p449 = pneg %p44
      %p450 = pneg %p68
      %p451 = pneg %p65
      %p452 = pneg %p89
      %p453 = pneg %p86
      %p454 = pneg %p110
      %p455 = pneg %p107
      %p456 = pneg %p131
      %p457 = pneg %p128
      %p458 = pneg %p152
      %p459 = pneg %p149
      %p460 = pneg %p173
      %p461 = pneg %p170
      %p462 = pneg %p194
      %p463 = pneg %p191
      %p464 = pneg %p215
      %p465 = pneg %p212
      %p466 = pneg %p236
      %p467 = pneg %p233
      %p468 = pneg %p257
      %p469 = pneg %p254
      %p470 = pneg %p278
      %p471 = pneg %p275
      %p472 = pneg %p299
      %p473 = pneg %p296
      %p474 = pneg %p320
      %p475 = pneg %p317
      %p476 = pneg %p341
      %p477 = pneg %p338
      %p478 = pneg %p367
      %p479 = pneg %p364
      %p480 = scmp.lt.s32.totalorder %s26, 1
      %s481 = scalar_select %p480, %s26, 1
      %s482 = smul.addr %s481, 32
      %s483 = smul.addr %s482, 8
      %s484 = scalar_lea.vmem %s15, %s483
      %p485 = scmp.lt.s32.totalorder %s26, 1
      %s486 = scalar_select %p485, %s26, 1
      %s487 = smul.addr %s486, 32
      %s488 = smul.addr %s487, 8
      %s489 = scalar_lea.vmem %s0, %s488
      %p490 = scmp.lt.s32.totalorder %s26, 1
      %s491 = scalar_select %p490, %s26, 1
      %s492 = smul.addr %s491, 32
      %s493 = smul.addr %s492, 8
      %s494 = scalar_lea.vmem %s15, %s493
      %v496 = vld [vmem:[%s489] sm:$0xff]
      %v497 = vld [vmem:[%s489 + $0x8] sm:$0xff]
      %v498 = vld [vmem:[%s489 + $0x10] sm:$0xff]
      %v499 = vld [vmem:[%s489 + $0x18] sm:$0xff]
      %v500 = vld [vmem:[%s489 + $0x20] sm:$0xff]
      %v501 = vld [vmem:[%s489 + $0x28] sm:$0xff]
      %v502 = vld [vmem:[%s489 + $0x30] sm:$0xff]
      %v503 = vld [vmem:[%s489 + $0x38] sm:$0xff]
      %v504 = vld [vmem:[%s489 + $0x40] sm:$0xff]
      %v505 = vld [vmem:[%s489 + $0x48] sm:$0xff]
      %v506 = vld [vmem:[%s489 + $0x50] sm:$0xff]
      %v507 = vld [vmem:[%s489 + $0x58] sm:$0xff]
      %v508 = vld [vmem:[%s489 + $0x60] sm:$0xff]
      %v509 = vld [vmem:[%s489 + $0x68] sm:$0xff]
      %v510 = vld [vmem:[%s489 + $0x70] sm:$0xff]
      %v511 = vld [vmem:[%s489 + $0x78] sm:$0xff]
      %v512 = vld [vmem:[%s489 + $0x80] sm:$0xff]
      %v513 = vld [vmem:[%s489 + $0x88] sm:$0xff]
      %v514 = vld [vmem:[%s489 + $0x90] sm:$0xff]
      %v515 = vld [vmem:[%s489 + $0x98] sm:$0xff]
      %v516 = vld [vmem:[%s489 + $0xa0] sm:$0xff]
      %v517 = vld [vmem:[%s489 + $0xa8] sm:$0xff]
      %v518 = vld [vmem:[%s489 + $0xb0] sm:$0xff]
      %v519 = vld [vmem:[%s489 + $0xb8] sm:$0xff]
      %v520 = vld [vmem:[%s489 + $0xc0] sm:$0xff]
      %v521 = vld [vmem:[%s489 + $0xc8] sm:$0xff]
      %v522 = vld [vmem:[%s489 + $0xd0] sm:$0xff]
      %v523 = vld [vmem:[%s489 + $0xd8] sm:$0xff]
      %v524 = vld [vmem:[%s489 + $0xe0] sm:$0xff]
      %v525 = vld [vmem:[%s489 + $0xe8] sm:$0xff]
      %v526 = vld [vmem:[%s489 + $0xf0] sm:$0xff]
      %v527 = vld [vmem:[%s489 + $0xf8] sm:$0xff]
      %vm528 = vcmask 130048
      %v529 = vsel %vm528, %v496, 0.0
      %v530 = vsel %vm528, %v497, 0.0
      %v531 = vadd.f32 %v529, %v530
      %v532 = vsel %vm528, %v498, 0.0
      %v533 = vadd.f32 %v531, %v532
      %v534 = vsel %vm528, %v499, 0.0
      %v535 = vadd.f32 %v533, %v534
      %v536 = vsel %vm528, %v500, 0.0
      %v537 = vadd.f32 %v535, %v536
      %v538 = vsel %vm528, %v501, 0.0
      %v539 = vadd.f32 %v537, %v538
      %v540 = vsel %vm528, %v502, 0.0
      %v541 = vadd.f32 %v539, %v540
      %v542 = vsel %vm528, %v503, 0.0
      %v543 = vadd.f32 %v541, %v542
      %v544 = vsel %vm528, %v504, 0.0
      %v545 = vadd.f32 %v543, %v544
      %v546 = vsel %vm528, %v505, 0.0
      %v547 = vadd.f32 %v545, %v546
      %v548 = vsel %vm528, %v506, 0.0
      %v549 = vadd.f32 %v547, %v548
      %v550 = vsel %vm528, %v507, 0.0
      %v551 = vadd.f32 %v549, %v550
      %v552 = vsel %vm528, %v508, 0.0
      %v553 = vadd.f32 %v551, %v552
      %v554 = vsel %vm528, %v509, 0.0
      %v555 = vadd.f32 %v553, %v554
      %v556 = vsel %vm528, %v510, 0.0
      %v557 = vadd.f32 %v555, %v556
      %v558 = vsel %vm528, %v511, 0.0
      %v559 = vadd.f32 %v557, %v558
      %v560 = vsel %vm528, %v512, 0.0
      %v561 = vadd.f32 %v559, %v560
      %v562 = vsel %vm528, %v513, 0.0
      %v563 = vadd.f32 %v561, %v562
      %v564 = vsel %vm528, %v514, 0.0
      %v565 = vadd.f32 %v563, %v564
      %v566 = vsel %vm528, %v515, 0.0
      %v567 = vadd.f32 %v565, %v566
      %v568 = vsel %vm528, %v516, 0.0
      %v569 = vadd.f32 %v567, %v568
      %v570 = vsel %vm528, %v517, 0.0
      %v571 = vadd.f32 %v569, %v570
      %v572 = vsel %vm528, %v518, 0.0
      %v573 = vadd.f32 %v571, %v572
      %v574 = vsel %vm528, %v519, 0.0
      %v575 = vadd.f32 %v573, %v574
      %v576 = vsel %vm528, %v520, 0.0
      %v577 = vadd.f32 %v575, %v576
      %v578 = vsel %vm528, %v521, 0.0
      %v579 = vadd.f32 %v577, %v578
      %v580 = vsel %vm528, %v522, 0.0
      %v581 = vadd.f32 %v579, %v580
      %v582 = vsel %vm528, %v523, 0.0
      %v583 = vadd.f32 %v581, %v582
      %v584 = vsel %vm528, %v524, 0.0
      %v585 = vadd.f32 %v583, %v584
      %v586 = vsel %vm528, %v525, 0.0
      %v587 = vadd.f32 %v585, %v586
      %v588 = vsel %vm528, %v526, 0.0
      %v589 = vadd.f32 %v587, %v588
      %v590 = vsel %vm528, %v527, 0.0
      %v591 = vadd.f32 %v589, %v590
      %v592 = vrot.slane %v591, 4
      %v593 = vadd.f32 %v591, %v592
      %v594 = vrot.slane %v593, 2
      %v595 = vadd.f32 %v593, %v594
      %v596 = vrot.slane %v595, 1
      %v597 = vadd.f32 %v595, %v596
      %v598 = vrcp.pop 256.0
      %v599 = vmul.f32 %v597, %v598
      %v600 = vld [vmem:[%s2] sm:$0xff]
      %v601 = vld [vmem:[%s2 + $0x8] sm:$0xff]
      %v602 = vld [vmem:[%s3] sm:$0x1]
      %v604 = vsel %vm528, %v599, 0
      %606 = vmatprep.subr.mxu0 0.0
      %607 = vmatpush1.msra.mxu0 %v600
      %608 = vmatprep.subr.mxu0 0.0
      %609 = vmatpush1.msra.mxu0 %v601
      %610 = vmatprep.subr.mxu0 0.0
      %611 = vmatpush1.msra.mxu0 0.0
      %612 = vmatprep.subr.mxu0 0.0
      %613 = vmatpush1.msra.mxu0 0.0
      %614 = vmatprep.subr.mxu0 0.0
      %615 = vmatpush1.msra.mxu0 0.0
      %616 = vmatprep.subr.mxu0 0.0
      %617 = vmatpush1.msra.mxu0 0.0
      %618 = vmatprep.subr.mxu0 0.0
      %619 = vmatpush1.msra.mxu0 0.0
      %620 = vmatprep.subr.mxu0 0.0
      %621 = vmatpush1.msra.mxu0 0.0
      %622 = vmatprep.subr.mxu0 0.0
      %623 = vmatpush1.msra.mxu0 0.0
      %624 = vmatprep.subr.mxu0 0.0
      %625 = vmatpush1.msra.mxu0 0.0
      %626 = vmatprep.subr.mxu0 0.0
      %627 = vmatpush1.msra.mxu0 0.0
      %628 = vmatprep.subr.mxu0 0.0
      %629 = vmatpush1.msra.mxu0 0.0
      %630 = vmatprep.subr.mxu0 0.0
      %631 = vmatpush1.msra.mxu0 0.0
      %632 = vmatprep.subr.mxu0 0.0
      %633 = vmatpush1.msra.mxu0 0.0
      %634 = vmatprep.subr.mxu0 0.0
      %635 = vmatpush1.msra.mxu0 0.0
      %636 = vmatprep.subr.mxu0 0.0
      %637 = vmatpush1.msra.mxu0 0.0
      %638 = vmatprep.subr.mxu0 0.0
      %639 = vmatpush1.msra.mxu0 0.0
      %640 = vmatprep.subr.mxu0 0.0
      %641 = vmatpush1.msra.mxu0 0.0
      %642 = vmatprep.subr.mxu0 0.0
      %643 = vmatpush1.msra.mxu0 0.0
      %644 = vmatprep.subr.mxu0 0.0
      %645 = vmatpush1.msra.mxu0 0.0
      %646 = vmatprep.subr.mxu0 0.0
      %647 = vmatpush1.msra.mxu0 0.0
      %648 = vmatprep.subr.mxu0 0.0
      %649 = vmatpush1.msra.mxu0 0.0
      %650 = vmatprep.subr.mxu0 0.0
      %651 = vmatpush1.msra.mxu0 0.0
      %652 = vmatprep.subr.mxu0 0.0
      %653 = vmatpush1.msra.mxu0 0.0
      %654 = vmatprep.subr.mxu0 0.0
      %655 = vmatpush1.msra.mxu0 0.0
      %656 = vmatprep.subr.mxu0 0.0
      %657 = vmatpush1.msra.mxu0 0.0
      %658 = vmatprep.subr.mxu0 0.0
      %659 = vmatpush1.msra.mxu0 0.0
      %660 = vmatprep.subr.mxu0 0.0
      %661 = vmatpush1.msra.mxu0 0.0
      %662 = vmatprep.subr.mxu0 0.0
      %663 = vmatpush1.msra.mxu0 0.0
      %664 = vmatprep.subr.mxu0 0.0
      %665 = vmatpush1.msra.mxu0 0.0
      %666 = vmatprep.subr.mxu0 0.0
      %667 = vmatpush1.msra.mxu0 0.0
      %668 = vmatprep.subr.mxu0 0.0
      %669 = vmatpush1.msra.mxu0 0.0
      %670 = vmatprep.mubr.f32.mxu0 0.0
      %671 = vmatmul.mubr.f32.gmra.mrb[0].mxu0 %v604
      %v672 = vpop.f32.mrb[0].mxu0
      %v673 = vadd.f32 %v602, %v672
      %v674 = vpop.f32.mrb[0].mxu0
      %675 = vdwg.mxu0
      %v676 = vmax.f32 %v673, 0.0
      %v677 = vld [vmem:[%s4] sm:$0xff]
      %v678 = vld [vmem:[%s4 + $0x8] sm:$0xff]
      %v679 = vld [vmem:[%s5] sm:$0x1]
      %v681 = vsel %vm528, %v676, 0
      %683 = vmatprep.subr.mxu0 0.0
      %684 = vmatpush1.msra.mxu0 %v677
      %685 = vmatprep.subr.mxu0 0.0
      %686 = vmatpush1.msra.mxu0 %v678
      %687 = vmatprep.subr.mxu0 0.0
      %688 = vmatpush1.msra.mxu0 0.0
      %689 = vmatprep.subr.mxu0 0.0
      %690 = vmatpush1.msra.mxu0 0.0
      %691 = vmatprep.subr.mxu0 0.0
      %692 = vmatpush1.msra.mxu0 0.0
      %693 = vmatprep.subr.mxu0 0.0
      %694 = vmatpush1.msra.mxu0 0.0
      %695 = vmatprep.subr.mxu0 0.0
      %696 = vmatpush1.msra.mxu0 0.0
      %697 = vmatprep.subr.mxu0 0.0
      %698 = vmatpush1.msra.mxu0 0.0
      %699 = vmatprep.subr.mxu0 0.0
      %700 = vmatpush1.msra.mxu0 0.0
      %701 = vmatprep.subr.mxu0 0.0
      %702 = vmatpush1.msra.mxu0 0.0
      %703 = vmatprep.subr.mxu0 0.0
      %704 = vmatpush1.msra.mxu0 0.0
      %705 = vmatprep.subr.mxu0 0.0
      %706 = vmatpush1.msra.mxu0 0.0
      %707 = vmatprep.subr.mxu0 0.0
      %708 = vmatpush1.msra.mxu0 0.0
      %709 = vmatprep.subr.mxu0 0.0
      %710 = vmatpush1.msra.mxu0 0.0
      %711 = vmatprep.subr.mxu0 0.0
      %712 = vmatpush1.msra.mxu0 0.0
      %713 = vmatprep.subr.mxu0 0.0
      %714 = vmatpush1.msra.mxu0 0.0
      %715 = vmatprep.subr.mxu0 0.0
      %716 = vmatpush1.msra.mxu0 0.0
      %717 = vmatprep.subr.mxu0 0.0
      %718 = vmatpush1.msra.mxu0 0.0
      %719 = vmatprep.subr.mxu0 0.0
      %720 = vmatpush1.msra.mxu0 0.0
      %721 = vmatprep.subr.mxu0 0.0
      %722 = vmatpush1.msra.mxu0 0.0
      %723 = vmatprep.subr.mxu0 0.0
      %724 = vmatpush1.msra.mxu0 0.0
      %725 = vmatprep.subr.mxu0 0.0
      %726 = vmatpush1.msra.mxu0 0.0
      %727 = vmatprep.subr.mxu0 0.0
      %728 = vmatpush1.msra.mxu0 0.0
      %729 = vmatprep.subr.mxu0 0.0
      %730 = vmatpush1.msra.mxu0 0.0
      %731 = vmatprep.subr.mxu0 0.0
      %732 = vmatpush1.msra.mxu0 0.0
      %733 = vmatprep.subr.mxu0 0.0
      %734 = vmatpush1.msra.mxu0 0.0
      %735 = vmatprep.subr.mxu0 0.0
      %736 = vmatpush1.msra.mxu0 0.0
      %737 = vmatprep.subr.mxu0 0.0
      %738 = vmatpush1.msra.mxu0 0.0
      %739 = vmatprep.subr.mxu0 0.0
      %740 = vmatpush1.msra.mxu0 0.0
      %741 = vmatprep.subr.mxu0 0.0
      %742 = vmatpush1.msra.mxu0 0.0
      %743 = vmatprep.subr.mxu0 0.0
      %744 = vmatpush1.msra.mxu0 0.0
      %745 = vmatprep.subr.mxu0 0.0
      %746 = vmatpush1.msra.mxu0 0.0
      %747 = vmatprep.mubr.f32.mxu0 0.0
      %748 = vmatmul.mubr.f32.gmra.mrb[0].mxu0 %v681
      %v749 = vpop.f32.mrb[0].mxu0
      %v750 = vadd.f32 %v679, %v749
      %v751 = vpop.f32.mrb[0].mxu0
      %752 = vdwg.mxu0
      %v753 = vxor.u32 %v750, 2147483648
      %v754 = vmul.f32 %v753, 1.442695
      %v755 = vpow.pop %v754
      %v756 = vadd.f32 %v755, 1.0
      %v757 = vrcp.pop %v756
      %v758 = vmul.f32 1.0, %v757
      %vm759 = vcmask 125952
      %760 = vst.msk [vmem:[#allocation2] sm:$0xf] %vm759, 0
      %761 = vst.msk [vmem:[#allocation2 + $0x4] sm:$0xf] %vm759, 0
      %762 = vst.msk [vmem:[#allocation2 + $0x8] sm:$0xf] %vm759, 0
      %763 = vst.msk [vmem:[#allocation2 + $0xc] sm:$0xf] %vm759, 0
      %764 = vst.msk [vmem:[#allocation2 + $0x10] sm:$0xf] %vm759, 0
      %765 = vst.msk [vmem:[#allocation2 + $0x14] sm:$0xf] %vm759, 0
      %766 = vst.msk [vmem:[#allocation2 + $0x18] sm:$0xf] %vm759, 0
      %767 = vst.msk [vmem:[#allocation2 + $0x1c] sm:$0xf] %vm759, 0
      %768 = vst.msk [vmem:[#allocation2 + $0x20] sm:$0xf] %vm759, 0
      %769 = vst.msk [vmem:[#allocation2 + $0x24] sm:$0xf] %vm759, 0
      %770 = vst.msk [vmem:[#allocation2 + $0x28] sm:$0xf] %vm759, 0
      %771 = vst.msk [vmem:[#allocation2 + $0x2c] sm:$0xf] %vm759, 0
      %772 = vst.msk [vmem:[#allocation2 + $0x30] sm:$0xf] %vm759, 0
      %773 = vst.msk [vmem:[#allocation2 + $0x34] sm:$0xf] %vm759, 0
      %774 = vst.msk [vmem:[#allocation2 + $0x38] sm:$0xf] %vm759, 0
      %775 = vst.msk [vmem:[#allocation2 + $0x3c] sm:$0xf] %vm759, 0
      %776 = vst.msk [vmem:[#allocation2 + $0x40] sm:$0xf] %vm759, 0
      %777 = vst.msk [vmem:[#allocation2 + $0x44] sm:$0xf] %vm759, 0
      %778 = vst.msk [vmem:[#allocation2 + $0x48] sm:$0xf] %vm759, 0
      %779 = vst.msk [vmem:[#allocation2 + $0x4c] sm:$0xf] %vm759, 0
      %780 = vst.msk [vmem:[#allocation2 + $0x50] sm:$0xf] %vm759, 0
      %781 = vst.msk [vmem:[#allocation2 + $0x54] sm:$0xf] %vm759, 0
      %782 = vst.msk [vmem:[#allocation2 + $0x58] sm:$0xf] %vm759, 0
      %783 = vst.msk [vmem:[#allocation2 + $0x5c] sm:$0xf] %vm759, 0
      %784 = vst.msk [vmem:[#allocation2 + $0x60] sm:$0xf] %vm759, 0
      %785 = vst.msk [vmem:[#allocation2 + $0x64] sm:$0xf] %vm759, 0
      %786 = vst.msk [vmem:[#allocation2 + $0x68] sm:$0xf] %vm759, 0
      %787 = vst.msk [vmem:[#allocation2 + $0x6c] sm:$0xf] %vm759, 0
      %788 = vst.msk [vmem:[#allocation2 + $0x70] sm:$0xf] %vm759, 0
      %789 = vst.msk [vmem:[#allocation2 + $0x74] sm:$0xf] %vm759, 0
      %790 = vst.msk [vmem:[#allocation2 + $0x78] sm:$0xf] %vm759, 0
      %791 = vst.msk [vmem:[#allocation2 + $0x7c] sm:$0xf] %vm759, 0
      %792 = vst.msk [vmem:[#allocation2 + $0x80] sm:$0xf] %vm759, 0
      %793 = vst.msk [vmem:[#allocation2 + $0x84] sm:$0xf] %vm759, 0
      %794 = vst.msk [vmem:[#allocation2 + $0x88] sm:$0xf] %vm759, 0
      %795 = vst.msk [vmem:[#allocation2 + $0x8c] sm:$0xf] %vm759, 0
      %796 = vst.msk [vmem:[#allocation2 + $0x90] sm:$0xf] %vm759, 0
      %797 = vst.msk [vmem:[#allocation2 + $0x94] sm:$0xf] %vm759, 0
      %798 = vst.msk [vmem:[#allocation2 + $0x98] sm:$0xf] %vm759, 0
      %799 = vst.msk [vmem:[#allocation2 + $0x9c] sm:$0xf] %vm759, 0
      %800 = vst.msk [vmem:[#allocation2 + $0xa0] sm:$0xf] %vm759, 0
      %801 = vst.msk [vmem:[#allocation2 + $0xa4] sm:$0xf] %vm759, 0
      %802 = vst.msk [vmem:[#allocation2 + $0xa8] sm:$0xf] %vm759, 0
      %803 = vst.msk [vmem:[#allocation2 + $0xac] sm:$0xf] %vm759, 0
      %804 = vst.msk [vmem:[#allocation2 + $0xb0] sm:$0xf] %vm759, 0
      %805 = vst.msk [vmem:[#allocation2 + $0xb4] sm:$0xf] %vm759, 0
      %806 = vst.msk [vmem:[#allocation2 + $0xb8] sm:$0xf] %vm759, 0
      %807 = vst.msk [vmem:[#allocation2 + $0xbc] sm:$0xf] %vm759, 0
      %808 = vst.msk [vmem:[#allocation2 + $0xc0] sm:$0xf] %vm759, 0
      %809 = vst.msk [vmem:[#allocation2 + $0xc4] sm:$0xf] %vm759, 0
      %810 = vst.msk [vmem:[#allocation2 + $0xc8] sm:$0xf] %vm759, 0
      %811 = vst.msk [vmem:[#allocation2 + $0xcc] sm:$0xf] %vm759, 0
      %812 = vst.msk [vmem:[#allocation2 + $0xd0] sm:$0xf] %vm759, 0
      %813 = vst.msk [vmem:[#allocation2 + $0xd4] sm:$0xf] %vm759, 0
      %v814 = vlaneseq
      %v815 = vshrl.u32 %v814, 7
      %v816 = vsub.s32 0, %v815
      %v817 = vrot.slane %v758, %v816
      %v818 = vmul.f32 %v496, %v817
      %v819 = vmul.f32 %v497, %v817
      %v820 = vmul.f32 %v498, %v817
      %v821 = vmul.f32 %v499, %v817
      %v822 = vmul.f32 %v500, %v817
      %v823 = vmul.f32 %v501, %v817
      %v824 = vmul.f32 %v502, %v817
      %v825 = vmul.f32 %v503, %v817
      %v826 = vmul.f32 %v504, %v817
      %v827 = vmul.f32 %v505, %v817
      %v828 = vmul.f32 %v506, %v817
      %v829 = vmul.f32 %v507, %v817
      %v830 = vmul.f32 %v508, %v817
      %v831 = vmul.f32 %v509, %v817
      %v832 = vmul.f32 %v510, %v817
      %v833 = vmul.f32 %v511, %v817
      %v834 = vmul.f32 %v512, %v817
      %v835 = vmul.f32 %v513, %v817
      %v836 = vmul.f32 %v514, %v817
      %v837 = vmul.f32 %v515, %v817
      %v838 = vmul.f32 %v516, %v817
      %v839 = vmul.f32 %v517, %v817
      %v840 = vmul.f32 %v518, %v817
      %v841 = vmul.f32 %v519, %v817
      %v842 = vmul.f32 %v520, %v817
      %v843 = vmul.f32 %v521, %v817
      %v844 = vmul.f32 %v522, %v817
      %v845 = vmul.f32 %v523, %v817
      %v846 = vmul.f32 %v524, %v817
      %v847 = vmul.f32 %v525, %v817
      %v848 = vmul.f32 %v526, %v817
      %v849 = vmul.f32 %v527, %v817
      %v850 = vpack.c.bf16 %v819, %v818
      %v851 = vpack.c.bf16 %v821, %v820
      %v852 = vpack.c.bf16 %v823, %v822
      %v853 = vpack.c.bf16 %v825, %v824
      %v854 = vpack.c.bf16 %v827, %v826
      %v855 = vpack.c.bf16 %v829, %v828
      %v856 = vpack.c.bf16 %v831, %v830
      %v857 = vpack.c.bf16 %v833, %v832
      %v858 = vpack.c.bf16 %v835, %v834
      %v859 = vpack.c.bf16 %v837, %v836
      %v860 = vpack.c.bf16 %v839, %v838
      %v861 = vpack.c.bf16 %v841, %v840
      %v862 = vpack.c.bf16 %v843, %v842
      %v863 = vpack.c.bf16 %v845, %v844
      %v864 = vpack.c.bf16 %v847, %v846
      %v865 = vpack.c.bf16 %v849, %v848
      %v882 = vunpack.c.l.b16 %v850
      %v883 = vunpack.c.h.b16 %v850
      %v884 = vunpack.c.l.b16 %v851
      %v885 = vunpack.c.h.b16 %v851
      %v886 = vunpack.c.l.b16 %v852
      %v887 = vunpack.c.h.b16 %v852
      %v888 = vunpack.c.l.b16 %v853
      %v889 = vunpack.c.h.b16 %v853
      %v890 = vunpack.c.l.b16 %v854
      %v891 = vunpack.c.h.b16 %v854
      %v892 = vunpack.c.l.b16 %v855
      %v893 = vunpack.c.h.b16 %v855
      %v894 = vunpack.c.l.b16 %v856
      %v895 = vunpack.c.h.b16 %v856
      %v896 = vunpack.c.l.b16 %v857
      %v897 = vunpack.c.h.b16 %v857
      %v898 = vunpack.c.l.b16 %v858
      %v899 = vunpack.c.h.b16 %v858
      %v900 = vunpack.c.l.b16 %v859
      %v901 = vunpack.c.h.b16 %v859
      %v902 = vunpack.c.l.b16 %v860
      %v903 = vunpack.c.h.b16 %v860
      %v904 = vunpack.c.l.b16 %v861
      %v905 = vunpack.c.h.b16 %v861
      %v906 = vunpack.c.l.b16 %v862
      %v907 = vunpack.c.h.b16 %v862
      %v908 = vunpack.c.l.b16 %v863
      %v909 = vunpack.c.h.b16 %v863
      %v910 = vunpack.c.l.b16 %v864
      %v911 = vunpack.c.h.b16 %v864
      %v912 = vunpack.c.l.b16 %v865
      %v913 = vunpack.c.h.b16 %v865
      %v914 = vpack.c.b16 %v882, %v882
      %v915 = vpack.c.b16 %v883, %v883
      %v916 = vpack.c.b16 %v884, %v884
      %v917 = vpack.c.b16 %v885, %v885
      %v918 = vpack.c.b16 %v886, %v886
      %v919 = vpack.c.b16 %v887, %v887
      %v920 = vpack.c.b16 %v888, %v888
      %v921 = vpack.c.b16 %v889, %v889
      %v922 = vpack.c.b16 %v890, %v890
      %v923 = vpack.c.b16 %v891, %v891
      %v924 = vpack.c.b16 %v892, %v892
      %v925 = vpack.c.b16 %v893, %v893
      %v926 = vpack.c.b16 %v894, %v894
      %v927 = vpack.c.b16 %v895, %v895
      %v928 = vpack.c.b16 %v896, %v896
      %v929 = vpack.c.b16 %v897, %v897
      %v930 = vpack.c.b16 %v898, %v898
      %v931 = vpack.c.b16 %v899, %v899
      %v932 = vpack.c.b16 %v900, %v900
      %v933 = vpack.c.b16 %v901, %v901
      %v934 = vpack.c.b16 %v902, %v902
      %v935 = vpack.c.b16 %v903, %v903
      %v936 = vpack.c.b16 %v904, %v904
      %v937 = vpack.c.b16 %v905, %v905
      %v938 = vpack.c.b16 %v906, %v906
      %v939 = vpack.c.b16 %v907, %v907
      %v940 = vpack.c.b16 %v908, %v908
      %v941 = vpack.c.b16 %v909, %v909
      %v942 = vpack.c.b16 %v910, %v910
      %v943 = vpack.c.b16 %v911, %v911
      %v944 = vpack.c.b16 %v912, %v912
      %v945 = vpack.c.b16 %v913, %v913
      %vm946 = vsmask.f32 256
      %vm947 = vsmask.f32 4368
      %vm948 = vmor %vm946, %vm947
      %v950 = vshrl.u32 %v914, 16
      %v952 = vrot.slane %v950, 7
      %v953 = vshll.u32 %v914, 16
      %v955 = vor.u32 %v952, %v953
      %v956 = vrot.slane %v952, 4
      %v958 = vshrl.u32 %v915, 16
      %v960 = vrot.slane %v958, 7
      %v961 = vshll.u32 %v915, 16
      %v963 = vor.u32 %v960, %v961
      %v964 = vsel %vm948, %v956, %v963
      %v965 = vrot.slane %v960, 4
      %v967 = vshrl.u32 %v916, 16
      %v969 = vrot.slane %v967, 7
      %v970 = vshll.u32 %v916, 16
      %v972 = vor.u32 %v969, %v970
      %v973 = vrot.slane %v969, 4
      %v975 = vshrl.u32 %v917, 16
      %v977 = vrot.slane %v975, 7
      %v978 = vshll.u32 %v917, 16
      %v980 = vor.u32 %v977, %v978
      %v981 = vsel %vm948, %v973, %v980
      %v982 = vrot.slane %v977, 4
      %v984 = vshrl.u32 %v918, 16
      %v986 = vrot.slane %v984, 7
      %v987 = vshll.u32 %v918, 16
      %v989 = vor.u32 %v986, %v987
      %v990 = vrot.slane %v986, 4
      %v992 = vshrl.u32 %v919, 16
      %v994 = vrot.slane %v992, 7
      %v995 = vshll.u32 %v919, 16
      %v997 = vor.u32 %v994, %v995
      %v998 = vsel %vm948, %v990, %v997
      %v999 = vrot.slane %v994, 4
      %v1001 = vshrl.u32 %v920, 16
      %v1003 = vrot.slane %v1001, 7
      %v1004 = vshll.u32 %v920, 16
      %v1006 = vor.u32 %v1003, %v1004
      %v1007 = vrot.slane %v1003, 4
      %v1009 = vshrl.u32 %v921, 16
      %v1011 = vrot.slane %v1009, 7
      %v1012 = vshll.u32 %v921, 16
      %v1014 = vor.u32 %v1011, %v1012
      %v1015 = vsel %vm948, %v1007, %v1014
      %v1016 = vrot.slane %v1011, 4
      %v1018 = vshrl.u32 %v922, 16
      %v1020 = vrot.slane %v1018, 7
      %v1021 = vshll.u32 %v922, 16
      %v1023 = vor.u32 %v1020, %v1021
      %v1024 = vrot.slane %v1020, 4
      %v1026 = vshrl.u32 %v923, 16
      %v1028 = vrot.slane %v1026, 7
      %v1029 = vshll.u32 %v923, 16
      %v1031 = vor.u32 %v1028, %v1029
      %v1032 = vsel %vm948, %v1024, %v1031
      %v1033 = vrot.slane %v1028, 4
      %v1035 = vshrl.u32 %v924, 16
      %v1037 = vrot.slane %v1035, 7
      %v1038 = vshll.u32 %v924, 16
      %v1040 = vor.u32 %v1037, %v1038
      %v1041 = vrot.slane %v1037, 4
      %v1043 = vshrl.u32 %v925, 16
      %v1045 = vrot.slane %v1043, 7
      %v1046 = vshll.u32 %v925, 16
      %v1048 = vor.u32 %v1045, %v1046
      %v1049 = vsel %vm948, %v1041, %v1048
      %v1050 = vrot.slane %v1045, 4
      %v1052 = vshrl.u32 %v926, 16
      %v1054 = vrot.slane %v1052, 7
      %v1055 = vshll.u32 %v926, 16
      %v1057 = vor.u32 %v1054, %v1055
      %v1058 = vrot.slane %v1054, 4
      %v1060 = vshrl.u32 %v927, 16
      %v1062 = vrot.slane %v1060, 7
      %v1063 = vshll.u32 %v927, 16
      %v1065 = vor.u32 %v1062, %v1063
      %v1066 = vsel %vm948, %v1058, %v1065
      %v1067 = vrot.slane %v1062, 4
      %v1069 = vshrl.u32 %v928, 16
      %v1071 = vrot.slane %v1069, 7
      %v1072 = vshll.u32 %v928, 16
      %v1074 = vor.u32 %v1071, %v1072
      %v1075 = vrot.slane %v1071, 4
      %v1077 = vshrl.u32 %v929, 16
      %v1079 = vrot.slane %v1077, 7
      %v1080 = vshll.u32 %v929, 16
      %v1082 = vor.u32 %v1079, %v1080
      %v1083 = vsel %vm948, %v1075, %v1082
      %v1084 = vrot.slane %v1079, 4
      %v1086 = vshrl.u32 %v930, 16
      %v1088 = vrot.slane %v1086, 7
      %v1089 = vshll.u32 %v930, 16
      %v1091 = vor.u32 %v1088, %v1089
      %v1092 = vrot.slane %v1088, 4
      %v1094 = vshrl.u32 %v931, 16
      %v1096 = vrot.slane %v1094, 7
      %v1097 = vshll.u32 %v931, 16
      %v1099 = vor.u32 %v1096, %v1097
      %v1100 = vsel %vm948, %v1092, %v1099
      %v1101 = vrot.slane %v1096, 4
      %v1103 = vshrl.u32 %v932, 16
      %v1105 = vrot.slane %v1103, 7
      %v1106 = vshll.u32 %v932, 16
      %v1108 = vor.u32 %v1105, %v1106
      %v1109 = vrot.slane %v1105, 4
      %v1111 = vshrl.u32 %v933, 16
      %v1113 = vrot.slane %v1111, 7
      %v1114 = vshll.u32 %v933, 16
      %v1116 = vor.u32 %v1113, %v1114
      %v1117 = vsel %vm948, %v1109, %v1116
      %v1118 = vrot.slane %v1113, 4
      %v1120 = vshrl.u32 %v934, 16
      %v1122 = vrot.slane %v1120, 7
      %v1123 = vshll.u32 %v934, 16
      %v1125 = vor.u32 %v1122, %v1123
      %v1126 = vrot.slane %v1122, 4
      %v1128 = vshrl.u32 %v935, 16
      %v1130 = vrot.slane %v1128, 7
      %v1131 = vshll.u32 %v935, 16
      %v1133 = vor.u32 %v1130, %v1131
      %v1134 = vsel %vm948, %v1126, %v1133
      %v1135 = vrot.slane %v1130, 4
      %v1137 = vshrl.u32 %v936, 16
      %v1139 = vrot.slane %v1137, 7
      %v1140 = vshll.u32 %v936, 16
      %v1142 = vor.u32 %v1139, %v1140
      %v1143 = vrot.slane %v1139, 4
      %v1145 = vshrl.u32 %v937, 16
      %v1147 = vrot.slane %v1145, 7
      %v1148 = vshll.u32 %v937, 16
      %v1150 = vor.u32 %v1147, %v1148
      %v1151 = vsel %vm948, %v1143, %v1150
      %v1152 = vrot.slane %v1147, 4
      %v1154 = vshrl.u32 %v938, 16
      %v1156 = vrot.slane %v1154, 7
      %v1157 = vshll.u32 %v938, 16
      %v1159 = vor.u32 %v1156, %v1157
      %v1160 = vrot.slane %v1156, 4
      %v1162 = vshrl.u32 %v939, 16
      %v1164 = vrot.slane %v1162, 7
      %v1165 = vshll.u32 %v939, 16
      %v1167 = vor.u32 %v1164, %v1165
      %v1168 = vsel %vm948, %v1160, %v1167
      %v1169 = vrot.slane %v1164, 4
      %v1171 = vshrl.u32 %v940, 16
      %v1173 = vrot.slane %v1171, 7
      %v1174 = vshll.u32 %v940, 16
      %v1176 = vor.u32 %v1173, %v1174
      %v1177 = vrot.slane %v1173, 4
      %v1179 = vshrl.u32 %v941, 16
      %v1181 = vrot.slane %v1179, 7
      %v1182 = vshll.u32 %v941, 16
      %v1184 = vor.u32 %v1181, %v1182
      %v1185 = vsel %vm948, %v1177, %v1184
      %v1186 = vrot.slane %v1181, 4
      %v1188 = vshrl.u32 %v942, 16
      %v1190 = vrot.slane %v1188, 7
      %v1191 = vshll.u32 %v942, 16
      %v1193 = vor.u32 %v1190, %v1191
      %v1194 = vrot.slane %v1190, 4
      %v1196 = vshrl.u32 %v943, 16
      %v1198 = vrot.slane %v1196, 7
      %v1199 = vshll.u32 %v943, 16
      %v1201 = vor.u32 %v1198, %v1199
      %v1202 = vsel %vm948, %v1194, %v1201
      %v1203 = vrot.slane %v1198, 4
      %v1205 = vshrl.u32 %v944, 16
      %v1207 = vrot.slane %v1205, 7
      %v1208 = vshll.u32 %v944, 16
      %v1210 = vor.u32 %v1207, %v1208
      %v1211 = vrot.slane %v1207, 4
      %v1213 = vshrl.u32 %v945, 16
      %v1215 = vrot.slane %v1213, 7
      %v1216 = vshll.u32 %v945, 16
      %v1218 = vor.u32 %v1215, %v1216
      %v1219 = vsel %vm948, %v1211, %v1218
      %v1220 = vrot.slane %v1215, 4
      %s1269 = scalar_lea.vmem [#allocation2], 12
      %vm1270 = vcmask 125952
      %vm1271 = vsmask.f32 7938
      %vm1272 = vmand %vm1270, %vm1271
      %v1273 = vld [vmem:[%s1269] sm:$0xf]
      %v1274 = vsel %vm1272, %v955, %v1273
      %1275 = vst [vmem:[%s1269] sm:$0xf] %v1274
      %1276 = vst.msk [vmem:[%s1269 + $0x4] sm:$0xf] %vm759, %v964
      %vm1277 = vcmask 122880
      %vm1278 = vmand %vm1277, %vm946
      %v1279 = vld [vmem:[%s1269 + $0x8] sm:$0x1]
      %v1280 = vsel %vm1278, %v965, %v1279
      %1281 = vst [vmem:[%s1269 + $0x8] sm:$0x1] %v1280
      %v1282 = vld [vmem:[%s1269 + $0xc] sm:$0xf]
      %v1283 = vsel %vm1272, %v972, %v1282
      %1284 = vst [vmem:[%s1269 + $0xc] sm:$0xf] %v1283
      %1285 = vst.msk [vmem:[%s1269 + $0x10] sm:$0xf] %vm759, %v981
      %v1286 = vld [vmem:[%s1269 + $0x14] sm:$0x1]
      %v1287 = vsel %vm1278, %v982, %v1286
      %1288 = vst [vmem:[%s1269 + $0x14] sm:$0x1] %v1287
      %v1289 = vld [vmem:[%s1269 + $0x18] sm:$0xf]
      %v1290 = vsel %vm1272, %v989, %v1289
      %1291 = vst [vmem:[%s1269 + $0x18] sm:$0xf] %v1290
      %1292 = vst.msk [vmem:[%s1269 + $0x1c] sm:$0xf] %vm759, %v998
      %v1293 = vld [vmem:[%s1269 + $0x20] sm:$0x1]
      %v1294 = vsel %vm1278, %v999, %v1293
      %1295 = vst [vmem:[%s1269 + $0x20] sm:$0x1] %v1294
      %v1296 = vld [vmem:[%s1269 + $0x24] sm:$0xf]
      %v1297 = vsel %vm1272, %v1006, %v1296
      %1298 = vst [vmem:[%s1269 + $0x24] sm:$0xf] %v1297
      %1299 = vst.msk [vmem:[%s1269 + $0x28] sm:$0xf] %vm759, %v1015
      %v1300 = vld [vmem:[%s1269 + $0x2c] sm:$0x1]
      %v1301 = vsel %vm1278, %v1016, %v1300
      %1302 = vst [vmem:[%s1269 + $0x2c] sm:$0x1] %v1301
      %v1303 = vld [vmem:[%s1269 + $0x30] sm:$0xf]
      %v1304 = vsel %vm1272, %v1023, %v1303
      %1305 = vst [vmem:[%s1269 + $0x30] sm:$0xf] %v1304
      %1306 = vst.msk [vmem:[%s1269 + $0x34] sm:$0xf] %vm759, %v1032
      %v1307 = vld [vmem:[%s1269 + $0x38] sm:$0x1]
      %v1308 = vsel %vm1278, %v1033, %v1307
      %1309 = vst [vmem:[%s1269 + $0x38] sm:$0x1] %v1308
      %v1310 = vld [vmem:[%s1269 + $0x3c] sm:$0xf]
      %v1311 = vsel %vm1272, %v1040, %v1310
      %1312 = vst [vmem:[%s1269 + $0x3c] sm:$0xf] %v1311
      %1313 = vst.msk [vmem:[%s1269 + $0x40] sm:$0xf] %vm759, %v1049
      %v1314 = vld [vmem:[%s1269 + $0x44] sm:$0x1]
      %v1315 = vsel %vm1278, %v1050, %v1314
      %1316 = vst [vmem:[%s1269 + $0x44] sm:$0x1] %v1315
      %v1317 = vld [vmem:[%s1269 + $0x48] sm:$0xf]
      %v1318 = vsel %vm1272, %v1057, %v1317
      %1319 = vst [vmem:[%s1269 + $0x48] sm:$0xf] %v1318
      %1320 = vst.msk [vmem:[%s1269 + $0x4c] sm:$0xf] %vm759, %v1066
      %v1321 = vld [vmem:[%s1269 + $0x50] sm:$0x1]
      %v1322 = vsel %vm1278, %v1067, %v1321
      %1323 = vst [vmem:[%s1269 + $0x50] sm:$0x1] %v1322
      %v1324 = vld [vmem:[%s1269 + $0x54] sm:$0xf]
      %v1325 = vsel %vm1272, %v1074, %v1324
      %1326 = vst [vmem:[%s1269 + $0x54] sm:$0xf] %v1325
      %1327 = vst.msk [vmem:[%s1269 + $0x58] sm:$0xf] %vm759, %v1083
      %v1328 = vld [vmem:[%s1269 + $0x5c] sm:$0x1]
      %v1329 = vsel %vm1278, %v1084, %v1328
      %1330 = vst [vmem:[%s1269 + $0x5c] sm:$0x1] %v1329
      %v1331 = vld [vmem:[%s1269 + $0x60] sm:$0xf]
      %v1332 = vsel %vm1272, %v1091, %v1331
      %1333 = vst [vmem:[%s1269 + $0x60] sm:$0xf] %v1332
      %1334 = vst.msk [vmem:[%s1269 + $0x64] sm:$0xf] %vm759, %v1100
      %v1335 = vld [vmem:[%s1269 + $0x68] sm:$0x1]
      %v1336 = vsel %vm1278, %v1101, %v1335
      %1337 = vst [vmem:[%s1269 + $0x68] sm:$0x1] %v1336
      %v1338 = vld [vmem:[%s1269 + $0x6c] sm:$0xf]
      %v1339 = vsel %vm1272, %v1108, %v1338
      %1340 = vst [vmem:[%s1269 + $0x6c] sm:$0xf] %v1339
      %1341 = vst.msk [vmem:[%s1269 + $0x70] sm:$0xf] %vm759, %v1117
      %v1342 = vld [vmem:[%s1269 + $0x74] sm:$0x1]
      %v1343 = vsel %vm1278, %v1118, %v1342
      %1344 = vst [vmem:[%s1269 + $0x74] sm:$0x1] %v1343
      %v1345 = vld [vmem:[%s1269 + $0x78] sm:$0xf]
      %v1346 = vsel %vm1272, %v1125, %v1345
      %1347 = vst [vmem:[%s1269 + $0x78] sm:$0xf] %v1346
      %1348 = vst.msk [vmem:[%s1269 + $0x7c] sm:$0xf] %vm759, %v1134
      %v1349 = vld [vmem:[%s1269 + $0x80] sm:$0x1]
      %v1350 = vsel %vm1278, %v1135, %v1349
      %1351 = vst [vmem:[%s1269 + $0x80] sm:$0x1] %v1350
      %v1352 = vld [vmem:[%s1269 + $0x84] sm:$0xf]
      %v1353 = vsel %vm1272, %v1142, %v1352
      %1354 = vst [vmem:[%s1269 + $0x84] sm:$0xf] %v1353
      %1355 = vst.msk [vmem:[%s1269 + $0x88] sm:$0xf] %vm759, %v1151
      %v1356 = vld [vmem:[%s1269 + $0x8c] sm:$0x1]
      %v1357 = vsel %vm1278, %v1152, %v1356
      %1358 = vst [vmem:[%s1269 + $0x8c] sm:$0x1] %v1357
      %v1359 = vld [vmem:[%s1269 + $0x90] sm:$0xf]
      %v1360 = vsel %vm1272, %v1159, %v1359
      %1361 = vst [vmem:[%s1269 + $0x90] sm:$0xf] %v1360
      %1362 = vst.msk [vmem:[%s1269 + $0x94] sm:$0xf] %vm759, %v1168
      %v1363 = vld [vmem:[%s1269 + $0x98] sm:$0x1]
      %v1364 = vsel %vm1278, %v1169, %v1363
      %1365 = vst [vmem:[%s1269 + $0x98] sm:$0x1] %v1364
      %v1366 = vld [vmem:[%s1269 + $0x9c] sm:$0xf]
      %v1367 = vsel %vm1272, %v1176, %v1366
      %1368 = vst [vmem:[%s1269 + $0x9c] sm:$0xf] %v1367
      %1369 = vst.msk [vmem:[%s1269 + $0xa0] sm:$0xf] %vm759, %v1185
      %v1370 = vld [vmem:[%s1269 + $0xa4] sm:$0x1]
      %v1371 = vsel %vm1278, %v1186, %v1370
      %1372 = vst [vmem:[%s1269 + $0xa4] sm:$0x1] %v1371
      %v1373 = vld [vmem:[%s1269 + $0xa8] sm:$0xf]
      %v1374 = vsel %vm1272, %v1193, %v1373
      %1375 = vst [vmem:[%s1269 + $0xa8] sm:$0xf] %v1374
      %1376 = vst.msk [vmem:[%s1269 + $0xac] sm:$0xf] %vm759, %v1202
      %v1377 = vld [vmem:[%s1269 + $0xb0] sm:$0x1]
      %v1378 = vsel %vm1278, %v1203, %v1377
      %1379 = vst [vmem:[%s1269 + $0xb0] sm:$0x1] %v1378
      %v1380 = vld [vmem:[%s1269 + $0xb4] sm:$0xf]
      %v1381 = vsel %vm1272, %v1210, %v1380
      %1382 = vst [vmem:[%s1269 + $0xb4] sm:$0xf] %v1381
      %1383 = vst.msk [vmem:[%s1269 + $0xb8] sm:$0xf] %vm759, %v1219
      %v1384 = vld [vmem:[%s1269 + $0xbc] sm:$0x1]
      %v1385 = vsel %vm1278, %v1220, %v1384
      %1386 = vst [vmem:[%s1269 + $0xbc] sm:$0x1] %v1385
      %v1387 = vld [vmem:[#allocation2] sm:$0xf]
      %v1388 = vld [vmem:[#allocation2 + $0x4] sm:$0xf]
      %v1389 = vld [vmem:[#allocation2 + $0x8] sm:$0xf]
      %v1390 = vld [vmem:[#allocation2 + $0xc] sm:$0xf]
      %v1391 = vld [vmem:[#allocation2 + $0x10] sm:$0xf]
      %v1392 = vld [vmem:[#allocation2 + $0x14] sm:$0xf]
      %v1393 = vld [vmem:[#allocation2 + $0x18] sm:$0xf]
      %v1394 = vld [vmem:[#allocation2 + $0x1c] sm:$0xf]
      %v1395 = vld [vmem:[#allocation2 + $0x20] sm:$0xf]
      %v1396 = vld [vmem:[#allocation2 + $0x24] sm:$0xf]
      %v1397 = vld [vmem:[#allocation2 + $0x28] sm:$0xf]
      %v1398 = vld [vmem:[#allocation2 + $0x2c] sm:$0xf]
      %v1399 = vld [vmem:[#allocation2 + $0x30] sm:$0xf]
      %v1400 = vld [vmem:[#allocation2 + $0x34] sm:$0xf]
      %v1401 = vld [vmem:[#allocation2 + $0x38] sm:$0xf]
      %v1402 = vld [vmem:[#allocation2 + $0x3c] sm:$0xf]
      %v1403 = vld [vmem:[#allocation2 + $0x40] sm:$0xf]
      %v1404 = vld [vmem:[#allocation2 + $0x44] sm:$0xf]
      %v1405 = vld [vmem:[#allocation2 + $0x48] sm:$0xf]
      %v1406 = vld [vmem:[#allocation2 + $0x4c] sm:$0xf]
      %v1407 = vld [vmem:[#allocation2 + $0x50] sm:$0xf]
      %v1408 = vld [vmem:[#allocation2 + $0x54] sm:$0xf]
      %v1409 = vld [vmem:[#allocation2 + $0x58] sm:$0xf]
      %v1410 = vld [vmem:[#allocation2 + $0x5c] sm:$0xf]
      %v1411 = vld [vmem:[#allocation2 + $0x60] sm:$0xf]
      %v1412 = vld [vmem:[#allocation2 + $0x64] sm:$0xf]
      %v1413 = vld [vmem:[#allocation2 + $0x68] sm:$0xf]
      %v1414 = vld [vmem:[#allocation2 + $0x6c] sm:$0xf]
      %v1415 = vld [vmem:[#allocation2 + $0x70] sm:$0xf]
      %v1416 = vld [vmem:[#allocation2 + $0x74] sm:$0xf]
      %v1417 = vld [vmem:[#allocation2 + $0x78] sm:$0xf]
      %v1418 = vld [vmem:[#allocation2 + $0x7c] sm:$0xf]
      %v1419 = vld [vmem:[#allocation2 + $0x80] sm:$0xf]
      %v1420 = vld [vmem:[#allocation2 + $0x84] sm:$0xf]
      %v1421 = vld [vmem:[#allocation2 + $0x88] sm:$0xf]
      %v1422 = vld [vmem:[#allocation2 + $0x8c] sm:$0xf]
      %v1423 = vld [vmem:[#allocation2 + $0x90] sm:$0xf]
      %v1424 = vld [vmem:[#allocation2 + $0x94] sm:$0xf]
      %v1425 = vld [vmem:[#allocation2 + $0x98] sm:$0xf]
      %v1426 = vld [vmem:[#allocation2 + $0x9c] sm:$0xf]
      %v1427 = vld [vmem:[#allocation2 + $0xa0] sm:$0xf]
      %v1428 = vld [vmem:[#allocation2 + $0xa4] sm:$0xf]
      %v1429 = vld [vmem:[#allocation2 + $0xa8] sm:$0xf]
      %v1430 = vld [vmem:[#allocation2 + $0xac] sm:$0xf]
      %v1431 = vld [vmem:[#allocation2 + $0xb0] sm:$0xf]
      %v1432 = vld [vmem:[#allocation2 + $0xb4] sm:$0xf]
      %v1433 = vld [vmem:[#allocation2 + $0xb8] sm:$0xf]
      %v1434 = vld [vmem:[#allocation2 + $0xbc] sm:$0xf]
      %v1435 = vld [vmem:[#allocation2 + $0xc0] sm:$0xf]
      %v1436 = vld [vmem:[#allocation2 + $0xc4] sm:$0xf]
      %v1437 = vld [vmem:[#allocation2 + $0xc8] sm:$0xf]
      %v1438 = vld [vmem:[#allocation2 + $0xcc] sm:$0xf]
      %v1439 = vld [vmem:[#allocation2 + $0xd0] sm:$0xf]
      %v1440 = vld [vmem:[#allocation2 + $0xd4] sm:$0xf]
      %vm1441 = vsmask.f32 3328
      %vm1442 = vsmask.f32 7440
      %vm1443 = vmor %vm1441, %vm1442
      %v1445 = vshrl.u32 %v1387, 16
      %v1447 = vrot.slane %v1445, 4
      %v1448 = vshll.u32 %v1387, 16
      %v1450 = vrot.slane %v1448, 5
      %v1451 = vor.u32 %v1447, %v1450
      %v1452 = vrot.slane %v1451, 4
      %v1454 = vshll.u32 %v1388, 16
      %v1456 = vrot.slane %v1454, 5
      %v1457 = vsel %vm1443, %v1452, %v1456
      %v1458 = vshrl.u32 %v1388, 16
      %v1460 = vrot.slane %v1458, 4
      %v1461 = vor.u32 %v1460, %v1456
      %v1462 = vrot.slane %v1461, 4
      %v1464 = vshll.u32 %v1389, 16
      %v1466 = vrot.slane %v1464, 5
      %v1467 = vsel %vm1443, %v1462, %v1466
      %v1469 = vshrl.u32 %v1390, 16
      %v1471 = vrot.slane %v1469, 4
      %v1472 = vshll.u32 %v1390, 16
      %v1474 = vrot.slane %v1472, 5
      %v1475 = vor.u32 %v1471, %v1474
      %v1476 = vrot.slane %v1475, 4
      %v1478 = vshll.u32 %v1391, 16
      %v1480 = vrot.slane %v1478, 5
      %v1481 = vsel %vm1443, %v1476, %v1480
      %v1482 = vshrl.u32 %v1391, 16
      %v1484 = vrot.slane %v1482, 4
      %v1485 = vor.u32 %v1484, %v1480
      %v1486 = vrot.slane %v1485, 4
      %v1488 = vshll.u32 %v1392, 16
      %v1490 = vrot.slane %v1488, 5
      %v1491 = vsel %vm1443, %v1486, %v1490
      %v1493 = vshrl.u32 %v1393, 16
      %v1495 = vrot.slane %v1493, 4
      %v1496 = vshll.u32 %v1393, 16
      %v1498 = vrot.slane %v1496, 5
      %v1499 = vor.u32 %v1495, %v1498
      %v1500 = vrot.slane %v1499, 4
      %v1502 = vshll.u32 %v1394, 16
      %v1504 = vrot.slane %v1502, 5
      %v1505 = vsel %vm1443, %v1500, %v1504
      %v1506 = vshrl.u32 %v1394, 16
      %v1508 = vrot.slane %v1506, 4
      %v1509 = vor.u32 %v1508, %v1504
      %v1510 = vrot.slane %v1509, 4
      %v1512 = vshll.u32 %v1395, 16
      %v1514 = vrot.slane %v1512, 5
      %v1515 = vsel %vm1443, %v1510, %v1514
      %v1517 = vshrl.u32 %v1396, 16
      %v1519 = vrot.slane %v1517, 4
      %v1520 = vshll.u32 %v1396, 16
      %v1522 = vrot.slane %v1520, 5
      %v1523 = vor.u32 %v1519, %v1522
      %v1524 = vrot.slane %v1523, 4
      %v1526 = vshll.u32 %v1397, 16
      %v1528 = vrot.slane %v1526, 5
      %v1529 = vsel %vm1443, %v1524, %v1528
      %v1530 = vshrl.u32 %v1397, 16
      %v1532 = vrot.slane %v1530, 4
      %v1533 = vor.u32 %v1532, %v1528
      %v1534 = vrot.slane %v1533, 4
      %v1536 = vshll.u32 %v1398, 16
      %v1538 = vrot.slane %v1536, 5
      %v1539 = vsel %vm1443, %v1534, %v1538
      %v1541 = vshrl.u32 %v1399, 16
      %v1543 = vrot.slane %v1541, 4
      %v1544 = vshll.u32 %v1399, 16
      %v1546 = vrot.slane %v1544, 5
      %v1547 = vor.u32 %v1543, %v1546
      %v1548 = vrot.slane %v1547, 4
      %v1550 = vshll.u32 %v1400, 16
      %v1552 = vrot.slane %v1550, 5
      %v1553 = vsel %vm1443, %v1548, %v1552
      %v1554 = vshrl.u32 %v1400, 16
      %v1556 = vrot.slane %v1554, 4
      %v1557 = vor.u32 %v1556, %v1552
      %v1558 = vrot.slane %v1557, 4
      %v1560 = vshll.u32 %v1401, 16
      %v1562 = vrot.slane %v1560, 5
      %v1563 = vsel %vm1443, %v1558, %v1562
      %v1565 = vshrl.u32 %v1402, 16
      %v1567 = vrot.slane %v1565, 4
      %v1568 = vshll.u32 %v1402, 16
      %v1570 = vrot.slane %v1568, 5
      %v1571 = vor.u32 %v1567, %v1570
      %v1572 = vrot.slane %v1571, 4
      %v1574 = vshll.u32 %v1403, 16
      %v1576 = vrot.slane %v1574, 5
      %v1577 = vsel %vm1443, %v1572, %v1576
      %v1578 = vshrl.u32 %v1403, 16
      %v1580 = vrot.slane %v1578, 4
      %v1581 = vor.u32 %v1580, %v1576
      %v1582 = vrot.slane %v1581, 4
      %v1584 = vshll.u32 %v1404, 16
      %v1586 = vrot.slane %v1584, 5
      %v1587 = vsel %vm1443, %v1582, %v1586
      %v1589 = vshrl.u32 %v1405, 16
      %v1591 = vrot.slane %v1589, 4
      %v1592 = vshll.u32 %v1405, 16
      %v1594 = vrot.slane %v1592, 5
      %v1595 = vor.u32 %v1591, %v1594
      %v1596 = vrot.slane %v1595, 4
      %v1598 = vshll.u32 %v1406, 16
      %v1600 = vrot.slane %v1598, 5
      %v1601 = vsel %vm1443, %v1596, %v1600
      %v1602 = vshrl.u32 %v1406, 16
      %v1604 = vrot.slane %v1602, 4
      %v1605 = vor.u32 %v1604, %v1600
      %v1606 = vrot.slane %v1605, 4
      %v1608 = vshll.u32 %v1407, 16
      %v1610 = vrot.slane %v1608, 5
      %v1611 = vsel %vm1443, %v1606, %v1610
      %v1613 = vshrl.u32 %v1408, 16
      %v1615 = vrot.slane %v1613, 4
      %v1616 = vshll.u32 %v1408, 16
      %v1618 = vrot.slane %v1616, 5
      %v1619 = vor.u32 %v1615, %v1618
      %v1620 = vrot.slane %v1619, 4
      %v1622 = vshll.u32 %v1409, 16
      %v1624 = vrot.slane %v1622, 5
      %v1625 = vsel %vm1443, %v1620, %v1624
      %v1626 = vshrl.u32 %v1409, 16
      %v1628 = vrot.slane %v1626, 4
      %v1629 = vor.u32 %v1628, %v1624
      %v1630 = vrot.slane %v1629, 4
      %v1632 = vshll.u32 %v1410, 16
      %v1634 = vrot.slane %v1632, 5
      %v1635 = vsel %vm1443, %v1630, %v1634
      %v1637 = vshrl.u32 %v1411, 16
      %v1639 = vrot.slane %v1637, 4
      %v1640 = vshll.u32 %v1411, 16
      %v1642 = vrot.slane %v1640, 5
      %v1643 = vor.u32 %v1639, %v1642
      %v1644 = vrot.slane %v1643, 4
      %v1646 = vshll.u32 %v1412, 16
      %v1648 = vrot.slane %v1646, 5
      %v1649 = vsel %vm1443, %v1644, %v1648
      %v1650 = vshrl.u32 %v1412, 16
      %v1652 = vrot.slane %v1650, 4
      %v1653 = vor.u32 %v1652, %v1648
      %v1654 = vrot.slane %v1653, 4
      %v1656 = vshll.u32 %v1413, 16
      %v1658 = vrot.slane %v1656, 5
      %v1659 = vsel %vm1443, %v1654, %v1658
      %v1661 = vshrl.u32 %v1414, 16
      %v1663 = vrot.slane %v1661, 4
      %v1664 = vshll.u32 %v1414, 16
      %v1666 = vrot.slane %v1664, 5
      %v1667 = vor.u32 %v1663, %v1666
      %v1668 = vrot.slane %v1667, 4
      %v1670 = vshll.u32 %v1415, 16
      %v1672 = vrot.slane %v1670, 5
      %v1673 = vsel %vm1443, %v1668, %v1672
      %v1674 = vshrl.u32 %v1415, 16
      %v1676 = vrot.slane %v1674, 4
      %v1677 = vor.u32 %v1676, %v1672
      %v1678 = vrot.slane %v1677, 4
      %v1680 = vshll.u32 %v1416, 16
      %v1682 = vrot.slane %v1680, 5
      %v1683 = vsel %vm1443, %v1678, %v1682
      %v1685 = vshrl.u32 %v1417, 16
      %v1687 = vrot.slane %v1685, 4
      %v1688 = vshll.u32 %v1417, 16
      %v1690 = vrot.slane %v1688, 5
      %v1691 = vor.u32 %v1687, %v1690
      %v1692 = vrot.slane %v1691, 4
      %v1694 = vshll.u32 %v1418, 16
      %v1696 = vrot.slane %v1694, 5
      %v1697 = vsel %vm1443, %v1692, %v1696
      %v1698 = vshrl.u32 %v1418, 16
      %v1700 = vrot.slane %v1698, 4
      %v1701 = vor.u32 %v1700, %v1696
      %v1702 = vrot.slane %v1701, 4
      %v1704 = vshll.u32 %v1419, 16
      %v1706 = vrot.slane %v1704, 5
      %v1707 = vsel %vm1443, %v1702, %v1706
      %v1709 = vshrl.u32 %v1420, 16
      %v1711 = vrot.slane %v1709, 4
      %v1712 = vshll.u32 %v1420, 16
      %v1714 = vrot.slane %v1712, 5
      %v1715 = vor.u32 %v1711, %v1714
      %v1716 = vrot.slane %v1715, 4
      %v1718 = vshll.u32 %v1421, 16
      %v1720 = vrot.slane %v1718, 5
      %v1721 = vsel %vm1443, %v1716, %v1720
      %v1722 = vshrl.u32 %v1421, 16
      %v1724 = vrot.slane %v1722, 4
      %v1725 = vor.u32 %v1724, %v1720
      %v1726 = vrot.slane %v1725, 4
      %v1728 = vshll.u32 %v1422, 16
      %v1730 = vrot.slane %v1728, 5
      %v1731 = vsel %vm1443, %v1726, %v1730
      %v1733 = vshrl.u32 %v1423, 16
      %v1735 = vrot.slane %v1733, 4
      %v1736 = vshll.u32 %v1423, 16
      %v1738 = vrot.slane %v1736, 5
      %v1739 = vor.u32 %v1735, %v1738
      %v1740 = vrot.slane %v1739, 4
      %v1742 = vshll.u32 %v1424, 16
      %v1744 = vrot.slane %v1742, 5
      %v1745 = vsel %vm1443, %v1740, %v1744
      %v1746 = vshrl.u32 %v1424, 16
      %v1748 = vrot.slane %v1746, 4
      %v1749 = vor.u32 %v1748, %v1744
      %v1750 = vrot.slane %v1749, 4
      %v1752 = vshll.u32 %v1425, 16
      %v1754 = vrot.slane %v1752, 5
      %v1755 = vsel %vm1443, %v1750, %v1754
      %v1757 = vshrl.u32 %v1426, 16
      %v1759 = vrot.slane %v1757, 4
      %v1760 = vshll.u32 %v1426, 16
      %v1762 = vrot.slane %v1760, 5
      %v1763 = vor.u32 %v1759, %v1762
      %v1764 = vrot.slane %v1763, 4
      %v1766 = vshll.u32 %v1427, 16
      %v1768 = vrot.slane %v1766, 5
      %v1769 = vsel %vm1443, %v1764, %v1768
      %v1770 = vshrl.u32 %v1427, 16
      %v1772 = vrot.slane %v1770, 4
      %v1773 = vor.u32 %v1772, %v1768
      %v1774 = vrot.slane %v1773, 4
      %v1776 = vshll.u32 %v1428, 16
      %v1778 = vrot.slane %v1776, 5
      %v1779 = vsel %vm1443, %v1774, %v1778
      %v1781 = vshrl.u32 %v1429, 16
      %v1783 = vrot.slane %v1781, 4
      %v1784 = vshll.u32 %v1429, 16
      %v1786 = vrot.slane %v1784, 5
      %v1787 = vor.u32 %v1783, %v1786
      %v1788 = vrot.slane %v1787, 4
      %v1790 = vshll.u32 %v1430, 16
      %v1792 = vrot.slane %v1790, 5
      %v1793 = vsel %vm1443, %v1788, %v1792
      %v1794 = vshrl.u32 %v1430, 16
      %v1796 = vrot.slane %v1794, 4
      %v1797 = vor.u32 %v1796, %v1792
      %v1798 = vrot.slane %v1797, 4
      %v1800 = vshll.u32 %v1431, 16
      %v1802 = vrot.slane %v1800, 5
      %v1803 = vsel %vm1443, %v1798, %v1802
      %v1805 = vshrl.u32 %v1432, 16
      %v1807 = vrot.slane %v1805, 4
      %v1808 = vshll.u32 %v1432, 16
      %v1810 = vrot.slane %v1808, 5
      %v1811 = vor.u32 %v1807, %v1810
      %v1812 = vrot.slane %v1811, 4
      %v1814 = vshll.u32 %v1433, 16
      %v1816 = vrot.slane %v1814, 5
      %v1817 = vsel %vm1443, %v1812, %v1816
      %v1818 = vshrl.u32 %v1433, 16
      %v1820 = vrot.slane %v1818, 4
      %v1821 = vor.u32 %v1820, %v1816
      %v1822 = vrot.slane %v1821, 4
      %v1824 = vshll.u32 %v1434, 16
      %v1826 = vrot.slane %v1824, 5
      %v1827 = vsel %vm1443, %v1822, %v1826
      %vm1876 = vcmask 1042432
      %vm1877 = vcmask 1046532
      %vm1878 = vmor %vm1876, %vm1877
      %v1879 = vrot.slane %v1387, 5
      %v1880 = vrot.slane %v1879, 4
      %v1881 = vrot.slane %v1388, 5
      %v1882 = vsel %vm1878, %v1880, %v1881
      %v1883 = vrot.slane %v1881, 4
      %v1884 = vrot.slane %v1389, 5
      %v1885 = vsel %vm1878, %v1883, %v1884
      %v1886 = vrot.slane %v1390, 5
      %v1887 = vrot.slane %v1886, 4
      %v1888 = vrot.slane %v1391, 5
      %v1889 = vsel %vm1878, %v1887, %v1888
      %v1890 = vrot.slane %v1888, 4
      %v1891 = vrot.slane %v1392, 5
      %v1892 = vsel %vm1878, %v1890, %v1891
      %v1893 = vrot.slane %v1393, 5
      %v1894 = vrot.slane %v1893, 4
      %v1895 = vrot.slane %v1394, 5
      %v1896 = vsel %vm1878, %v1894, %v1895
      %v1897 = vrot.slane %v1895, 4
      %v1898 = vrot.slane %v1395, 5
      %v1899 = vsel %vm1878, %v1897, %v1898
      %v1900 = vrot.slane %v1396, 5
      %v1901 = vrot.slane %v1900, 4
      %v1902 = vrot.slane %v1397, 5
      %v1903 = vsel %vm1878, %v1901, %v1902
      %v1904 = vrot.slane %v1902, 4
      %v1905 = vrot.slane %v1398, 5
      %v1906 = vsel %vm1878, %v1904, %v1905
      %v1907 = vrot.slane %v1399, 5
      %v1908 = vrot.slane %v1907, 4
      %v1909 = vrot.slane %v1400, 5
      %v1910 = vsel %vm1878, %v1908, %v1909
      %v1911 = vrot.slane %v1909, 4
      %v1912 = vrot.slane %v1401, 5
      %v1913 = vsel %vm1878, %v1911, %v1912
      %v1914 = vrot.slane %v1402, 5
      %v1915 = vrot.slane %v1914, 4
      %v1916 = vrot.slane %v1403, 5
      %v1917 = vsel %vm1878, %v1915, %v1916
      %v1918 = vrot.slane %v1916, 4
      %v1919 = vrot.slane %v1404, 5
      %v1920 = vsel %vm1878, %v1918, %v1919
      %v1921 = vrot.slane %v1405, 5
      %v1922 = vrot.slane %v1921, 4
      %v1923 = vrot.slane %v1406, 5
      %v1924 = vsel %vm1878, %v1922, %v1923
      %v1925 = vrot.slane %v1923, 4
      %v1926 = vrot.slane %v1407, 5
      %v1927 = vsel %vm1878, %v1925, %v1926
      %v1928 = vrot.slane %v1408, 5
      %v1929 = vrot.slane %v1928, 4
      %v1930 = vrot.slane %v1409, 5
      %v1931 = vsel %vm1878, %v1929, %v1930
      %v1932 = vrot.slane %v1930, 4
      %v1933 = vrot.slane %v1410, 5
      %v1934 = vsel %vm1878, %v1932, %v1933
      %v1935 = vrot.slane %v1411, 5
      %v1936 = vrot.slane %v1935, 4
      %v1937 = vrot.slane %v1412, 5
      %v1938 = vsel %vm1878, %v1936, %v1937
      %v1939 = vrot.slane %v1937, 4
      %v1940 = vrot.slane %v1413, 5
      %v1941 = vsel %vm1878, %v1939, %v1940
      %v1942 = vrot.slane %v1414, 5
      %v1943 = vrot.slane %v1942, 4
      %v1944 = vrot.slane %v1415, 5
      %v1945 = vsel %vm1878, %v1943, %v1944
      %v1946 = vrot.slane %v1944, 4
      %v1947 = vrot.slane %v1416, 5
      %v1948 = vsel %vm1878, %v1946, %v1947
      %v1949 = vrot.slane %v1417, 5
      %v1950 = vrot.slane %v1949, 4
      %v1951 = vrot.slane %v1418, 5
      %v1952 = vsel %vm1878, %v1950, %v1951
      %v1953 = vrot.slane %v1951, 4
      %v1954 = vrot.slane %v1419, 5
      %v1955 = vsel %vm1878, %v1953, %v1954
      %v1956 = vrot.slane %v1420, 5
      %v1957 = vrot.slane %v1956, 4
      %v1958 = vrot.slane %v1421, 5
      %v1959 = vsel %vm1878, %v1957, %v1958
      %v1960 = vrot.slane %v1958, 4
      %v1961 = vrot.slane %v1422, 5
      %v1962 = vsel %vm1878, %v1960, %v1961
      %v1963 = vrot.slane %v1423, 5
      %v1964 = vrot.slane %v1963, 4
      %v1965 = vrot.slane %v1424, 5
      %v1966 = vsel %vm1878, %v1964, %v1965
      %v1967 = vrot.slane %v1965, 4
      %v1968 = vrot.slane %v1425, 5
      %v1969 = vsel %vm1878, %v1967, %v1968
      %v1970 = vrot.slane %v1426, 5
      %v1971 = vrot.slane %v1970, 4
      %v1972 = vrot.slane %v1427, 5
      %v1973 = vsel %vm1878, %v1971, %v1972
      %v1974 = vrot.slane %v1972, 4
      %v1975 = vrot.slane %v1428, 5
      %v1976 = vsel %vm1878, %v1974, %v1975
      %v1977 = vrot.slane %v1429, 5
      %v1978 = vrot.slane %v1977, 4
      %v1979 = vrot.slane %v1430, 5
      %v1980 = vsel %vm1878, %v1978, %v1979
      %v1981 = vrot.slane %v1979, 4
      %v1982 = vrot.slane %v1431, 5
      %v1983 = vsel %vm1878, %v1981, %v1982
      %v1984 = vrot.slane %v1432, 5
      %v1985 = vrot.slane %v1984, 4
      %v1986 = vrot.slane %v1433, 5
      %v1987 = vsel %vm1878, %v1985, %v1986
      %v1988 = vrot.slane %v1986, 4
      %v1989 = vrot.slane %v1434, 5
      %v1990 = vsel %vm1878, %v1988, %v1989
      %v1992 = vshrl.u32 %v1435, 16
      %v1994 = vrot.slane %v1992, 4
      %v1995 = vshll.u32 %v1435, 16
      %v1997 = vrot.slane %v1995, 5
      %v1998 = vor.u32 %v1994, %v1997
      %v1999 = vrot.slane %v1998, 4
      %v2001 = vshll.u32 %v1436, 16
      %v2003 = vrot.slane %v2001, 5
      %v2004 = vsel %vm1443, %v1999, %v2003
      %v2005 = vshrl.u32 %v1436, 16
      %v2007 = vrot.slane %v2005, 4
      %v2008 = vor.u32 %v2007, %v2003
      %v2009 = vrot.slane %v2008, 4
      %v2011 = vshll.u32 %v1437, 16
      %v2013 = vrot.slane %v2011, 5
      %v2014 = vsel %vm1443, %v2009, %v2013
      %v2018 = vrot.slane %v1435, 5
      %v2019 = vrot.slane %v2018, 4
      %v2020 = vrot.slane %v1436, 5
      %v2021 = vsel %vm1878, %v2019, %v2020
      %v2022 = vrot.slane %v2020, 4
      %v2023 = vrot.slane %v1437, 5
      %v2024 = vsel %vm1878, %v2022, %v2023
      %v2026 = vshrl.u32 %v1438, 16
      %v2028 = vrot.slane %v2026, 4
      %v2029 = vshll.u32 %v1438, 16
      %v2031 = vrot.slane %v2029, 5
      %v2032 = vor.u32 %v2028, %v2031
      %v2033 = vrot.slane %v2032, 4
      %v2035 = vshll.u32 %v1439, 16
      %v2037 = vrot.slane %v2035, 5
      %v2038 = vsel %vm1443, %v2033, %v2037
      %v2039 = vshrl.u32 %v1439, 16
      %v2041 = vrot.slane %v2039, 4
      %v2042 = vor.u32 %v2041, %v2037
      %v2043 = vrot.slane %v2042, 4
      %v2045 = vshll.u32 %v1440, 16
      %v2047 = vrot.slane %v2045, 5
      %v2048 = vsel %vm1443, %v2043, %v2047
      %v2052 = vrot.slane %v1438, 5
      %v2053 = vrot.slane %v2052, 4
      %v2054 = vrot.slane %v1439, 5
      %v2055 = vsel %vm1878, %v2053, %v2054
      %v2056 = vrot.slane %v2054, 4
      %v2057 = vrot.slane %v1440, 5
      %v2058 = vsel %vm1878, %v2056, %v2057
      %v2059 = vunpack.c.l.b16 %v1387
      %v2060 = vunpack.c.l.b16 %v1388
      %v2061 = vunpack.c.l.b16 %v1390
      %v2062 = vunpack.c.l.b16 %v1391
      %v2063 = vunpack.c.l.b16 %v1393
      %v2064 = vunpack.c.l.b16 %v1394
      %v2065 = vunpack.c.l.b16 %v1396
      %v2066 = vunpack.c.l.b16 %v1397
      %v2067 = vunpack.c.l.b16 %v1399
      %v2068 = vunpack.c.l.b16 %v1400
      %v2069 = vunpack.c.l.b16 %v1402
      %v2070 = vunpack.c.l.b16 %v1403
      %v2071 = vunpack.c.l.b16 %v1405
      %v2072 = vunpack.c.l.b16 %v1406
      %v2073 = vunpack.c.l.b16 %v1408
      %v2074 = vunpack.c.l.b16 %v1409
      %v2075 = vunpack.c.l.b16 %v1411
      %v2076 = vunpack.c.l.b16 %v1412
      %v2077 = vunpack.c.l.b16 %v1414
      %v2078 = vunpack.c.l.b16 %v1415
      %v2079 = vunpack.c.l.b16 %v1417
      %v2080 = vunpack.c.l.b16 %v1418
      %v2081 = vunpack.c.l.b16 %v1420
      %v2082 = vunpack.c.l.b16 %v1421
      %v2083 = vunpack.c.l.b16 %v1423
      %v2084 = vunpack.c.l.b16 %v1424
      %v2085 = vunpack.c.l.b16 %v1426
      %v2086 = vunpack.c.l.b16 %v1427
      %v2087 = vunpack.c.l.b16 %v1429
      %v2088 = vunpack.c.l.b16 %v1430
      %v2089 = vunpack.c.l.b16 %v1432
      %v2090 = vunpack.c.l.b16 %v1433
      %v2091 = vpack.c.b16 %v2060, %v2059
      %v2092 = vpack.c.b16 %v2062, %v2061
      %v2093 = vpack.c.b16 %v2064, %v2063
      %v2094 = vpack.c.b16 %v2066, %v2065
      %v2095 = vpack.c.b16 %v2068, %v2067
      %v2096 = vpack.c.b16 %v2070, %v2069
      %v2097 = vpack.c.b16 %v2072, %v2071
      %v2098 = vpack.c.b16 %v2074, %v2073
      %v2099 = vpack.c.b16 %v2076, %v2075
      %v2100 = vpack.c.b16 %v2078, %v2077
      %v2101 = vpack.c.b16 %v2080, %v2079
      %v2102 = vpack.c.b16 %v2082, %v2081
      %v2103 = vpack.c.b16 %v2084, %v2083
      %v2104 = vpack.c.b16 %v2086, %v2085
      %v2105 = vpack.c.b16 %v2088, %v2087
      %v2106 = vpack.c.b16 %v2090, %v2089
      %v2107 = vunpack.c.l.b16 %v1457
      %v2108 = vunpack.c.l.b16 %v1467
      %v2109 = vunpack.c.l.b16 %v1481
      %v2110 = vunpack.c.l.b16 %v1491
      %v2111 = vunpack.c.l.b16 %v1505
      %v2112 = vunpack.c.l.b16 %v1515
      %v2113 = vunpack.c.l.b16 %v1529
      %v2114 = vunpack.c.l.b16 %v1539
      %v2115 = vunpack.c.l.b16 %v1553
      %v2116 = vunpack.c.l.b16 %v1563
      %v2117 = vunpack.c.l.b16 %v1577
      %v2118 = vunpack.c.l.b16 %v1587
      %v2119 = vunpack.c.l.b16 %v1601
      %v2120 = vunpack.c.l.b16 %v1611
      %v2121 = vunpack.c.l.b16 %v1625
      %v2122 = vunpack.c.l.b16 %v1635
      %v2123 = vunpack.c.l.b16 %v1649
      %v2124 = vunpack.c.l.b16 %v1659
      %v2125 = vunpack.c.l.b16 %v1673
      %v2126 = vunpack.c.l.b16 %v1683
      %v2127 = vunpack.c.l.b16 %v1697
      %v2128 = vunpack.c.l.b16 %v1707
      %v2129 = vunpack.c.l.b16 %v1721
      %v2130 = vunpack.c.l.b16 %v1731
      %v2131 = vunpack.c.l.b16 %v1745
      %v2132 = vunpack.c.l.b16 %v1755
      %v2133 = vunpack.c.l.b16 %v1769
      %v2134 = vunpack.c.l.b16 %v1779
      %v2135 = vunpack.c.l.b16 %v1793
      %v2136 = vunpack.c.l.b16 %v1803
      %v2137 = vunpack.c.l.b16 %v1817
      %v2138 = vunpack.c.l.b16 %v1827
      %v2139 = vpack.c.b16 %v2108, %v2107
      %v2140 = vpack.c.b16 %v2110, %v2109
      %v2141 = vpack.c.b16 %v2112, %v2111
      %v2142 = vpack.c.b16 %v2114, %v2113
      %v2143 = vpack.c.b16 %v2116, %v2115
      %v2144 = vpack.c.b16 %v2118, %v2117
      %v2145 = vpack.c.b16 %v2120, %v2119
      %v2146 = vpack.c.b16 %v2122, %v2121
      %v2147 = vpack.c.b16 %v2124, %v2123
      %v2148 = vpack.c.b16 %v2126, %v2125
      %v2149 = vpack.c.b16 %v2128, %v2127
      %v2150 = vpack.c.b16 %v2130, %v2129
      %v2151 = vpack.c.b16 %v2132, %v2131
      %v2152 = vpack.c.b16 %v2134, %v2133
      %v2153 = vpack.c.b16 %v2136, %v2135
      %v2154 = vpack.c.b16 %v2138, %v2137
      %2155 = vrot.lane.b32.xlu0 %v2139, 16
      %v2156 = vpop.permute.xlu0 %2155
      %2157 = vrot.lane.b32.xlu0 %v2140, 16
      %v2158 = vpop.permute.xlu0 %2157
      %2159 = vrot.lane.b32.xlu0 %v2141, 16
      %v2160 = vpop.permute.xlu0 %2159
      %2161 = vrot.lane.b32.xlu0 %v2142, 16
      %v2162 = vpop.permute.xlu0 %2161
      %2163 = vrot.lane.b32.xlu0 %v2143, 16
      %v2164 = vpop.permute.xlu0 %2163
      %2165 = vrot.lane.b32.xlu0 %v2144, 16
      %v2166 = vpop.permute.xlu0 %2165
      %2167 = vrot.lane.b32.xlu0 %v2145, 16
      %v2168 = vpop.permute.xlu0 %2167
      %2169 = vrot.lane.b32.xlu0 %v2146, 16
      %v2170 = vpop.permute.xlu0 %2169
      %2171 = vrot.lane.b32.xlu0 %v2147, 16
      %v2172 = vpop.permute.xlu0 %2171
      %2173 = vrot.lane.b32.xlu0 %v2148, 16
      %v2174 = vpop.permute.xlu0 %2173
      %2175 = vrot.lane.b32.xlu0 %v2149, 16
      %v2176 = vpop.permute.xlu0 %2175
      %2177 = vrot.lane.b32.xlu0 %v2150, 16
      %v2178 = vpop.permute.xlu0 %2177
      %2179 = vrot.lane.b32.xlu0 %v2151, 16
      %v2180 = vpop.permute.xlu0 %2179
      %2181 = vrot.lane.b32.xlu0 %v2152, 16
      %v2182 = vpop.permute.xlu0 %2181
      %2183 = vrot.lane.b32.xlu0 %v2153, 16
      %v2184 = vpop.permute.xlu0 %2183
      %2185 = vrot.lane.b32.xlu0 %v2154, 16
      %v2186 = vpop.permute.xlu0 %2185
      %v2187 = vunpack.c.l.b16 %v1882
      %v2188 = vunpack.c.l.b16 %v1885
      %v2189 = vunpack.c.l.b16 %v1889
      %v2190 = vunpack.c.l.b16 %v1892
      %v2191 = vunpack.c.l.b16 %v1896
      %v2192 = vunpack.c.l.b16 %v1899
      %v2193 = vunpack.c.l.b16 %v1903
      %v2194 = vunpack.c.l.b16 %v1906
      %v2195 = vunpack.c.l.b16 %v1910
      %v2196 = vunpack.c.l.b16 %v1913
      %v2197 = vunpack.c.l.b16 %v1917
      %v2198 = vunpack.c.l.b16 %v1920
      %v2199 = vunpack.c.l.b16 %v1924
      %v2200 = vunpack.c.l.b16 %v1927
      %v2201 = vunpack.c.l.b16 %v1931
      %v2202 = vunpack.c.l.b16 %v1934
      %v2203 = vunpack.c.l.b16 %v1938
      %v2204 = vunpack.c.l.b16 %v1941
      %v2205 = vunpack.c.l.b16 %v1945
      %v2206 = vunpack.c.l.b16 %v1948
      %v2207 = vunpack.c.l.b16 %v1952
      %v2208 = vunpack.c.l.b16 %v1955
      %v2209 = vunpack.c.l.b16 %v1959
      %v2210 = vunpack.c.l.b16 %v1962
      %v2211 = vunpack.c.l.b16 %v1966
      %v2212 = vunpack.c.l.b16 %v1969
      %v2213 = vunpack.c.l.b16 %v1973
      %v2214 = vunpack.c.l.b16 %v1976
      %v2215 = vunpack.c.l.b16 %v1980
      %v2216 = vunpack.c.l.b16 %v1983
      %v2217 = vunpack.c.l.b16 %v1987
      %v2218 = vunpack.c.l.b16 %v1990
      %v2219 = vpack.c.b16 %v2188, %v2187
      %v2220 = vpack.c.b16 %v2190, %v2189
      %v2221 = vpack.c.b16 %v2192, %v2191
      %v2222 = vpack.c.b16 %v2194, %v2193
      %v2223 = vpack.c.b16 %v2196, %v2195
      %v2224 = vpack.c.b16 %v2198, %v2197
      %v2225 = vpack.c.b16 %v2200, %v2199
      %v2226 = vpack.c.b16 %v2202, %v2201
      %v2227 = vpack.c.b16 %v2204, %v2203
      %v2228 = vpack.c.b16 %v2206, %v2205
      %v2229 = vpack.c.b16 %v2208, %v2207
      %v2230 = vpack.c.b16 %v2210, %v2209
      %v2231 = vpack.c.b16 %v2212, %v2211
      %v2232 = vpack.c.b16 %v2214, %v2213
      %v2233 = vpack.c.b16 %v2216, %v2215
      %v2234 = vpack.c.b16 %v2218, %v2217
      %2235 = vrot.lane.b32.xlu0 %v2219, 32
      %v2236 = vpop.permute.xlu0 %2235
      %2237 = vrot.lane.b32.xlu0 %v2220, 32
      %v2238 = vpop.permute.xlu0 %2237
      %2239 = vrot.lane.b32.xlu0 %v2221, 32
      %v2240 = vpop.permute.xlu0 %2239
      %2241 = vrot.lane.b32.xlu0 %v2222, 32
      %v2242 = vpop.permute.xlu0 %2241
      %2243 = vrot.lane.b32.xlu0 %v2223, 32
      %v2244 = vpop.permute.xlu0 %2243
      %2245 = vrot.lane.b32.xlu0 %v2224, 32
      %v2246 = vpop.permute.xlu0 %2245
      %2247 = vrot.lane.b32.xlu0 %v2225, 32
      %v2248 = vpop.permute.xlu0 %2247
      %2249 = vrot.lane.b32.xlu0 %v2226, 32
      %v2250 = vpop.permute.xlu0 %2249
      %2251 = vrot.lane.b32.xlu0 %v2227, 32
      %v2252 = vpop.permute.xlu0 %2251
      %2253 = vrot.lane.b32.xlu0 %v2228, 32
      %v2254 = vpop.permute.xlu0 %2253
      %2255 = vrot.lane.b32.xlu0 %v2229, 32
      %v2256 = vpop.permute.xlu0 %2255
      %2257 = vrot.lane.b32.xlu0 %v2230, 32
      %v2258 = vpop.permute.xlu0 %2257
      %2259 = vrot.lane.b32.xlu0 %v2231, 32
      %v2260 = vpop.permute.xlu0 %2259
      %2261 = vrot.lane.b32.xlu0 %v2232, 32
      %v2262 = vpop.permute.xlu0 %2261
      %2263 = vrot.lane.b32.xlu0 %v2233, 32
      %v2264 = vpop.permute.xlu0 %2263
      %2265 = vrot.lane.b32.xlu0 %v2234, 32
      %v2266 = vpop.permute.xlu0 %2265
      %v2267 = vunpack.c.l.b16 %v1435
      %v2268 = vunpack.c.l.b16 %v1436
      %v2269 = vpack.c.b16 %v2268, %v2267
      %2270 = vrot.lane.b32.xlu0 %v2092, 48
      %v2271 = vpop.permute.xlu0 %2270
      %2272 = vrot.lane.b32.xlu0 %v2093, 48
      %v2273 = vpop.permute.xlu0 %2272
      %2274 = vrot.lane.b32.xlu0 %v2094, 48
      %v2275 = vpop.permute.xlu0 %2274
      %2276 = vrot.lane.b32.xlu0 %v2095, 48
      %v2277 = vpop.permute.xlu0 %2276
      %2278 = vrot.lane.b32.xlu0 %v2096, 48
      %v2279 = vpop.permute.xlu0 %2278
      %2280 = vrot.lane.b32.xlu0 %v2097, 48
      %v2281 = vpop.permute.xlu0 %2280
      %2282 = vrot.lane.b32.xlu0 %v2098, 48
      %v2283 = vpop.permute.xlu0 %2282
      %2284 = vrot.lane.b32.xlu0 %v2099, 48
      %v2285 = vpop.permute.xlu0 %2284
      %2286 = vrot.lane.b32.xlu0 %v2100, 48
      %v2287 = vpop.permute.xlu0 %2286
      %2288 = vrot.lane.b32.xlu0 %v2101, 48
      %v2289 = vpop.permute.xlu0 %2288
      %2290 = vrot.lane.b32.xlu0 %v2102, 48
      %v2291 = vpop.permute.xlu0 %2290
      %2292 = vrot.lane.b32.xlu0 %v2103, 48
      %v2293 = vpop.permute.xlu0 %2292
      %2294 = vrot.lane.b32.xlu0 %v2104, 48
      %v2295 = vpop.permute.xlu0 %2294
      %2296 = vrot.lane.b32.xlu0 %v2105, 48
      %v2297 = vpop.permute.xlu0 %2296
      %2298 = vrot.lane.b32.xlu0 %v2106, 48
      %v2299 = vpop.permute.xlu0 %2298
      %2300 = vrot.lane.b32.xlu0 %v2269, 48
      %v2301 = vpop.permute.xlu0 %2300
      %v2302 = vunpack.c.l.b16 %v2004
      %v2303 = vunpack.c.l.b16 %v2014
      %v2304 = vpack.c.b16 %v2303, %v2302
      %2305 = vrot.lane.b32.xlu0 %v2140, 64
      %v2306 = vpop.permute.xlu0 %2305
      %2307 = vrot.lane.b32.xlu0 %v2141, 64
      %v2308 = vpop.permute.xlu0 %2307
      %2309 = vrot.lane.b32.xlu0 %v2142, 64
      %v2310 = vpop.permute.xlu0 %2309
      %2311 = vrot.lane.b32.xlu0 %v2143, 64
      %v2312 = vpop.permute.xlu0 %2311
      %2313 = vrot.lane.b32.xlu0 %v2144, 64
      %v2314 = vpop.permute.xlu0 %2313
      %2315 = vrot.lane.b32.xlu0 %v2145, 64
      %v2316 = vpop.permute.xlu0 %2315
      %2317 = vrot.lane.b32.xlu0 %v2146, 64
      %v2318 = vpop.permute.xlu0 %2317
      %2319 = vrot.lane.b32.xlu0 %v2147, 64
      %v2320 = vpop.permute.xlu0 %2319
      %2321 = vrot.lane.b32.xlu0 %v2148, 64
      %v2322 = vpop.permute.xlu0 %2321
      %2323 = vrot.lane.b32.xlu0 %v2149, 64
      %v2324 = vpop.permute.xlu0 %2323
      %2325 = vrot.lane.b32.xlu0 %v2150, 64
      %v2326 = vpop.permute.xlu0 %2325
      %2327 = vrot.lane.b32.xlu0 %v2151, 64
      %v2328 = vpop.permute.xlu0 %2327
      %2329 = vrot.lane.b32.xlu0 %v2152, 64
      %v2330 = vpop.permute.xlu0 %2329
      %2331 = vrot.lane.b32.xlu0 %v2153, 64
      %v2332 = vpop.permute.xlu0 %2331
      %2333 = vrot.lane.b32.xlu0 %v2154, 64
      %v2334 = vpop.permute.xlu0 %2333
      %2335 = vrot.lane.b32.xlu0 %v2304, 64
      %v2336 = vpop.permute.xlu0 %2335
      %v2337 = vunpack.c.l.b16 %v2021
      %v2338 = vunpack.c.l.b16 %v2024
      %v2339 = vpack.c.b16 %v2338, %v2337
      %2340 = vrot.lane.b32.xlu0 %v2220, 80
      %v2341 = vpop.permute.xlu0 %2340
      %2342 = vrot.lane.b32.xlu0 %v2221, 80
      %v2343 = vpop.permute.xlu0 %2342
      %2344 = vrot.lane.b32.xlu0 %v2222, 80
      %v2345 = vpop.permute.xlu0 %2344
      %2346 = vrot.lane.b32.xlu0 %v2223, 80
      %v2347 = vpop.permute.xlu0 %2346
      %2348 = vrot.lane.b32.xlu0 %v2224, 80
      %v2349 = vpop.permute.xlu0 %2348
      %2350 = vrot.lane.b32.xlu0 %v2225, 80
      %v2351 = vpop.permute.xlu0 %2350
      %2352 = vrot.lane.b32.xlu0 %v2226, 80
      %v2353 = vpop.permute.xlu0 %2352
      %2354 = vrot.lane.b32.xlu0 %v2227, 80
      %v2355 = vpop.permute.xlu0 %2354
      %2356 = vrot.lane.b32.xlu0 %v2228, 80
      %v2357 = vpop.permute.xlu0 %2356
      %2358 = vrot.lane.b32.xlu0 %v2229, 80
      %v2359 = vpop.permute.xlu0 %2358
      %2360 = vrot.lane.b32.xlu0 %v2230, 80
      %v2361 = vpop.permute.xlu0 %2360
      %2362 = vrot.lane.b32.xlu0 %v2231, 80
      %v2363 = vpop.permute.xlu0 %2362
      %2364 = vrot.lane.b32.xlu0 %v2232, 80
      %v2365 = vpop.permute.xlu0 %2364
      %2366 = vrot.lane.b32.xlu0 %v2233, 80
      %v2367 = vpop.permute.xlu0 %2366
      %2368 = vrot.lane.b32.xlu0 %v2234, 80
      %v2369 = vpop.permute.xlu0 %2368
      %2370 = vrot.lane.b32.xlu0 %v2339, 80
      %v2371 = vpop.permute.xlu0 %2370
      %v2372 = vunpack.c.l.b16 %v1438
      %v2373 = vunpack.c.l.b16 %v1439
      %v2374 = vpack.c.b16 %v2373, %v2372
      %2375 = vrot.lane.b32.xlu0 %v2093, 96
      %v2376 = vpop.permute.xlu0 %2375
      %2377 = vrot.lane.b32.xlu0 %v2094, 96
      %v2378 = vpop.permute.xlu0 %2377
      %2379 = vrot.lane.b32.xlu0 %v2095, 96
      %v2380 = vpop.permute.xlu0 %2379
      %2381 = vrot.lane.b32.xlu0 %v2096, 96
      %v2382 = vpop.permute.xlu0 %2381
      %2383 = vrot.lane.b32.xlu0 %v2097, 96
      %v2384 = vpop.permute.xlu0 %2383
      %2385 = vrot.lane.b32.xlu0 %v2098, 96
      %v2386 = vpop.permute.xlu0 %2385
      %2387 = vrot.lane.b32.xlu0 %v2099, 96
      %v2388 = vpop.permute.xlu0 %2387
      %2389 = vrot.lane.b32.xlu0 %v2100, 96
      %v2390 = vpop.permute.xlu0 %2389
      %2391 = vrot.lane.b32.xlu0 %v2101, 96
      %v2392 = vpop.permute.xlu0 %2391
      %2393 = vrot.lane.b32.xlu0 %v2102, 96
      %v2394 = vpop.permute.xlu0 %2393
      %2395 = vrot.lane.b32.xlu0 %v2103, 96
      %v2396 = vpop.permute.xlu0 %2395
      %2397 = vrot.lane.b32.xlu0 %v2104, 96
      %v2398 = vpop.permute.xlu0 %2397
      %2399 = vrot.lane.b32.xlu0 %v2105, 96
      %v2400 = vpop.permute.xlu0 %2399
      %2401 = vrot.lane.b32.xlu0 %v2106, 96
      %v2402 = vpop.permute.xlu0 %2401
      %2403 = vrot.lane.b32.xlu0 %v2269, 96
      %v2404 = vpop.permute.xlu0 %2403
      %2405 = vrot.lane.b32.xlu0 %v2374, 96
      %v2406 = vpop.permute.xlu0 %2405
      %v2407 = vunpack.c.l.b16 %v2038
      %v2408 = vunpack.c.l.b16 %v2048
      %v2409 = vpack.c.b16 %v2408, %v2407
      %2410 = vrot.lane.b32.xlu0 %v2141, 112
      %v2411 = vpop.permute.xlu0 %2410
      %2412 = vrot.lane.b32.xlu0 %v2142, 112
      %v2413 = vpop.permute.xlu0 %2412
      %2414 = vrot.lane.b32.xlu0 %v2143, 112
      %v2415 = vpop.permute.xlu0 %2414
      %2416 = vrot.lane.b32.xlu0 %v2144, 112
      %v2417 = vpop.permute.xlu0 %2416
      %2418 = vrot.lane.b32.xlu0 %v2145, 112
      %v2419 = vpop.permute.xlu0 %2418
      %2420 = vrot.lane.b32.xlu0 %v2146, 112
      %v2421 = vpop.permute.xlu0 %2420
      %2422 = vrot.lane.b32.xlu0 %v2147, 112
      %v2423 = vpop.permute.xlu0 %2422
      %2424 = vrot.lane.b32.xlu0 %v2148, 112
      %v2425 = vpop.permute.xlu0 %2424
      %2426 = vrot.lane.b32.xlu0 %v2149, 112
      %v2427 = vpop.permute.xlu0 %2426
      %2428 = vrot.lane.b32.xlu0 %v2150, 112
      %v2429 = vpop.permute.xlu0 %2428
      %2430 = vrot.lane.b32.xlu0 %v2151, 112
      %v2431 = vpop.permute.xlu0 %2430
      %2432 = vrot.lane.b32.xlu0 %v2152, 112
      %v2433 = vpop.permute.xlu0 %2432
      %2434 = vrot.lane.b32.xlu0 %v2153, 112
      %v2435 = vpop.permute.xlu0 %2434
      %2436 = vrot.lane.b32.xlu0 %v2154, 112
      %v2437 = vpop.permute.xlu0 %2436
      %2438 = vrot.lane.b32.xlu0 %v2304, 112
      %v2439 = vpop.permute.xlu0 %2438
      %2440 = vrot.lane.b32.xlu0 %v2409, 112
      %v2441 = vpop.permute.xlu0 %2440
      %v2442 = vunpack.c.l.b16 %v2055
      %v2443 = vunpack.c.l.b16 %v2058
      %v2444 = vpack.c.b16 %v2443, %v2442
      %v2447 = vsel %vm528, %v2091, %v2156
      %v2450 = vsel %vm528, %v2092, %v2158
      %v2453 = vsel %vm528, %v2093, %v2160
      %v2456 = vsel %vm528, %v2094, %v2162
      %v2459 = vsel %vm528, %v2095, %v2164
      %v2462 = vsel %vm528, %v2096, %v2166
      %v2465 = vsel %vm528, %v2097, %v2168
      %v2468 = vsel %vm528, %v2098, %v2170
      %v2471 = vsel %vm528, %v2099, %v2172
      %v2474 = vsel %vm528, %v2100, %v2174
      %v2477 = vsel %vm528, %v2101, %v2176
      %v2480 = vsel %vm528, %v2102, %v2178
      %v2483 = vsel %vm528, %v2103, %v2180
      %v2486 = vsel %vm528, %v2104, %v2182
      %v2489 = vsel %vm528, %v2105, %v2184
      %v2492 = vsel %vm528, %v2106, %v2186
      %vm2493 = vcmask 261120
      %v2495 = vsel %vm2493, %v2447, %v2236
      %v2497 = vsel %vm2493, %v2450, %v2238
      %v2499 = vsel %vm2493, %v2453, %v2240
      %v2501 = vsel %vm2493, %v2456, %v2242
      %v2503 = vsel %vm2493, %v2459, %v2244
      %v2505 = vsel %vm2493, %v2462, %v2246
      %v2507 = vsel %vm2493, %v2465, %v2248
      %v2509 = vsel %vm2493, %v2468, %v2250
      %v2511 = vsel %vm2493, %v2471, %v2252
      %v2513 = vsel %vm2493, %v2474, %v2254
      %v2515 = vsel %vm2493, %v2477, %v2256
      %v2517 = vsel %vm2493, %v2480, %v2258
      %v2519 = vsel %vm2493, %v2483, %v2260
      %v2521 = vsel %vm2493, %v2486, %v2262
      %v2523 = vsel %vm2493, %v2489, %v2264
      %v2525 = vsel %vm2493, %v2492, %v2266
      %vm2526 = vcmask 392192
      %v2528 = vsel %vm2526, %v2495, %v2271
      %v2530 = vsel %vm2526, %v2497, %v2273
      %v2532 = vsel %vm2526, %v2499, %v2275
      %v2534 = vsel %vm2526, %v2501, %v2277
      %v2536 = vsel %vm2526, %v2503, %v2279
      %v2538 = vsel %vm2526, %v2505, %v2281
      %v2540 = vsel %vm2526, %v2507, %v2283
      %v2542 = vsel %vm2526, %v2509, %v2285
      %v2544 = vsel %vm2526, %v2511, %v2287
      %v2546 = vsel %vm2526, %v2513, %v2289
      %v2548 = vsel %vm2526, %v2515, %v2291
      %v2550 = vsel %vm2526, %v2517, %v2293
      %v2552 = vsel %vm2526, %v2519, %v2295
      %v2554 = vsel %vm2526, %v2521, %v2297
      %v2556 = vsel %vm2526, %v2523, %v2299
      %v2558 = vsel %vm2526, %v2525, %v2301
      %vm2559 = vcmask 523264
      %v2561 = vsel %vm2559, %v2528, %v2306
      %v2563 = vsel %vm2559, %v2530, %v2308
      %v2565 = vsel %vm2559, %v2532, %v2310
      %v2567 = vsel %vm2559, %v2534, %v2312
      %v2569 = vsel %vm2559, %v2536, %v2314
      %v2571 = vsel %vm2559, %v2538, %v2316
      %v2573 = vsel %vm2559, %v2540, %v2318
      %v2575 = vsel %vm2559, %v2542, %v2320
      %v2577 = vsel %vm2559, %v2544, %v2322
      %v2579 = vsel %vm2559, %v2546, %v2324
      %v2581 = vsel %vm2559, %v2548, %v2326
      %v2583 = vsel %vm2559, %v2550, %v2328
      %v2585 = vsel %vm2559, %v2552, %v2330
      %v2587 = vsel %vm2559, %v2554, %v2332
      %v2589 = vsel %vm2559, %v2556, %v2334
      %v2591 = vsel %vm2559, %v2558, %v2336
      %vm2592 = vcmask 654336
      %v2594 = vsel %vm2592, %v2561, %v2341
      %v2596 = vsel %vm2592, %v2563, %v2343
      %v2598 = vsel %vm2592, %v2565, %v2345
      %v2600 = vsel %vm2592, %v2567, %v2347
      %v2602 = vsel %vm2592, %v2569, %v2349
      %v2604 = vsel %vm2592, %v2571, %v2351
      %v2606 = vsel %vm2592, %v2573, %v2353
      %v2608 = vsel %vm2592, %v2575, %v2355
      %v2610 = vsel %vm2592, %v2577, %v2357
      %v2612 = vsel %vm2592, %v2579, %v2359
      %v2614 = vsel %vm2592, %v2581, %v2361
      %v2616 = vsel %vm2592, %v2583, %v2363
      %v2618 = vsel %vm2592, %v2585, %v2365
      %v2620 = vsel %vm2592, %v2587, %v2367
      %v2622 = vsel %vm2592, %v2589, %v2369
      %v2624 = vsel %vm2592, %v2591, %v2371
      %vm2625 = vcmask 785408
      %v2627 = vsel %vm2625, %v2594, %v2376
      %v2629 = vsel %vm2625, %v2596, %v2378
      %v2631 = vsel %vm2625, %v2598, %v2380
      %v2633 = vsel %vm2625, %v2600, %v2382
      %v2635 = vsel %vm2625, %v2602, %v2384
      %v2637 = vsel %vm2625, %v2604, %v2386
      %v2639 = vsel %vm2625, %v2606, %v2388
      %v2641 = vsel %vm2625, %v2608, %v2390
      %v2643 = vsel %vm2625, %v2610, %v2392
      %v2645 = vsel %vm2625, %v2612, %v2394
      %v2647 = vsel %vm2625, %v2614, %v2396
      %v2649 = vsel %vm2625, %v2616, %v2398
      %v2651 = vsel %vm2625, %v2618, %v2400
      %v2653 = vsel %vm2625, %v2620, %v2402
      %v2655 = vsel %vm2625, %v2622, %v2404
      %v2657 = vsel %vm2625, %v2624, %v2406
      %vm2658 = vcmask 916480
      %v2660 = vsel %vm2658, %v2627, %v2411
      %v2663 = vsel %vm2658, %v2629, %v2413
      %v2666 = vsel %vm2658, %v2631, %v2415
      %v2669 = vsel %vm2658, %v2633, %v2417
      %v2672 = vsel %vm2658, %v2635, %v2419
      %v2675 = vsel %vm2658, %v2637, %v2421
      %v2678 = vsel %vm2658, %v2639, %v2423
      %v2681 = vsel %vm2658, %v2641, %v2425
      %v2684 = vsel %vm2658, %v2643, %v2427
      %v2687 = vsel %vm2658, %v2645, %v2429
      %v2690 = vsel %vm2658, %v2647, %v2431
      %v2693 = vsel %vm2658, %v2649, %v2433
      %v2696 = vsel %vm2658, %v2651, %v2435
      %v2699 = vsel %vm2658, %v2653, %v2437
      %v2702 = vsel %vm2658, %v2655, %v2439
      %v2705 = vsel %vm2658, %v2657, %v2441
      %v2707 = vld [vmem:[%s1] sm:$0xf]
      %v2708 = vld [vmem:[%s1 + $0x4] sm:$0xf]
      %v2709 = vunpack.c.l.bf16 %v2707
      %v2710 = vunpack.c.l.bf16 %v2708
      %2712 = vrot.lane.b32.xlu0 %v758, 96
      %v2713 = vpop.permute.xlu0 %2712
      %s2714 = vtos %v2713
      %v2715 = vstv %s2714
      %v2717 = vmul.f32 %v2709, %v2715
      %v2718 = vmul.f32 %v2710, %v2715
      %v2719 = vpack.c.bf16 %v2718, %v2717
      %s2720 = scalar_lea.vmem %s1, 8
      %v2721 = vld [vmem:[%s2720] sm:$0xf]
      %v2722 = vld [vmem:[%s2720 + $0x4] sm:$0xf]
      %v2723 = vunpack.c.l.bf16 %v2721
      %v2724 = vunpack.c.l.bf16 %v2722
      %2725 = vrot.lane.b32.xlu0 %v758, 95
      %v2726 = vpop.permute.xlu0 %2725
      %s2727 = vtos %v2726
      %v2728 = vstv %s2727
      %v2730 = vmul.f32 %v2723, %v2728
      %v2731 = vmul.f32 %v2724, %v2728
      %v2732 = vpack.c.bf16 %v2731, %v2730
      %s2733 = scalar_lea.vmem %s1, 16
      %v2734 = vld [vmem:[%s2733] sm:$0xf]
      %v2735 = vld [vmem:[%s2733 + $0x4] sm:$0xf]
      %v2736 = vunpack.c.l.bf16 %v2734
      %v2737 = vunpack.c.l.bf16 %v2735
      %2738 = vrot.lane.b32.xlu0 %v758, 94
      %v2739 = vpop.permute.xlu0 %2738
      %s2740 = vtos %v2739
      %v2741 = vstv %s2740
      %v2743 = vmul.f32 %v2736, %v2741
      %v2744 = vmul.f32 %v2737, %v2741
      %v2745 = vpack.c.bf16 %v2744, %v2743
      %s2746 = scalar_lea.vmem %s1, 24
      %v2747 = vld [vmem:[%s2746] sm:$0xf]
      %v2748 = vld [vmem:[%s2746 + $0x4] sm:$0xf]
      %v2749 = vunpack.c.l.bf16 %v2747
      %v2750 = vunpack.c.l.bf16 %v2748
      %2751 = vrot.lane.b32.xlu0 %v758, 93
      %v2752 = vpop.permute.xlu0 %2751
      %s2753 = vtos %v2752
      %v2754 = vstv %s2753
      %v2756 = vmul.f32 %v2749, %v2754
      %v2757 = vmul.f32 %v2750, %v2754
      %v2758 = vpack.c.bf16 %v2757, %v2756
      %s2759 = scalar_lea.vmem %s1, 32
      %v2760 = vld [vmem:[%s2759] sm:$0xf]
      %v2761 = vld [vmem:[%s2759 + $0x4] sm:$0xf]
      %v2762 = vunpack.c.l.bf16 %v2760
      %v2763 = vunpack.c.l.bf16 %v2761
      %2764 = vrot.lane.b32.xlu0 %v758, 92
      %v2765 = vpop.permute.xlu0 %2764
      %s2766 = vtos %v2765
      %v2767 = vstv %s2766
      %v2769 = vmul.f32 %v2762, %v2767
      %v2770 = vmul.f32 %v2763, %v2767
      %v2771 = vpack.c.bf16 %v2770, %v2769
      %s2772 = scalar_lea.vmem %s1, 40
      %v2773 = vld [vmem:[%s2772] sm:$0xf]
      %v2774 = vld [vmem:[%s2772 + $0x4] sm:$0xf]
      %v2775 = vunpack.c.l.bf16 %v2773
      %v2776 = vunpack.c.l.bf16 %v2774
      %2777 = vrot.lane.b32.xlu0 %v758, 91
      %v2778 = vpop.permute.xlu0 %2777
      %s2779 = vtos %v2778
      %v2780 = vstv %s2779
      %v2782 = vmul.f32 %v2775, %v2780
      %v2783 = vmul.f32 %v2776, %v2780
      %v2784 = vpack.c.bf16 %v2783, %v2782
      %s2785 = scalar_lea.vmem %s1, 48
      %v2786 = vld [vmem:[%s2785] sm:$0xf]
      %v2787 = vld [vmem:[%s2785 + $0x4] sm:$0xf]
      %v2788 = vunpack.c.l.bf16 %v2786
      %v2789 = vunpack.c.l.bf16 %v2787
      %2790 = vrot.lane.b32.xlu0 %v758, 90
      %v2791 = vpop.permute.xlu0 %2790
      %s2792 = vtos %v2791
      %v2793 = vstv %s2792
      %v2795 = vmul.f32 %v2788, %v2793
      %v2796 = vmul.f32 %v2789, %v2793
      %v2797 = vpack.c.bf16 %v2796, %v2795
      %s2798 = scalar_lea.vmem %s1, 56
      %v2799 = vld [vmem:[%s2798] sm:$0xf]
      %v2800 = vld [vmem:[%s2798 + $0x4] sm:$0xf]
      %v2801 = vunpack.c.l.bf16 %v2799
      %v2802 = vunpack.c.l.bf16 %v2800
      %2803 = vrot.lane.b32.xlu0 %v758, 89
      %v2804 = vpop.permute.xlu0 %2803
      %s2805 = vtos %v2804
      %v2806 = vstv %s2805
      %v2808 = vmul.f32 %v2801, %v2806
      %v2809 = vmul.f32 %v2802, %v2806
      %v2810 = vpack.c.bf16 %v2809, %v2808
      %s2811 = scalar_lea.vmem %s1, 64
      %v2812 = vld [vmem:[%s2811] sm:$0xf]
      %v2813 = vld [vmem:[%s2811 + $0x4] sm:$0xf]
      %v2814 = vunpack.c.l.bf16 %v2812
      %v2815 = vunpack.c.l.bf16 %v2813
      %2816 = vrot.lane.b32.xlu0 %v758, 88
      %v2817 = vpop.permute.xlu0 %2816
      %s2818 = vtos %v2817
      %v2819 = vstv %s2818
      %v2821 = vmul.f32 %v2814, %v2819
      %v2822 = vmul.f32 %v2815, %v2819
      %v2823 = vpack.c.bf16 %v2822, %v2821
      %v2825 = vsel %vm528, %v2221, 0
      %v2828 = vsel %vm528, %v2222, 0
      %v2831 = vsel %vm528, %v2223, 0
      %v2834 = vsel %vm528, %v2224, 0
      %v2837 = vsel %vm528, %v2225, 0
      %v2840 = vsel %vm528, %v2226, 0
      %v2843 = vsel %vm528, %v2227, 0
      %v2846 = vsel %vm528, %v2228, 0
      %v2849 = vsel %vm528, %v2229, 0
      %v2852 = vsel %vm528, %v2230, 0
      %v2855 = vsel %vm528, %v2231, 0
      %v2858 = vsel %vm528, %v2232, 0
      %v2861 = vsel %vm528, %v2233, 0
      %v2864 = vsel %vm528, %v2234, 0
      %v2867 = vsel %vm528, %v2339, 0
      %v2870 = vsel %vm528, %v2444, 0
      %2872 = vmatprep.subr.bf16.mxu0 0
      %2873 = vmatpush1.bf16.msra.mxu0 %v2719
      %2874 = vmatprep.subr.bf16.mxu0 0
      %2875 = vmatpush1.bf16.msra.mxu0 %v2732
      %2876 = vmatprep.subr.bf16.mxu0 0
      %2877 = vmatpush1.bf16.msra.mxu0 %v2745
      %2878 = vmatprep.subr.bf16.mxu0 0
      %2879 = vmatpush1.bf16.msra.mxu0 %v2758
      %2880 = vmatprep.subr.bf16.mxu0 0
      %2881 = vmatpush1.bf16.msra.mxu0 %v2771
      %2882 = vmatprep.subr.bf16.mxu0 0
      %2883 = vmatpush1.bf16.msra.mxu0 %v2784
      %2884 = vmatprep.subr.bf16.mxu0 0
      %2885 = vmatpush1.bf16.msra.mxu0 %v2797
      %2886 = vmatprep.subr.bf16.mxu0 0
      %2887 = vmatpush1.bf16.msra.mxu0 %v2810
      %2888 = vmatprep.subr.bf16.mxu0 0
      %2889 = vmatpush1.bf16.msra.mxu0 %v2823
      %2890 = vmatprep.subr.bf16.mxu0 0
      %2891 = vmatpush1.bf16.msra.mxu0 0
      %2892 = vmatprep.subr.bf16.mxu0 0
      %2893 = vmatpush1.bf16.msra.mxu0 0
      %2894 = vmatprep.subr.bf16.mxu0 0
      %2895 = vmatpush1.bf16.msra.mxu0 0
      %2896 = vmatprep.subr.bf16.mxu0 0
      %2897 = vmatpush1.bf16.msra.mxu0 0
      %2898 = vmatprep.subr.bf16.mxu0 0
      %2899 = vmatpush1.bf16.msra.mxu0 0
      %2900 = vmatprep.subr.bf16.mxu0 0
      %2901 = vmatpush1.bf16.msra.mxu0 0
      %2902 = vmatprep.subr.bf16.mxu0 0
      %2903 = vmatpush1.bf16.msra.mxu0 0
      %2904 = vmatprep.mubr.bf16.mxu0 %v2825
      %2905 = vmatmul.mubr.bf16.gmra.mrb[0].mxu0 %v2660
      %v2906 = vpop.f32.mrb[0].mxu0
      %v2907 = vadd.f32 0.0, %v2906
      %v2908 = vpop.f32.mrb[0].mxu0
      %v2909 = vpop.f32.mrb[0].mxu0
      %v2910 = vadd.f32 0.0, %v2909
      %v2911 = vpop.f32.mrb[0].mxu0
      %2912 = vmatprep.mubr.bf16.mxu0 %v2828
      %2913 = vmatmul.mubr.bf16.gmra.mrb[0].mxu0 %v2663
      %v2914 = vpop.f32.mrb[0].mxu0
      %v2915 = vadd.f32 0.0, %v2914
      %v2916 = vpop.f32.mrb[0].mxu0
      %v2917 = vpop.f32.mrb[0].mxu0
      %v2918 = vadd.f32 0.0, %v2917
      %v2919 = vpop.f32.mrb[0].mxu0
      %2920 = vmatprep.mubr.bf16.mxu0 %v2831
      %2921 = vmatmul.mubr.bf16.gmra.mrb[0].mxu0 %v2666
      %v2922 = vpop.f32.mrb[0].mxu0
      %v2923 = vadd.f32 0.0, %v2922
      %v2924 = vpop.f32.mrb[0].mxu0
      %v2925 = vpop.f32.mrb[0].mxu0
      %v2926 = vadd.f32 0.0, %v2925
      %v2927 = vpop.f32.mrb[0].mxu0
      %2928 = vmatprep.mubr.bf16.mxu0 %v2834
      %2929 = vmatmul.mubr.bf16.gmra.mrb[0].mxu0 %v2669
      %v2930 = vpop.f32.mrb[0].mxu0
      %v2931 = vadd.f32 0.0, %v2930
      %v2932 = vpop.f32.mrb[0].mxu0
      %v2933 = vpop.f32.mrb[0].mxu0
      %v2934 = vadd.f32 0.0, %v2933
      %v2935 = vpop.f32.mrb[0].mxu0
      %2936 = vmatprep.mubr.bf16.mxu0 %v2837
      %2937 = vmatmul.mubr.bf16.gmra.mrb[0].mxu0 %v2672
      %v2938 = vpop.f32.mrb[0].mxu0
      %v2939 = vadd.f32 0.0, %v2938
      %v2940 = vpop.f32.mrb[0].mxu0
      %v2941 = vpop.f32.mrb[0].mxu0
      %v2942 = vadd.f32 0.0, %v2941
      %v2943 = vpop.f32.mrb[0].mxu0
      %2944 = vmatprep.mubr.bf16.mxu0 %v2840
      %2945 = vmatmul.mubr.bf16.gmra.mrb[0].mxu0 %v2675
      %v2946 = vpop.f32.mrb[0].mxu0
      %v2947 = vadd.f32 0.0, %v2946
      %v2948 = vpop.f32.mrb[0].mxu0
      %v2949 = vpop.f32.mrb[0].mxu0
      %v2950 = vadd.f32 0.0, %v2949
      %v2951 = vpop.f32.mrb[0].mxu0
      %2952 = vmatprep.mubr.bf16.mxu0 %v2843
      %2953 = vmatmul.mubr.bf16.gmra.mrb[0].mxu0 %v2678
      %v2954 = vpop.f32.mrb[0].mxu0
      %v2955 = vadd.f32 0.0, %v2954
      %v2956 = vpop.f32.mrb[0].mxu0
      %v2957 = vpop.f32.mrb[0].mxu0
      %v2958 = vadd.f32 0.0, %v2957
      %v2959 = vpop.f32.mrb[0].mxu0
      %2960 = vmatprep.mubr.bf16.mxu0 %v2846
      %2961 = vmatmul.mubr.bf16.gmra.mrb[0].mxu0 %v2681
      %v2962 = vpop.f32.mrb[0].mxu0
      %v2963 = vadd.f32 0.0, %v2962
      %v2964 = vpop.f32.mrb[0].mxu0
      %v2965 = vpop.f32.mrb[0].mxu0
      %v2966 = vadd.f32 0.0, %v2965
      %v2967 = vpop.f32.mrb[0].mxu0
      %2968 = vmatprep.mubr.bf16.mxu0 %v2849
      %2969 = vmatmul.mubr.bf16.gmra.mrb[0].mxu0 %v2684
      %v2970 = vpop.f32.mrb[0].mxu0
      %v2971 = vadd.f32 0.0, %v2970
      %v2972 = vpop.f32.mrb[0].mxu0
      %v2973 = vpop.f32.mrb[0].mxu0
      %v2974 = vadd.f32 0.0, %v2973
      %v2975 = vpop.f32.mrb[0].mxu0
      %2976 = vmatprep.mubr.bf16.mxu0 %v2852
      %2977 = vmatmul.mubr.bf16.gmra.mrb[0].mxu0 %v2687
      %v2978 = vpop.f32.mrb[0].mxu0
      %v2979 = vadd.f32 0.0, %v2978
      %v2980 = vpop.f32.mrb[0].mxu0
      %v2981 = vpop.f32.mrb[0].mxu0
      %v2982 = vadd.f32 0.0, %v2981
      %v2983 = vpop.f32.mrb[0].mxu0
      %2984 = vmatprep.mubr.bf16.mxu0 %v2855
      %2985 = vmatmul.mubr.bf16.gmra.mrb[0].mxu0 %v2690
      %v2986 = vpop.f32.mrb[0].mxu0
      %v2987 = vadd.f32 0.0, %v2986
      %v2988 = vpop.f32.mrb[0].mxu0
      %v2989 = vpop.f32.mrb[0].mxu0
      %v2990 = vadd.f32 0.0, %v2989
      %v2991 = vpop.f32.mrb[0].mxu0
      %2992 = vmatprep.mubr.bf16.mxu0 %v2858
      %2993 = vmatmul.mubr.bf16.gmra.mrb[0].mxu0 %v2693
      %v2994 = vpop.f32.mrb[0].mxu0
      %v2995 = vadd.f32 0.0, %v2994
      %v2996 = vpop.f32.mrb[0].mxu0
      %v2997 = vpop.f32.mrb[0].mxu0
      %v2998 = vadd.f32 0.0, %v2997
      %v2999 = vpop.f32.mrb[0].mxu0
      %3000 = vmatprep.mubr.bf16.mxu0 %v2861
      %3001 = vmatmul.mubr.bf16.gmra.mrb[0].mxu0 %v2696
      %v3002 = vpop.f32.mrb[0].mxu0
      %v3003 = vadd.f32 0.0, %v3002
      %v3004 = vpop.f32.mrb[0].mxu0
      %v3005 = vpop.f32.mrb[0].mxu0
      %v3006 = vadd.f32 0.0, %v3005
      %v3007 = vpop.f32.mrb[0].mxu0
      %3008 = vmatprep.mubr.bf16.mxu0 %v2864
      %3009 = vmatmul.mubr.bf16.gmra.mrb[0].mxu0 %v2699
      %v3010 = vpop.f32.mrb[0].mxu0
      %v3011 = vadd.f32 0.0, %v3010
      %v3012 = vpop.f32.mrb[0].mxu0
      %v3013 = vpop.f32.mrb[0].mxu0
      %v3014 = vadd.f32 0.0, %v3013
      %v3015 = vpop.f32.mrb[0].mxu0
      %3016 = vmatprep.mubr.bf16.mxu0 %v2867
      %3017 = vmatmul.mubr.bf16.gmra.mrb[0].mxu0 %v2702
      %v3018 = vpop.f32.mrb[0].mxu0
      %v3019 = vadd.f32 0.0, %v3018
      %v3020 = vpop.f32.mrb[0].mxu0
      %v3021 = vpop.f32.mrb[0].mxu0
      %v3022 = vadd.f32 0.0, %v3021
      %v3023 = vpop.f32.mrb[0].mxu0
      %3024 = vmatprep.mubr.bf16.mxu0 %v2870
      %3025 = vmatmul.mubr.bf16.gmra.mrb[0].mxu0 %v2705
      %v3026 = vpop.f32.mrb[0].mxu0
      %v3027 = vadd.f32 0.0, %v3026
      %v3028 = vpop.f32.mrb[0].mxu0
      %v3029 = vpop.f32.mrb[0].mxu0
      %v3030 = vadd.f32 0.0, %v3029
      %v3031 = vpop.f32.mrb[0].mxu0
      %3032 = vdwg.mxu0
      %v3033 = vld [vmem:[%s6] sm:$0x1]
      %v3035 = vlaneseq
      %v3036 = vshrl.u32 %v3035, 7
      %v3037 = vsub.s32 0, %v3036
      %v3038 = vrot.slane %v3033, %v3037
      %3039 = vrot.lane.b32.xlu0 %v3038, 16
      %v3040 = vpop.permute.xlu0 %3039
      %v3042 = vmul.f32 %v758, %v3040
      %v3043 = vlaneseq
      %v3044 = vshrl.u32 %v3043, 7
      %v3045 = vsub.s32 0, %v3044
      %v3046 = vrot.slane %v3042, %v3045
      %3048 = vrot.lane.b32.xlu0 %v3046, 112
      %v3049 = vpop.permute.xlu0 %3048
      %v3051 = vmul.f32 %v2907, %v3049
      %v3052 = vmul.f32 %v2910, %v3049
      %v3053 = vmul.f32 %v2915, %v3049
      %v3054 = vmul.f32 %v2918, %v3049
      %v3055 = vmul.f32 %v2923, %v3049
      %v3056 = vmul.f32 %v2926, %v3049
      %v3057 = vmul.f32 %v2931, %v3049
      %v3058 = vmul.f32 %v2934, %v3049
      %v3059 = vmul.f32 %v2939, %v3049
      %v3060 = vmul.f32 %v2942, %v3049
      %v3061 = vmul.f32 %v2947, %v3049
      %v3062 = vmul.f32 %v2950, %v3049
      %v3063 = vmul.f32 %v2955, %v3049
      %v3064 = vmul.f32 %v2958, %v3049
      %v3065 = vmul.f32 %v2963, %v3049
      %v3066 = vmul.f32 %v2966, %v3049
      %v3067 = vmul.f32 %v2971, %v3049
      %v3068 = vmul.f32 %v2974, %v3049
      %v3069 = vmul.f32 %v2979, %v3049
      %v3070 = vmul.f32 %v2982, %v3049
      %v3071 = vmul.f32 %v2987, %v3049
      %v3072 = vmul.f32 %v2990, %v3049
      %v3073 = vmul.f32 %v2995, %v3049
      %v3074 = vmul.f32 %v2998, %v3049
      %v3075 = vmul.f32 %v3003, %v3049
      %v3076 = vmul.f32 %v3006, %v3049
      %v3077 = vmul.f32 %v3011, %v3049
      %v3078 = vmul.f32 %v3014, %v3049
      %v3079 = vmul.f32 %v3019, %v3049
      %v3080 = vmul.f32 %v3022, %v3049
      %v3081 = vmul.f32 %v3027, %v3049
      %v3082 = vmul.f32 %v3030, %v3049
      %v3083 = vld [vmem:[%s7] sm:$0x1]
      %v3085 = vlaneseq
      %v3086 = vshrl.u32 %v3085, 7
      %v3087 = vsub.s32 0, %v3086
      %v3088 = vrot.slane %v3083, %v3087
      %v3090 = vadd.f32 %v3051, %v3088
      %v3091 = vadd.f32 %v3052, %v3088
      %v3092 = vadd.f32 %v3053, %v3088
      %v3093 = vadd.f32 %v3054, %v3088
      %v3094 = vadd.f32 %v3055, %v3088
      %v3095 = vadd.f32 %v3056, %v3088
      %v3096 = vadd.f32 %v3057, %v3088
      %v3097 = vadd.f32 %v3058, %v3088
      %v3098 = vadd.f32 %v3059, %v3088
      %v3099 = vadd.f32 %v3060, %v3088
      %v3100 = vadd.f32 %v3061, %v3088
      %v3101 = vadd.f32 %v3062, %v3088
      %v3102 = vadd.f32 %v3063, %v3088
      %v3103 = vadd.f32 %v3064, %v3088
      %v3104 = vadd.f32 %v3065, %v3088
      %v3105 = vadd.f32 %v3066, %v3088
      %v3106 = vadd.f32 %v3067, %v3088
      %v3107 = vadd.f32 %v3068, %v3088
      %v3108 = vadd.f32 %v3069, %v3088
      %v3109 = vadd.f32 %v3070, %v3088
      %v3110 = vadd.f32 %v3071, %v3088
      %v3111 = vadd.f32 %v3072, %v3088
      %v3112 = vadd.f32 %v3073, %v3088
      %v3113 = vadd.f32 %v3074, %v3088
      %v3114 = vadd.f32 %v3075, %v3088
      %v3115 = vadd.f32 %v3076, %v3088
      %v3116 = vadd.f32 %v3077, %v3088
      %v3117 = vadd.f32 %v3078, %v3088
      %v3118 = vadd.f32 %v3079, %v3088
      %v3119 = vadd.f32 %v3080, %v3088
      %v3120 = vadd.f32 %v3081, %v3088
      %v3121 = vadd.f32 %v3082, %v3088
      %v3122 = vmax.f32 %v3090, 0.0
      %v3123 = vmax.f32 %v3091, 0.0
      %v3124 = vmax.f32 %v3092, 0.0
      %v3125 = vmax.f32 %v3093, 0.0
      %v3126 = vmax.f32 %v3094, 0.0
      %v3127 = vmax.f32 %v3095, 0.0
      %v3128 = vmax.f32 %v3096, 0.0
      %v3129 = vmax.f32 %v3097, 0.0
      %v3130 = vmax.f32 %v3098, 0.0
      %v3131 = vmax.f32 %v3099, 0.0
      %v3132 = vmax.f32 %v3100, 0.0
      %v3133 = vmax.f32 %v3101, 0.0
      %v3134 = vmax.f32 %v3102, 0.0
      %v3135 = vmax.f32 %v3103, 0.0
      %v3136 = vmax.f32 %v3104, 0.0
      %v3137 = vmax.f32 %v3105, 0.0
      %v3138 = vmax.f32 %v3106, 0.0
      %v3139 = vmax.f32 %v3107, 0.0
      %v3140 = vmax.f32 %v3108, 0.0
      %v3141 = vmax.f32 %v3109, 0.0
      %v3142 = vmax.f32 %v3110, 0.0
      %v3143 = vmax.f32 %v3111, 0.0
      %v3144 = vmax.f32 %v3112, 0.0
      %v3145 = vmax.f32 %v3113, 0.0
      %v3146 = vmax.f32 %v3114, 0.0
      %v3147 = vmax.f32 %v3115, 0.0
      %v3148 = vmax.f32 %v3116, 0.0
      %v3149 = vmax.f32 %v3117, 0.0
      %v3150 = vmax.f32 %v3118, 0.0
      %v3151 = vmax.f32 %v3119, 0.0
      %v3152 = vmax.f32 %v3120, 0.0
      %v3153 = vmax.f32 %v3121, 0.0
      %v3154 = vsel %vm528, %v3122, 0.0
      %v3155 = vsel %vm528, %v3123, 0.0
      %v3156 = vadd.f32 %v3154, %v3155
      %v3157 = vsel %vm528, %v3124, 0.0
      %v3158 = vadd.f32 %v3156, %v3157
      %v3159 = vsel %vm528, %v3125, 0.0
      %v3160 = vadd.f32 %v3158, %v3159
      %v3161 = vsel %vm528, %v3126, 0.0
      %v3162 = vadd.f32 %v3160, %v3161
      %v3163 = vsel %vm528, %v3127, 0.0
      %v3164 = vadd.f32 %v3162, %v3163
      %v3165 = vsel %vm528, %v3128, 0.0
      %v3166 = vadd.f32 %v3164, %v3165
      %v3167 = vsel %vm528, %v3129, 0.0
      %v3168 = vadd.f32 %v3166, %v3167
      %v3169 = vsel %vm528, %v3130, 0.0
      %v3170 = vadd.f32 %v3168, %v3169
      %v3171 = vsel %vm528, %v3131, 0.0
      %v3172 = vadd.f32 %v3170, %v3171
      %v3173 = vsel %vm528, %v3132, 0.0
      %v3174 = vadd.f32 %v3172, %v3173
      %v3175 = vsel %vm528, %v3133, 0.0
      %v3176 = vadd.f32 %v3174, %v3175
      %v3177 = vsel %vm528, %v3134, 0.0
      %v3178 = vadd.f32 %v3176, %v3177
      %v3179 = vsel %vm528, %v3135, 0.0
      %v3180 = vadd.f32 %v3178, %v3179
      %v3181 = vsel %vm528, %v3136, 0.0
      %v3182 = vadd.f32 %v3180, %v3181
      %v3183 = vsel %vm528, %v3137, 0.0
      %v3184 = vadd.f32 %v3182, %v3183
      %v3185 = vsel %vm528, %v3138, 0.0
      %v3186 = vadd.f32 %v3184, %v3185
      %v3187 = vsel %vm528, %v3139, 0.0
      %v3188 = vadd.f32 %v3186, %v3187
      %v3189 = vsel %vm528, %v3140, 0.0
      %v3190 = vadd.f32 %v3188, %v3189
      %v3191 = vsel %vm528, %v3141, 0.0
      %v3192 = vadd.f32 %v3190, %v3191
      %v3193 = vsel %vm528, %v3142, 0.0
      %v3194 = vadd.f32 %v3192, %v3193
      %v3195 = vsel %vm528, %v3143, 0.0
      %v3196 = vadd.f32 %v3194, %v3195
      %v3197 = vsel %vm528, %v3144, 0.0
      %v3198 = vadd.f32 %v3196, %v3197
      %v3199 = vsel %vm528, %v3145, 0.0
      %v3200 = vadd.f32 %v3198, %v3199
      %v3201 = vsel %vm528, %v3146, 0.0
      %v3202 = vadd.f32 %v3200, %v3201
      %v3203 = vsel %vm528, %v3147, 0.0
      %v3204 = vadd.f32 %v3202, %v3203
      %v3205 = vsel %vm528, %v3148, 0.0
      %v3206 = vadd.f32 %v3204, %v3205
      %v3207 = vsel %vm528, %v3149, 0.0
      %v3208 = vadd.f32 %v3206, %v3207
      %v3209 = vsel %vm528, %v3150, 0.0
      %v3210 = vadd.f32 %v3208, %v3209
      %v3211 = vsel %vm528, %v3151, 0.0
      %v3212 = vadd.f32 %v3210, %v3211
      %v3213 = vsel %vm528, %v3152, 0.0
      %v3214 = vadd.f32 %v3212, %v3213
      %v3215 = vsel %vm528, %v3153, 0.0
      %v3216 = vadd.f32 %v3214, %v3215
      %v3217 = vrot.slane %v3216, 4
      %v3218 = vadd.f32 %v3216, %v3217
      %v3219 = vrot.slane %v3218, 2
      %v3220 = vadd.f32 %v3218, %v3219
      %v3221 = vrot.slane %v3220, 1
      %v3222 = vadd.f32 %v3220, %v3221
      %v3223 = vmul.f32 %v3222, %v598
      %v3224 = vld [vmem:[%s9] sm:$0xff]
      %v3225 = vld [vmem:[%s9 + $0x8] sm:$0xff]
      %v3226 = vld [vmem:[%s10] sm:$0x1]
      %v3228 = vsel %vm528, %v3223, 0
      %3230 = vmatprep.subr.mxu0 0.0
      %3231 = vmatpush1.msra.mxu0 %v3224
      %3232 = vmatprep.subr.mxu0 0.0
      %3233 = vmatpush1.msra.mxu0 %v3225
      %3234 = vmatprep.subr.mxu0 0.0
      %3235 = vmatpush1.msra.mxu0 0.0
      %3236 = vmatprep.subr.mxu0 0.0
      %3237 = vmatpush1.msra.mxu0 0.0
      %3238 = vmatprep.subr.mxu0 0.0
      %3239 = vmatpush1.msra.mxu0 0.0
      %3240 = vmatprep.subr.mxu0 0.0
      %3241 = vmatpush1.msra.mxu0 0.0
      %3242 = vmatprep.subr.mxu0 0.0
      %3243 = vmatpush1.msra.mxu0 0.0
      %3244 = vmatprep.subr.mxu0 0.0
      %3245 = vmatpush1.msra.mxu0 0.0
      %3246 = vmatprep.subr.mxu0 0.0
      %3247 = vmatpush1.msra.mxu0 0.0
      %3248 = vmatprep.subr.mxu0 0.0
      %3249 = vmatpush1.msra.mxu0 0.0
      %3250 = vmatprep.subr.mxu0 0.0
      %3251 = vmatpush1.msra.mxu0 0.0
      %3252 = vmatprep.subr.mxu0 0.0
      %3253 = vmatpush1.msra.mxu0 0.0
      %3254 = vmatprep.subr.mxu0 0.0
      %3255 = vmatpush1.msra.mxu0 0.0
      %3256 = vmatprep.subr.mxu0 0.0
      %3257 = vmatpush1.msra.mxu0 0.0
      %3258 = vmatprep.subr.mxu0 0.0
      %3259 = vmatpush1.msra.mxu0 0.0
      %3260 = vmatprep.subr.mxu0 0.0
      %3261 = vmatpush1.msra.mxu0 0.0
      %3262 = vmatprep.subr.mxu0 0.0
      %3263 = vmatpush1.msra.mxu0 0.0
      %3264 = vmatprep.subr.mxu0 0.0
      %3265 = vmatpush1.msra.mxu0 0.0
      %3266 = vmatprep.subr.mxu0 0.0
      %3267 = vmatpush1.msra.mxu0 0.0
      %3268 = vmatprep.subr.mxu0 0.0
      %3269 = vmatpush1.msra.mxu0 0.0
      %3270 = vmatprep.subr.mxu0 0.0
      %3271 = vmatpush1.msra.mxu0 0.0
      %3272 = vmatprep.subr.mxu0 0.0
      %3273 = vmatpush1.msra.mxu0 0.0
      %3274 = vmatprep.subr.mxu0 0.0
      %3275 = vmatpush1.msra.mxu0 0.0
      %3276 = vmatprep.subr.mxu0 0.0
      %3277 = vmatpush1.msra.mxu0 0.0
      %3278 = vmatprep.subr.mxu0 0.0
      %3279 = vmatpush1.msra.mxu0 0.0
      %3280 = vmatprep.subr.mxu0 0.0
      %3281 = vmatpush1.msra.mxu0 0.0
      %3282 = vmatprep.subr.mxu0 0.0
      %3283 = vmatpush1.msra.mxu0 0.0
      %3284 = vmatprep.subr.mxu0 0.0
      %3285 = vmatpush1.msra.mxu0 0.0
      %3286 = vmatprep.subr.mxu0 0.0
      %3287 = vmatpush1.msra.mxu0 0.0
      %3288 = vmatprep.subr.mxu0 0.0
      %3289 = vmatpush1.msra.mxu0 0.0
      %3290 = vmatprep.subr.mxu0 0.0
      %3291 = vmatpush1.msra.mxu0 0.0
      %3292 = vmatprep.subr.mxu0 0.0
      %3293 = vmatpush1.msra.mxu0 0.0
      %3294 = vmatprep.mubr.f32.mxu0 0.0
      %3295 = vmatmul.mubr.f32.gmra.mrb[0].mxu0 %v3228
      %v3296 = vpop.f32.mrb[0].mxu0
      %v3297 = vadd.f32 %v3226, %v3296
      %v3298 = vpop.f32.mrb[0].mxu0
      %3299 = vdwg.mxu0
      %v3300 = vmax.f32 %v3297, 0.0
      %v3301 = vld [vmem:[%s11] sm:$0xff]
      %v3302 = vld [vmem:[%s11 + $0x8] sm:$0xff]
      %v3303 = vld [vmem:[%s12] sm:$0x1]
      %v3305 = vsel %vm528, %v3300, 0
      %3307 = vmatprep.subr.mxu0 0.0
      %3308 = vmatpush1.msra.mxu0 %v3301
      %3309 = vmatprep.subr.mxu0 0.0
      %3310 = vmatpush1.msra.mxu0 %v3302
      %3311 = vmatprep.subr.mxu0 0.0
      %3312 = vmatpush1.msra.mxu0 0.0
      %3313 = vmatprep.subr.mxu0 0.0
      %3314 = vmatpush1.msra.mxu0 0.0
      %3315 = vmatprep.subr.mxu0 0.0
      %3316 = vmatpush1.msra.mxu0 0.0
      %3317 = vmatprep.subr.mxu0 0.0
      %3318 = vmatpush1.msra.mxu0 0.0
      %3319 = vmatprep.subr.mxu0 0.0
      %3320 = vmatpush1.msra.mxu0 0.0
      %3321 = vmatprep.subr.mxu0 0.0
      %3322 = vmatpush1.msra.mxu0 0.0
      %3323 = vmatprep.subr.mxu0 0.0
      %3324 = vmatpush1.msra.mxu0 0.0
      %3325 = vmatprep.subr.mxu0 0.0
      %3326 = vmatpush1.msra.mxu0 0.0
      %3327 = vmatprep.subr.mxu0 0.0
      %3328 = vmatpush1.msra.mxu0 0.0
      %3329 = vmatprep.subr.mxu0 0.0
      %3330 = vmatpush1.msra.mxu0 0.0
      %3331 = vmatprep.subr.mxu0 0.0
      %3332 = vmatpush1.msra.mxu0 0.0
      %3333 = vmatprep.subr.mxu0 0.0
      %3334 = vmatpush1.msra.mxu0 0.0
      %3335 = vmatprep.subr.mxu0 0.0
      %3336 = vmatpush1.msra.mxu0 0.0
      %3337 = vmatprep.subr.mxu0 0.0
      %3338 = vmatpush1.msra.mxu0 0.0
      %3339 = vmatprep.subr.mxu0 0.0
      %3340 = vmatpush1.msra.mxu0 0.0
      %3341 = vmatprep.subr.mxu0 0.0
      %3342 = vmatpush1.msra.mxu0 0.0
      %3343 = vmatprep.subr.mxu0 0.0
      %3344 = vmatpush1.msra.mxu0 0.0
      %3345 = vmatprep.subr.mxu0 0.0
      %3346 = vmatpush1.msra.mxu0 0.0
      %3347 = vmatprep.subr.mxu0 0.0
      %3348 = vmatpush1.msra.mxu0 0.0
      %3349 = vmatprep.subr.mxu0 0.0
      %3350 = vmatpush1.msra.mxu0 0.0
      %3351 = vmatprep.subr.mxu0 0.0
      %3352 = vmatpush1.msra.mxu0 0.0
      %3353 = vmatprep.subr.mxu0 0.0
      %3354 = vmatpush1.msra.mxu0 0.0
      %3355 = vmatprep.subr.mxu0 0.0
      %3356 = vmatpush1.msra.mxu0 0.0
      %3357 = vmatprep.subr.mxu0 0.0
      %3358 = vmatpush1.msra.mxu0 0.0
      %3359 = vmatprep.subr.mxu0 0.0
      %3360 = vmatpush1.msra.mxu0 0.0
      %3361 = vmatprep.subr.mxu0 0.0
      %3362 = vmatpush1.msra.mxu0 0.0
      %3363 = vmatprep.subr.mxu0 0.0
      %3364 = vmatpush1.msra.mxu0 0.0
      %3365 = vmatprep.subr.mxu0 0.0
      %3366 = vmatpush1.msra.mxu0 0.0
      %3367 = vmatprep.subr.mxu0 0.0
      %3368 = vmatpush1.msra.mxu0 0.0
      %3369 = vmatprep.subr.mxu0 0.0
      %3370 = vmatpush1.msra.mxu0 0.0
      %3371 = vmatprep.mubr.f32.mxu0 0.0
      %3372 = vmatmul.mubr.f32.gmra.mrb[0].mxu0 %v3305
      %v3373 = vpop.f32.mrb[0].mxu0
      %v3374 = vadd.f32 %v3303, %v3373
      %v3375 = vpop.f32.mrb[0].mxu0
      %3376 = vdwg.mxu0
      %v3377 = vxor.u32 %v3374, 2147483648
      %v3378 = vmul.f32 %v3377, 1.442695
      %v3379 = vpow.pop %v3378
      %v3380 = vadd.f32 %v3379, 1.0
      %v3381 = vrcp.pop %v3380
      %v3382 = vmul.f32 1.0, %v3381
      %3383 = vst.msk [vmem:[#allocation3] sm:$0xf] %vm759, 0
      %3384 = vst.msk [vmem:[#allocation3 + $0x4] sm:$0xf] %vm759, 0
      %3385 = vst.msk [vmem:[#allocation3 + $0x8] sm:$0xf] %vm759, 0
      %3386 = vst.msk [vmem:[#allocation3 + $0xc] sm:$0xf] %vm759, 0
      %3387 = vst.msk [vmem:[#allocation3 + $0x10] sm:$0xf] %vm759, 0
      %3388 = vst.msk [vmem:[#allocation3 + $0x14] sm:$0xf] %vm759, 0
      %3389 = vst.msk [vmem:[#allocation3 + $0x18] sm:$0xf] %vm759, 0
      %3390 = vst.msk [vmem:[#allocation3 + $0x1c] sm:$0xf] %vm759, 0
      %3391 = vst.msk [vmem:[#allocation3 + $0x20] sm:$0xf] %vm759, 0
      %3392 = vst.msk [vmem:[#allocation3 + $0x24] sm:$0xf] %vm759, 0
      %3393 = vst.msk [vmem:[#allocation3 + $0x28] sm:$0xf] %vm759, 0
      %3394 = vst.msk [vmem:[#allocation3 + $0x2c] sm:$0xf] %vm759, 0
      %3395 = vst.msk [vmem:[#allocation3 + $0x30] sm:$0xf] %vm759, 0
      %3396 = vst.msk [vmem:[#allocation3 + $0x34] sm:$0xf] %vm759, 0
      %3397 = vst.msk [vmem:[#allocation3 + $0x38] sm:$0xf] %vm759, 0
      %3398 = vst.msk [vmem:[#allocation3 + $0x3c] sm:$0xf] %vm759, 0
      %3399 = vst.msk [vmem:[#allocation3 + $0x40] sm:$0xf] %vm759, 0
      %3400 = vst.msk [vmem:[#allocation3 + $0x44] sm:$0xf] %vm759, 0
      %3401 = vst.msk [vmem:[#allocation3 + $0x48] sm:$0xf] %vm759, 0
      %3402 = vst.msk [vmem:[#allocation3 + $0x4c] sm:$0xf] %vm759, 0
      %3403 = vst.msk [vmem:[#allocation3 + $0x50] sm:$0xf] %vm759, 0
      %3404 = vst.msk [vmem:[#allocation3 + $0x54] sm:$0xf] %vm759, 0
      %3405 = vst.msk [vmem:[#allocation3 + $0x58] sm:$0xf] %vm759, 0
      %3406 = vst.msk [vmem:[#allocation3 + $0x5c] sm:$0xf] %vm759, 0
      %3407 = vst.msk [vmem:[#allocation3 + $0x60] sm:$0xf] %vm759, 0
      %3408 = vst.msk [vmem:[#allocation3 + $0x64] sm:$0xf] %vm759, 0
      %3409 = vst.msk [vmem:[#allocation3 + $0x68] sm:$0xf] %vm759, 0
      %3410 = vst.msk [vmem:[#allocation3 + $0x6c] sm:$0xf] %vm759, 0
      %3411 = vst.msk [vmem:[#allocation3 + $0x70] sm:$0xf] %vm759, 0
      %3412 = vst.msk [vmem:[#allocation3 + $0x74] sm:$0xf] %vm759, 0
      %3413 = vst.msk [vmem:[#allocation3 + $0x78] sm:$0xf] %vm759, 0
      %3414 = vst.msk [vmem:[#allocation3 + $0x7c] sm:$0xf] %vm759, 0
      %3415 = vst.msk [vmem:[#allocation3 + $0x80] sm:$0xf] %vm759, 0
      %3416 = vst.msk [vmem:[#allocation3 + $0x84] sm:$0xf] %vm759, 0
      %3417 = vst.msk [vmem:[#allocation3 + $0x88] sm:$0xf] %vm759, 0
      %3418 = vst.msk [vmem:[#allocation3 + $0x8c] sm:$0xf] %vm759, 0
      %3419 = vst.msk [vmem:[#allocation3 + $0x90] sm:$0xf] %vm759, 0
      %3420 = vst.msk [vmem:[#allocation3 + $0x94] sm:$0xf] %vm759, 0
      %3421 = vst.msk [vmem:[#allocation3 + $0x98] sm:$0xf] %vm759, 0
      %3422 = vst.msk [vmem:[#allocation3 + $0x9c] sm:$0xf] %vm759, 0
      %3423 = vst.msk [vmem:[#allocation3 + $0xa0] sm:$0xf] %vm759, 0
      %3424 = vst.msk [vmem:[#allocation3 + $0xa4] sm:$0xf] %vm759, 0
      %3425 = vst.msk [vmem:[#allocation3 + $0xa8] sm:$0xf] %vm759, 0
      %3426 = vst.msk [vmem:[#allocation3 + $0xac] sm:$0xf] %vm759, 0
      %3427 = vst.msk [vmem:[#allocation3 + $0xb0] sm:$0xf] %vm759, 0
      %3428 = vst.msk [vmem:[#allocation3 + $0xb4] sm:$0xf] %vm759, 0
      %3429 = vst.msk [vmem:[#allocation3 + $0xb8] sm:$0xf] %vm759, 0
      %3430 = vst.msk [vmem:[#allocation3 + $0xbc] sm:$0xf] %vm759, 0
      %3431 = vst.msk [vmem:[#allocation3 + $0xc0] sm:$0xf] %vm759, 0
      %3432 = vst.msk [vmem:[#allocation3 + $0xc4] sm:$0xf] %vm759, 0
      %3433 = vst.msk [vmem:[#allocation3 + $0xc8] sm:$0xf] %vm759, 0
      %3434 = vst.msk [vmem:[#allocation3 + $0xcc] sm:$0xf] %vm759, 0
      %3435 = vst.msk [vmem:[#allocation3 + $0xd0] sm:$0xf] %vm759, 0
      %3436 = vst.msk [vmem:[#allocation3 + $0xd4] sm:$0xf] %vm759, 0
      %v3437 = vlaneseq
      %v3438 = vshrl.u32 %v3437, 7
      %v3439 = vsub.s32 0, %v3438
      %v3440 = vrot.slane %v3382, %v3439
      %v3441 = vmul.f32 %v3122, %v3440
      %v3442 = vmul.f32 %v3123, %v3440
      %v3443 = vmul.f32 %v3124, %v3440
      %v3444 = vmul.f32 %v3125, %v3440
      %v3445 = vmul.f32 %v3126, %v3440
      %v3446 = vmul.f32 %v3127, %v3440
      %v3447 = vmul.f32 %v3128, %v3440
      %v3448 = vmul.f32 %v3129, %v3440
      %v3449 = vmul.f32 %v3130, %v3440
      %v3450 = vmul.f32 %v3131, %v3440
      %v3451 = vmul.f32 %v3132, %v3440
      %v3452 = vmul.f32 %v3133, %v3440
      %v3453 = vmul.f32 %v3134, %v3440
      %v3454 = vmul.f32 %v3135, %v3440
      %v3455 = vmul.f32 %v3136, %v3440
      %v3456 = vmul.f32 %v3137, %v3440
      %v3457 = vmul.f32 %v3138, %v3440
      %v3458 = vmul.f32 %v3139, %v3440
      %v3459 = vmul.f32 %v3140, %v3440
      %v3460 = vmul.f32 %v3141, %v3440
      %v3461 = vmul.f32 %v3142, %v3440
      %v3462 = vmul.f32 %v3143, %v3440
      %v3463 = vmul.f32 %v3144, %v3440
      %v3464 = vmul.f32 %v3145, %v3440
      %v3465 = vmul.f32 %v3146, %v3440
      %v3466 = vmul.f32 %v3147, %v3440
      %v3467 = vmul.f32 %v3148, %v3440
      %v3468 = vmul.f32 %v3149, %v3440
      %v3469 = vmul.f32 %v3150, %v3440
      %v3470 = vmul.f32 %v3151, %v3440
      %v3471 = vmul.f32 %v3152, %v3440
      %v3472 = vmul.f32 %v3153, %v3440
      %v3473 = vpack.c.bf16 %v3442, %v3441
      %v3474 = vpack.c.bf16 %v3444, %v3443
      %v3475 = vpack.c.bf16 %v3446, %v3445
      %v3476 = vpack.c.bf16 %v3448, %v3447
      %v3477 = vpack.c.bf16 %v3450, %v3449
      %v3478 = vpack.c.bf16 %v3452, %v3451
      %v3479 = vpack.c.bf16 %v3454, %v3453
      %v3480 = vpack.c.bf16 %v3456, %v3455
      %v3481 = vpack.c.bf16 %v3458, %v3457
      %v3482 = vpack.c.bf16 %v3460, %v3459
      %v3483 = vpack.c.bf16 %v3462, %v3461
      %v3484 = vpack.c.bf16 %v3464, %v3463
      %v3485 = vpack.c.bf16 %v3466, %v3465
      %v3486 = vpack.c.bf16 %v3468, %v3467
      %v3487 = vpack.c.bf16 %v3470, %v3469
      %v3488 = vpack.c.bf16 %v3472, %v3471
      %v3505 = vunpack.c.l.b16 %v3473
      %v3506 = vunpack.c.h.b16 %v3473
      %v3507 = vunpack.c.l.b16 %v3474
      %v3508 = vunpack.c.h.b16 %v3474
      %v3509 = vunpack.c.l.b16 %v3475
      %v3510 = vunpack.c.h.b16 %v3475
      %v3511 = vunpack.c.l.b16 %v3476
      %v3512 = vunpack.c.h.b16 %v3476
      %v3513 = vunpack.c.l.b16 %v3477
      %v3514 = vunpack.c.h.b16 %v3477
      %v3515 = vunpack.c.l.b16 %v3478
      %v3516 = vunpack.c.h.b16 %v3478
      %v3517 = vunpack.c.l.b16 %v3479
      %v3518 = vunpack.c.h.b16 %v3479
      %v3519 = vunpack.c.l.b16 %v3480
      %v3520 = vunpack.c.h.b16 %v3480
      %v3521 = vunpack.c.l.b16 %v3481
      %v3522 = vunpack.c.h.b16 %v3481
      %v3523 = vunpack.c.l.b16 %v3482
      %v3524 = vunpack.c.h.b16 %v3482
      %v3525 = vunpack.c.l.b16 %v3483
      %v3526 = vunpack.c.h.b16 %v3483
      %v3527 = vunpack.c.l.b16 %v3484
      %v3528 = vunpack.c.h.b16 %v3484
      %v3529 = vunpack.c.l.b16 %v3485
      %v3530 = vunpack.c.h.b16 %v3485
      %v3531 = vunpack.c.l.b16 %v3486
      %v3532 = vunpack.c.h.b16 %v3486
      %v3533 = vunpack.c.l.b16 %v3487
      %v3534 = vunpack.c.h.b16 %v3487
      %v3535 = vunpack.c.l.b16 %v3488
      %v3536 = vunpack.c.h.b16 %v3488
      %v3537 = vpack.c.b16 %v3505, %v3505
      %v3538 = vpack.c.b16 %v3506, %v3506
      %v3539 = vpack.c.b16 %v3507, %v3507
      %v3540 = vpack.c.b16 %v3508, %v3508
      %v3541 = vpack.c.b16 %v3509, %v3509
      %v3542 = vpack.c.b16 %v3510, %v3510
      %v3543 = vpack.c.b16 %v3511, %v3511
      %v3544 = vpack.c.b16 %v3512, %v3512
      %v3545 = vpack.c.b16 %v3513, %v3513
      %v3546 = vpack.c.b16 %v3514, %v3514
      %v3547 = vpack.c.b16 %v3515, %v3515
      %v3548 = vpack.c.b16 %v3516, %v3516
      %v3549 = vpack.c.b16 %v3517, %v3517
      %v3550 = vpack.c.b16 %v3518, %v3518
      %v3551 = vpack.c.b16 %v3519, %v3519
      %v3552 = vpack.c.b16 %v3520, %v3520
      %v3553 = vpack.c.b16 %v3521, %v3521
      %v3554 = vpack.c.b16 %v3522, %v3522
      %v3555 = vpack.c.b16 %v3523, %v3523
      %v3556 = vpack.c.b16 %v3524, %v3524
      %v3557 = vpack.c.b16 %v3525, %v3525
      %v3558 = vpack.c.b16 %v3526, %v3526
      %v3559 = vpack.c.b16 %v3527, %v3527
      %v3560 = vpack.c.b16 %v3528, %v3528
      %v3561 = vpack.c.b16 %v3529, %v3529
      %v3562 = vpack.c.b16 %v3530, %v3530
      %v3563 = vpack.c.b16 %v3531, %v3531
      %v3564 = vpack.c.b16 %v3532, %v3532
      %v3565 = vpack.c.b16 %v3533, %v3533
      %v3566 = vpack.c.b16 %v3534, %v3534
      %v3567 = vpack.c.b16 %v3535, %v3535
      %v3568 = vpack.c.b16 %v3536, %v3536
      %v3570 = vshrl.u32 %v3537, 16
      %v3572 = vrot.slane %v3570, 7
      %v3573 = vshll.u32 %v3537, 16
      %v3575 = vor.u32 %v3572, %v3573
      %v3576 = vrot.slane %v3572, 4
      %v3578 = vshrl.u32 %v3538, 16
      %v3580 = vrot.slane %v3578, 7
      %v3581 = vshll.u32 %v3538, 16
      %v3583 = vor.u32 %v3580, %v3581
      %v3584 = vsel %vm948, %v3576, %v3583
      %v3585 = vrot.slane %v3580, 4
      %v3587 = vshrl.u32 %v3539, 16
      %v3589 = vrot.slane %v3587, 7
      %v3590 = vshll.u32 %v3539, 16
      %v3592 = vor.u32 %v3589, %v3590
      %v3593 = vrot.slane %v3589, 4
      %v3595 = vshrl.u32 %v3540, 16
      %v3597 = vrot.slane %v3595, 7
      %v3598 = vshll.u32 %v3540, 16
      %v3600 = vor.u32 %v3597, %v3598
      %v3601 = vsel %vm948, %v3593, %v3600
      %v3602 = vrot.slane %v3597, 4
      %v3604 = vshrl.u32 %v3541, 16
      %v3606 = vrot.slane %v3604, 7
      %v3607 = vshll.u32 %v3541, 16
      %v3609 = vor.u32 %v3606, %v3607
      %v3610 = vrot.slane %v3606, 4
      %v3612 = vshrl.u32 %v3542, 16
      %v3614 = vrot.slane %v3612, 7
      %v3615 = vshll.u32 %v3542, 16
      %v3617 = vor.u32 %v3614, %v3615
      %v3618 = vsel %vm948, %v3610, %v3617
      %v3619 = vrot.slane %v3614, 4
      %v3621 = vshrl.u32 %v3543, 16
      %v3623 = vrot.slane %v3621, 7
      %v3624 = vshll.u32 %v3543, 16
      %v3626 = vor.u32 %v3623, %v3624
      %v3627 = vrot.slane %v3623, 4
      %v3629 = vshrl.u32 %v3544, 16
      %v3631 = vrot.slane %v3629, 7
      %v3632 = vshll.u32 %v3544, 16
      %v3634 = vor.u32 %v3631, %v3632
      %v3635 = vsel %vm948, %v3627, %v3634
      %v3636 = vrot.slane %v3631, 4
      %v3638 = vshrl.u32 %v3545, 16
      %v3640 = vrot.slane %v3638, 7
      %v3641 = vshll.u32 %v3545, 16
      %v3643 = vor.u32 %v3640, %v3641
      %v3644 = vrot.slane %v3640, 4
      %v3646 = vshrl.u32 %v3546, 16
      %v3648 = vrot.slane %v3646, 7
      %v3649 = vshll.u32 %v3546, 16
      %v3651 = vor.u32 %v3648, %v3649
      %v3652 = vsel %vm948, %v3644, %v3651
      %v3653 = vrot.slane %v3648, 4
      %v3655 = vshrl.u32 %v3547, 16
      %v3657 = vrot.slane %v3655, 7
      %v3658 = vshll.u32 %v3547, 16
      %v3660 = vor.u32 %v3657, %v3658
      %v3661 = vrot.slane %v3657, 4
      %v3663 = vshrl.u32 %v3548, 16
      %v3665 = vrot.slane %v3663, 7
      %v3666 = vshll.u32 %v3548, 16
      %v3668 = vor.u32 %v3665, %v3666
      %v3669 = vsel %vm948, %v3661, %v3668
      %v3670 = vrot.slane %v3665, 4
      %v3672 = vshrl.u32 %v3549, 16
      %v3674 = vrot.slane %v3672, 7
      %v3675 = vshll.u32 %v3549, 16
      %v3677 = vor.u32 %v3674, %v3675
      %v3678 = vrot.slane %v3674, 4
      %v3680 = vshrl.u32 %v3550, 16
      %v3682 = vrot.slane %v3680, 7
      %v3683 = vshll.u32 %v3550, 16
      %v3685 = vor.u32 %v3682, %v3683
      %v3686 = vsel %vm948, %v3678, %v3685
      %v3687 = vrot.slane %v3682, 4
      %v3689 = vshrl.u32 %v3551, 16
      %v3691 = vrot.slane %v3689, 7
      %v3692 = vshll.u32 %v3551, 16
      %v3694 = vor.u32 %v3691, %v3692
      %v3695 = vrot.slane %v3691, 4
      %v3697 = vshrl.u32 %v3552, 16
      %v3699 = vrot.slane %v3697, 7
      %v3700 = vshll.u32 %v3552, 16
      %v3702 = vor.u32 %v3699, %v3700
      %v3703 = vsel %vm948, %v3695, %v3702
      %v3704 = vrot.slane %v3699, 4
      %v3706 = vshrl.u32 %v3553, 16
      %v3708 = vrot.slane %v3706, 7
      %v3709 = vshll.u32 %v3553, 16
      %v3711 = vor.u32 %v3708, %v3709
      %v3712 = vrot.slane %v3708, 4
      %v3714 = vshrl.u32 %v3554, 16
      %v3716 = vrot.slane %v3714, 7
      %v3717 = vshll.u32 %v3554, 16
      %v3719 = vor.u32 %v3716, %v3717
      %v3720 = vsel %vm948, %v3712, %v3719
      %v3721 = vrot.slane %v3716, 4
      %v3723 = vshrl.u32 %v3555, 16
      %v3725 = vrot.slane %v3723, 7
      %v3726 = vshll.u32 %v3555, 16
      %v3728 = vor.u32 %v3725, %v3726
      %v3729 = vrot.slane %v3725, 4
      %v3731 = vshrl.u32 %v3556, 16
      %v3733 = vrot.slane %v3731, 7
      %v3734 = vshll.u32 %v3556, 16
      %v3736 = vor.u32 %v3733, %v3734
      %v3737 = vsel %vm948, %v3729, %v3736
      %v3738 = vrot.slane %v3733, 4
      %v3740 = vshrl.u32 %v3557, 16
      %v3742 = vrot.slane %v3740, 7
      %v3743 = vshll.u32 %v3557, 16
      %v3745 = vor.u32 %v3742, %v3743
      %v3746 = vrot.slane %v3742, 4
      %v3748 = vshrl.u32 %v3558, 16
      %v3750 = vrot.slane %v3748, 7
      %v3751 = vshll.u32 %v3558, 16
      %v3753 = vor.u32 %v3750, %v3751
      %v3754 = vsel %vm948, %v3746, %v3753
      %v3755 = vrot.slane %v3750, 4
      %v3757 = vshrl.u32 %v3559, 16
      %v3759 = vrot.slane %v3757, 7
      %v3760 = vshll.u32 %v3559, 16
      %v3762 = vor.u32 %v3759, %v3760
      %v3763 = vrot.slane %v3759, 4
      %v3765 = vshrl.u32 %v3560, 16
      %v3767 = vrot.slane %v3765, 7
      %v3768 = vshll.u32 %v3560, 16
      %v3770 = vor.u32 %v3767, %v3768
      %v3771 = vsel %vm948, %v3763, %v3770
      %v3772 = vrot.slane %v3767, 4
      %v3774 = vshrl.u32 %v3561, 16
      %v3776 = vrot.slane %v3774, 7
      %v3777 = vshll.u32 %v3561, 16
      %v3779 = vor.u32 %v3776, %v3777
      %v3780 = vrot.slane %v3776, 4
      %v3782 = vshrl.u32 %v3562, 16
      %v3784 = vrot.slane %v3782, 7
      %v3785 = vshll.u32 %v3562, 16
      %v3787 = vor.u32 %v3784, %v3785
      %v3788 = vsel %vm948, %v3780, %v3787
      %v3789 = vrot.slane %v3784, 4
      %v3791 = vshrl.u32 %v3563, 16
      %v3793 = vrot.slane %v3791, 7
      %v3794 = vshll.u32 %v3563, 16
      %v3796 = vor.u32 %v3793, %v3794
      %v3797 = vrot.slane %v3793, 4
      %v3799 = vshrl.u32 %v3564, 16
      %v3801 = vrot.slane %v3799, 7
      %v3802 = vshll.u32 %v3564, 16
      %v3804 = vor.u32 %v3801, %v3802
      %v3805 = vsel %vm948, %v3797, %v3804
      %v3806 = vrot.slane %v3801, 4
      %v3808 = vshrl.u32 %v3565, 16
      %v3810 = vrot.slane %v3808, 7
      %v3811 = vshll.u32 %v3565, 16
      %v3813 = vor.u32 %v3810, %v3811
      %v3814 = vrot.slane %v3810, 4
      %v3816 = vshrl.u32 %v3566, 16
      %v3818 = vrot.slane %v3816, 7
      %v3819 = vshll.u32 %v3566, 16
      %v3821 = vor.u32 %v3818, %v3819
      %v3822 = vsel %vm948, %v3814, %v3821
      %v3823 = vrot.slane %v3818, 4
      %v3825 = vshrl.u32 %v3567, 16
      %v3827 = vrot.slane %v3825, 7
      %v3828 = vshll.u32 %v3567, 16
      %v3830 = vor.u32 %v3827, %v3828
      %v3831 = vrot.slane %v3827, 4
      %v3833 = vshrl.u32 %v3568, 16
      %v3835 = vrot.slane %v3833, 7
      %v3836 = vshll.u32 %v3568, 16
      %v3838 = vor.u32 %v3835, %v3836
      %v3839 = vsel %vm948, %v3831, %v3838
      %v3840 = vrot.slane %v3835, 4
      %s3889 = scalar_lea.vmem [#allocation3], 12
      %v3890 = vld [vmem:[%s3889] sm:$0xf]
      %v3891 = vsel %vm1272, %v3575, %v3890
      %3892 = vst [vmem:[%s3889] sm:$0xf] %v3891
      %3893 = vst.msk [vmem:[%s3889 + $0x4] sm:$0xf] %vm759, %v3584
      %v3894 = vld [vmem:[%s3889 + $0x8] sm:$0x1]
      %v3895 = vsel %vm1278, %v3585, %v3894
      %3896 = vst [vmem:[%s3889 + $0x8] sm:$0x1] %v3895
      %v3897 = vld [vmem:[%s3889 + $0xc] sm:$0xf]
      %v3898 = vsel %vm1272, %v3592, %v3897
      %3899 = vst [vmem:[%s3889 + $0xc] sm:$0xf] %v3898
      %3900 = vst.msk [vmem:[%s3889 + $0x10] sm:$0xf] %vm759, %v3601
      %v3901 = vld [vmem:[%s3889 + $0x14] sm:$0x1]
      %v3902 = vsel %vm1278, %v3602, %v3901
      %3903 = vst [vmem:[%s3889 + $0x14] sm:$0x1] %v3902
      %v3904 = vld [vmem:[%s3889 + $0x18] sm:$0xf]
      %v3905 = vsel %vm1272, %v3609, %v3904
      %3906 = vst [vmem:[%s3889 + $0x18] sm:$0xf] %v3905
      %3907 = vst.msk [vmem:[%s3889 + $0x1c] sm:$0xf] %vm759, %v3618
      %v3908 = vld [vmem:[%s3889 + $0x20] sm:$0x1]
      %v3909 = vsel %vm1278, %v3619, %v3908
      %3910 = vst [vmem:[%s3889 + $0x20] sm:$0x1] %v3909
      %v3911 = vld [vmem:[%s3889 + $0x24] sm:$0xf]
      %v3912 = vsel %vm1272, %v3626, %v3911
      %3913 = vst [vmem:[%s3889 + $0x24] sm:$0xf] %v3912
      %3914 = vst.msk [vmem:[%s3889 + $0x28] sm:$0xf] %vm759, %v3635
      %v3915 = vld [vmem:[%s3889 + $0x2c] sm:$0x1]
      %v3916 = vsel %vm1278, %v3636, %v3915
      %3917 = vst [vmem:[%s3889 + $0x2c] sm:$0x1] %v3916
      %v3918 = vld [vmem:[%s3889 + $0x30] sm:$0xf]
      %v3919 = vsel %vm1272, %v3643, %v3918
      %3920 = vst [vmem:[%s3889 + $0x30] sm:$0xf] %v3919
      %3921 = vst.msk [vmem:[%s3889 + $0x34] sm:$0xf] %vm759, %v3652
      %v3922 = vld [vmem:[%s3889 + $0x38] sm:$0x1]
      %v3923 = vsel %vm1278, %v3653, %v3922
      %3924 = vst [vmem:[%s3889 + $0x38] sm:$0x1] %v3923
      %v3925 = vld [vmem:[%s3889 + $0x3c] sm:$0xf]
      %v3926 = vsel %vm1272, %v3660, %v3925
      %3927 = vst [vmem:[%s3889 + $0x3c] sm:$0xf] %v3926
      %3928 = vst.msk [vmem:[%s3889 + $0x40] sm:$0xf] %vm759, %v3669
      %v3929 = vld [vmem:[%s3889 + $0x44] sm:$0x1]
      %v3930 = vsel %vm1278, %v3670, %v3929
      %3931 = vst [vmem:[%s3889 + $0x44] sm:$0x1] %v3930
      %v3932 = vld [vmem:[%s3889 + $0x48] sm:$0xf]
      %v3933 = vsel %vm1272, %v3677, %v3932
      %3934 = vst [vmem:[%s3889 + $0x48] sm:$0xf] %v3933
      %3935 = vst.msk [vmem:[%s3889 + $0x4c] sm:$0xf] %vm759, %v3686
      %v3936 = vld [vmem:[%s3889 + $0x50] sm:$0x1]
      %v3937 = vsel %vm1278, %v3687, %v3936
      %3938 = vst [vmem:[%s3889 + $0x50] sm:$0x1] %v3937
      %v3939 = vld [vmem:[%s3889 + $0x54] sm:$0xf]
      %v3940 = vsel %vm1272, %v3694, %v3939
      %3941 = vst [vmem:[%s3889 + $0x54] sm:$0xf] %v3940
      %3942 = vst.msk [vmem:[%s3889 + $0x58] sm:$0xf] %vm759, %v3703
      %v3943 = vld [vmem:[%s3889 + $0x5c] sm:$0x1]
      %v3944 = vsel %vm1278, %v3704, %v3943
      %3945 = vst [vmem:[%s3889 + $0x5c] sm:$0x1] %v3944
      %v3946 = vld [vmem:[%s3889 + $0x60] sm:$0xf]
      %v3947 = vsel %vm1272, %v3711, %v3946
      %3948 = vst [vmem:[%s3889 + $0x60] sm:$0xf] %v3947
      %3949 = vst.msk [vmem:[%s3889 + $0x64] sm:$0xf] %vm759, %v3720
      %v3950 = vld [vmem:[%s3889 + $0x68] sm:$0x1]
      %v3951 = vsel %vm1278, %v3721, %v3950
      %3952 = vst [vmem:[%s3889 + $0x68] sm:$0x1] %v3951
      %v3953 = vld [vmem:[%s3889 + $0x6c] sm:$0xf]
      %v3954 = vsel %vm1272, %v3728, %v3953
      %3955 = vst [vmem:[%s3889 + $0x6c] sm:$0xf] %v3954
      %3956 = vst.msk [vmem:[%s3889 + $0x70] sm:$0xf] %vm759, %v3737
      %v3957 = vld [vmem:[%s3889 + $0x74] sm:$0x1]
      %v3958 = vsel %vm1278, %v3738, %v3957
      %3959 = vst [vmem:[%s3889 + $0x74] sm:$0x1] %v3958
      %v3960 = vld [vmem:[%s3889 + $0x78] sm:$0xf]
      %v3961 = vsel %vm1272, %v3745, %v3960
      %3962 = vst [vmem:[%s3889 + $0x78] sm:$0xf] %v3961
      %3963 = vst.msk [vmem:[%s3889 + $0x7c] sm:$0xf] %vm759, %v3754
      %v3964 = vld [vmem:[%s3889 + $0x80] sm:$0x1]
      %v3965 = vsel %vm1278, %v3755, %v3964
      %3966 = vst [vmem:[%s3889 + $0x80] sm:$0x1] %v3965
      %v3967 = vld [vmem:[%s3889 + $0x84] sm:$0xf]
      %v3968 = vsel %vm1272, %v3762, %v3967
      %3969 = vst [vmem:[%s3889 + $0x84] sm:$0xf] %v3968
      %3970 = vst.msk [vmem:[%s3889 + $0x88] sm:$0xf] %vm759, %v3771
      %v3971 = vld [vmem:[%s3889 + $0x8c] sm:$0x1]
      %v3972 = vsel %vm1278, %v3772, %v3971
      %3973 = vst [vmem:[%s3889 + $0x8c] sm:$0x1] %v3972
      %v3974 = vld [vmem:[%s3889 + $0x90] sm:$0xf]
      %v3975 = vsel %vm1272, %v3779, %v3974
      %3976 = vst [vmem:[%s3889 + $0x90] sm:$0xf] %v3975
      %3977 = vst.msk [vmem:[%s3889 + $0x94] sm:$0xf] %vm759, %v3788
      %v3978 = vld [vmem:[%s3889 + $0x98] sm:$0x1]
      %v3979 = vsel %vm1278, %v3789, %v3978
      %3980 = vst [vmem:[%s3889 + $0x98] sm:$0x1] %v3979
      %v3981 = vld [vmem:[%s3889 + $0x9c] sm:$0xf]
      %v3982 = vsel %vm1272, %v3796, %v3981
      %3983 = vst [vmem:[%s3889 + $0x9c] sm:$0xf] %v3982
      %3984 = vst.msk [vmem:[%s3889 + $0xa0] sm:$0xf] %vm759, %v3805
      %v3985 = vld [vmem:[%s3889 + $0xa4] sm:$0x1]
      %v3986 = vsel %vm1278, %v3806, %v3985
      %3987 = vst [vmem:[%s3889 + $0xa4] sm:$0x1] %v3986
      %v3988 = vld [vmem:[%s3889 + $0xa8] sm:$0xf]
      %v3989 = vsel %vm1272, %v3813, %v3988
      %3990 = vst [vmem:[%s3889 + $0xa8] sm:$0xf] %v3989
      %3991 = vst.msk [vmem:[%s3889 + $0xac] sm:$0xf] %vm759, %v3822
      %v3992 = vld [vmem:[%s3889 + $0xb0] sm:$0x1]
      %v3993 = vsel %vm1278, %v3823, %v3992
      %3994 = vst [vmem:[%s3889 + $0xb0] sm:$0x1] %v3993
      %v3995 = vld [vmem:[%s3889 + $0xb4] sm:$0xf]
      %v3996 = vsel %vm1272, %v3830, %v3995
      %3997 = vst [vmem:[%s3889 + $0xb4] sm:$0xf] %v3996
      %3998 = vst.msk [vmem:[%s3889 + $0xb8] sm:$0xf] %vm759, %v3839
      %v3999 = vld [vmem:[%s3889 + $0xbc] sm:$0x1]
      %v4000 = vsel %vm1278, %v3840, %v3999
      %4001 = vst [vmem:[%s3889 + $0xbc] sm:$0x1] %v4000
      %v4002 = vld [vmem:[#allocation3] sm:$0xf]
      %v4003 = vld [vmem:[#allocation3 + $0x4] sm:$0xf]
      %v4004 = vld [vmem:[#allocation3 + $0x8] sm:$0xf]
      %v4005 = vld [vmem:[#allocation3 + $0xc] sm:$0xf]
      %v4006 = vld [vmem:[#allocation3 + $0x10] sm:$0xf]
      %v4007 = vld [vmem:[#allocation3 + $0x14] sm:$0xf]
      %v4008 = vld [vmem:[#allocation3 + $0x18] sm:$0xf]
      %v4009 = vld [vmem:[#allocation3 + $0x1c] sm:$0xf]
      %v4010 = vld [vmem:[#allocation3 + $0x20] sm:$0xf]
      %v4011 = vld [vmem:[#allocation3 + $0x24] sm:$0xf]
      %v4012 = vld [vmem:[#allocation3 + $0x28] sm:$0xf]
      %v4013 = vld [vmem:[#allocation3 + $0x2c] sm:$0xf]
      %v4014 = vld [vmem:[#allocation3 + $0x30] sm:$0xf]
      %v4015 = vld [vmem:[#allocation3 + $0x34] sm:$0xf]
      %v4016 = vld [vmem:[#allocation3 + $0x38] sm:$0xf]
      %v4017 = vld [vmem:[#allocation3 + $0x3c] sm:$0xf]
      %v4018 = vld [vmem:[#allocation3 + $0x40] sm:$0xf]
      %v4019 = vld [vmem:[#allocation3 + $0x44] sm:$0xf]
      %v4020 = vld [vmem:[#allocation3 + $0x48] sm:$0xf]
      %v4021 = vld [vmem:[#allocation3 + $0x4c] sm:$0xf]
      %v4022 = vld [vmem:[#allocation3 + $0x50] sm:$0xf]
      %v4023 = vld [vmem:[#allocation3 + $0x54] sm:$0xf]
      %v4024 = vld [vmem:[#allocation3 + $0x58] sm:$0xf]
      %v4025 = vld [vmem:[#allocation3 + $0x5c] sm:$0xf]
      %v4026 = vld [vmem:[#allocation3 + $0x60] sm:$0xf]
      %v4027 = vld [vmem:[#allocation3 + $0x64] sm:$0xf]
      %v4028 = vld [vmem:[#allocation3 + $0x68] sm:$0xf]
      %v4029 = vld [vmem:[#allocation3 + $0x6c] sm:$0xf]
      %v4030 = vld [vmem:[#allocation3 + $0x70] sm:$0xf]
      %v4031 = vld [vmem:[#allocation3 + $0x74] sm:$0xf]
      %v4032 = vld [vmem:[#allocation3 + $0x78] sm:$0xf]
      %v4033 = vld [vmem:[#allocation3 + $0x7c] sm:$0xf]
      %v4034 = vld [vmem:[#allocation3 + $0x80] sm:$0xf]
      %v4035 = vld [vmem:[#allocation3 + $0x84] sm:$0xf]
      %v4036 = vld [vmem:[#allocation3 + $0x88] sm:$0xf]
      %v4037 = vld [vmem:[#allocation3 + $0x8c] sm:$0xf]
      %v4038 = vld [vmem:[#allocation3 + $0x90] sm:$0xf]
      %v4039 = vld [vmem:[#allocation3 + $0x94] sm:$0xf]
      %v4040 = vld [vmem:[#allocation3 + $0x98] sm:$0xf]
      %v4041 = vld [vmem:[#allocation3 + $0x9c] sm:$0xf]
      %v4042 = vld [vmem:[#allocation3 + $0xa0] sm:$0xf]
      %v4043 = vld [vmem:[#allocation3 + $0xa4] sm:$0xf]
      %v4044 = vld [vmem:[#allocation3 + $0xa8] sm:$0xf]
      %v4045 = vld [vmem:[#allocation3 + $0xac] sm:$0xf]
      %v4046 = vld [vmem:[#allocation3 + $0xb0] sm:$0xf]
      %v4047 = vld [vmem:[#allocation3 + $0xb4] sm:$0xf]
      %v4048 = vld [vmem:[#allocation3 + $0xb8] sm:$0xf]
      %v4049 = vld [vmem:[#allocation3 + $0xbc] sm:$0xf]
      %v4050 = vld [vmem:[#allocation3 + $0xc0] sm:$0xf]
      %v4051 = vld [vmem:[#allocation3 + $0xc4] sm:$0xf]
      %v4052 = vld [vmem:[#allocation3 + $0xc8] sm:$0xf]
      %v4053 = vld [vmem:[#allocation3 + $0xcc] sm:$0xf]
      %v4054 = vld [vmem:[#allocation3 + $0xd0] sm:$0xf]
      %v4055 = vld [vmem:[#allocation3 + $0xd4] sm:$0xf]
      %v4057 = vshrl.u32 %v4002, 16
      %v4059 = vrot.slane %v4057, 4
      %v4060 = vshll.u32 %v4002, 16
      %v4062 = vrot.slane %v4060, 5
      %v4063 = vor.u32 %v4059, %v4062
      %v4064 = vrot.slane %v4063, 4
      %v4066 = vshll.u32 %v4003, 16
      %v4068 = vrot.slane %v4066, 5
      %v4069 = vsel %vm1443, %v4064, %v4068
      %v4070 = vshrl.u32 %v4003, 16
      %v4072 = vrot.slane %v4070, 4
      %v4073 = vor.u32 %v4072, %v4068
      %v4074 = vrot.slane %v4073, 4
      %v4076 = vshll.u32 %v4004, 16
      %v4078 = vrot.slane %v4076, 5
      %v4079 = vsel %vm1443, %v4074, %v4078
      %v4081 = vshrl.u32 %v4005, 16
      %v4083 = vrot.slane %v4081, 4
      %v4084 = vshll.u32 %v4005, 16
      %v4086 = vrot.slane %v4084, 5
      %v4087 = vor.u32 %v4083, %v4086
      %v4088 = vrot.slane %v4087, 4
      %v4090 = vshll.u32 %v4006, 16
      %v4092 = vrot.slane %v4090, 5
      %v4093 = vsel %vm1443, %v4088, %v4092
      %v4094 = vshrl.u32 %v4006, 16
      %v4096 = vrot.slane %v4094, 4
      %v4097 = vor.u32 %v4096, %v4092
      %v4098 = vrot.slane %v4097, 4
      %v4100 = vshll.u32 %v4007, 16
      %v4102 = vrot.slane %v4100, 5
      %v4103 = vsel %vm1443, %v4098, %v4102
      %v4105 = vshrl.u32 %v4008, 16
      %v4107 = vrot.slane %v4105, 4
      %v4108 = vshll.u32 %v4008, 16
      %v4110 = vrot.slane %v4108, 5
      %v4111 = vor.u32 %v4107, %v4110
      %v4112 = vrot.slane %v4111, 4
      %v4114 = vshll.u32 %v4009, 16
      %v4116 = vrot.slane %v4114, 5
      %v4117 = vsel %vm1443, %v4112, %v4116
      %v4118 = vshrl.u32 %v4009, 16
      %v4120 = vrot.slane %v4118, 4
      %v4121 = vor.u32 %v4120, %v4116
      %v4122 = vrot.slane %v4121, 4
      %v4124 = vshll.u32 %v4010, 16
      %v4126 = vrot.slane %v4124, 5
      %v4127 = vsel %vm1443, %v4122, %v4126
      %v4129 = vshrl.u32 %v4011, 16
      %v4131 = vrot.slane %v4129, 4
      %v4132 = vshll.u32 %v4011, 16
      %v4134 = vrot.slane %v4132, 5
      %v4135 = vor.u32 %v4131, %v4134
      %v4136 = vrot.slane %v4135, 4
      %v4138 = vshll.u32 %v4012, 16
      %v4140 = vrot.slane %v4138, 5
      %v4141 = vsel %vm1443, %v4136, %v4140
      %v4142 = vshrl.u32 %v4012, 16
      %v4144 = vrot.slane %v4142, 4
      %v4145 = vor.u32 %v4144, %v4140
      %v4146 = vrot.slane %v4145, 4
      %v4148 = vshll.u32 %v4013, 16
      %v4150 = vrot.slane %v4148, 5
      %v4151 = vsel %vm1443, %v4146, %v4150
      %v4153 = vshrl.u32 %v4014, 16
      %v4155 = vrot.slane %v4153, 4
      %v4156 = vshll.u32 %v4014, 16
      %v4158 = vrot.slane %v4156, 5
      %v4159 = vor.u32 %v4155, %v4158
      %v4160 = vrot.slane %v4159, 4
      %v4162 = vshll.u32 %v4015, 16
      %v4164 = vrot.slane %v4162, 5
      %v4165 = vsel %vm1443, %v4160, %v4164
      %v4166 = vshrl.u32 %v4015, 16
      %v4168 = vrot.slane %v4166, 4
      %v4169 = vor.u32 %v4168, %v4164
      %v4170 = vrot.slane %v4169, 4
      %v4172 = vshll.u32 %v4016, 16
      %v4174 = vrot.slane %v4172, 5
      %v4175 = vsel %vm1443, %v4170, %v4174
      %v4177 = vshrl.u32 %v4017, 16
      %v4179 = vrot.slane %v4177, 4
      %v4180 = vshll.u32 %v4017, 16
      %v4182 = vrot.slane %v4180, 5
      %v4183 = vor.u32 %v4179, %v4182
      %v4184 = vrot.slane %v4183, 4
      %v4186 = vshll.u32 %v4018, 16
      %v4188 = vrot.slane %v4186, 5
      %v4189 = vsel %vm1443, %v4184, %v4188
      %v4190 = vshrl.u32 %v4018, 16
      %v4192 = vrot.slane %v4190, 4
      %v4193 = vor.u32 %v4192, %v4188
      %v4194 = vrot.slane %v4193, 4
      %v4196 = vshll.u32 %v4019, 16
      %v4198 = vrot.slane %v4196, 5
      %v4199 = vsel %vm1443, %v4194, %v4198
      %v4201 = vshrl.u32 %v4020, 16
      %v4203 = vrot.slane %v4201, 4
      %v4204 = vshll.u32 %v4020, 16
      %v4206 = vrot.slane %v4204, 5
      %v4207 = vor.u32 %v4203, %v4206
      %v4208 = vrot.slane %v4207, 4
      %v4210 = vshll.u32 %v4021, 16
      %v4212 = vrot.slane %v4210, 5
      %v4213 = vsel %vm1443, %v4208, %v4212
      %v4214 = vshrl.u32 %v4021, 16
      %v4216 = vrot.slane %v4214, 4
      %v4217 = vor.u32 %v4216, %v4212
      %v4218 = vrot.slane %v4217, 4
      %v4220 = vshll.u32 %v4022, 16
      %v4222 = vrot.slane %v4220, 5
      %v4223 = vsel %vm1443, %v4218, %v4222
      %v4225 = vshrl.u32 %v4023, 16
      %v4227 = vrot.slane %v4225, 4
      %v4228 = vshll.u32 %v4023, 16
      %v4230 = vrot.slane %v4228, 5
      %v4231 = vor.u32 %v4227, %v4230
      %v4232 = vrot.slane %v4231, 4
      %v4234 = vshll.u32 %v4024, 16
      %v4236 = vrot.slane %v4234, 5
      %v4237 = vsel %vm1443, %v4232, %v4236
      %v4238 = vshrl.u32 %v4024, 16
      %v4240 = vrot.slane %v4238, 4
      %v4241 = vor.u32 %v4240, %v4236
      %v4242 = vrot.slane %v4241, 4
      %v4244 = vshll.u32 %v4025, 16
      %v4246 = vrot.slane %v4244, 5
      %v4247 = vsel %vm1443, %v4242, %v4246
      %v4249 = vshrl.u32 %v4026, 16
      %v4251 = vrot.slane %v4249, 4
      %v4252 = vshll.u32 %v4026, 16
      %v4254 = vrot.slane %v4252, 5
      %v4255 = vor.u32 %v4251, %v4254
      %v4256 = vrot.slane %v4255, 4
      %v4258 = vshll.u32 %v4027, 16
      %v4260 = vrot.slane %v4258, 5
      %v4261 = vsel %vm1443, %v4256, %v4260
      %v4262 = vshrl.u32 %v4027, 16
      %v4264 = vrot.slane %v4262, 4
      %v4265 = vor.u32 %v4264, %v4260
      %v4266 = vrot.slane %v4265, 4
      %v4268 = vshll.u32 %v4028, 16
      %v4270 = vrot.slane %v4268, 5
      %v4271 = vsel %vm1443, %v4266, %v4270
      %v4273 = vshrl.u32 %v4029, 16
      %v4275 = vrot.slane %v4273, 4
      %v4276 = vshll.u32 %v4029, 16
      %v4278 = vrot.slane %v4276, 5
      %v4279 = vor.u32 %v4275, %v4278
      %v4280 = vrot.slane %v4279, 4
      %v4282 = vshll.u32 %v4030, 16
      %v4284 = vrot.slane %v4282, 5
      %v4285 = vsel %vm1443, %v4280, %v4284
      %v4286 = vshrl.u32 %v4030, 16
      %v4288 = vrot.slane %v4286, 4
      %v4289 = vor.u32 %v4288, %v4284
      %v4290 = vrot.slane %v4289, 4
      %v4292 = vshll.u32 %v4031, 16
      %v4294 = vrot.slane %v4292, 5
      %v4295 = vsel %vm1443, %v4290, %v4294
      %v4297 = vshrl.u32 %v4032, 16
      %v4299 = vrot.slane %v4297, 4
      %v4300 = vshll.u32 %v4032, 16
      %v4302 = vrot.slane %v4300, 5
      %v4303 = vor.u32 %v4299, %v4302
      %v4304 = vrot.slane %v4303, 4
      %v4306 = vshll.u32 %v4033, 16
      %v4308 = vrot.slane %v4306, 5
      %v4309 = vsel %vm1443, %v4304, %v4308
      %v4310 = vshrl.u32 %v4033, 16
      %v4312 = vrot.slane %v4310, 4
      %v4313 = vor.u32 %v4312, %v4308
      %v4314 = vrot.slane %v4313, 4
      %v4316 = vshll.u32 %v4034, 16
      %v4318 = vrot.slane %v4316, 5
      %v4319 = vsel %vm1443, %v4314, %v4318
      %v4321 = vshrl.u32 %v4035, 16
      %v4323 = vrot.slane %v4321, 4
      %v4324 = vshll.u32 %v4035, 16
      %v4326 = vrot.slane %v4324, 5
      %v4327 = vor.u32 %v4323, %v4326
      %v4328 = vrot.slane %v4327, 4
      %v4330 = vshll.u32 %v4036, 16
      %v4332 = vrot.slane %v4330, 5
      %v4333 = vsel %vm1443, %v4328, %v4332
      %v4334 = vshrl.u32 %v4036, 16
      %v4336 = vrot.slane %v4334, 4
      %v4337 = vor.u32 %v4336, %v4332
      %v4338 = vrot.slane %v4337, 4
      %v4340 = vshll.u32 %v4037, 16
      %v4342 = vrot.slane %v4340, 5
      %v4343 = vsel %vm1443, %v4338, %v4342
      %v4345 = vshrl.u32 %v4038, 16
      %v4347 = vrot.slane %v4345, 4
      %v4348 = vshll.u32 %v4038, 16
      %v4350 = vrot.slane %v4348, 5
      %v4351 = vor.u32 %v4347, %v4350
      %v4352 = vrot.slane %v4351, 4
      %v4354 = vshll.u32 %v4039, 16
      %v4356 = vrot.slane %v4354, 5
      %v4357 = vsel %vm1443, %v4352, %v4356
      %v4358 = vshrl.u32 %v4039, 16
      %v4360 = vrot.slane %v4358, 4
      %v4361 = vor.u32 %v4360, %v4356
      %v4362 = vrot.slane %v4361, 4
      %v4364 = vshll.u32 %v4040, 16
      %v4366 = vrot.slane %v4364, 5
      %v4367 = vsel %vm1443, %v4362, %v4366
      %v4369 = vshrl.u32 %v4041, 16
      %v4371 = vrot.slane %v4369, 4
      %v4372 = vshll.u32 %v4041, 16
      %v4374 = vrot.slane %v4372, 5
      %v4375 = vor.u32 %v4371, %v4374
      %v4376 = vrot.slane %v4375, 4
      %v4378 = vshll.u32 %v4042, 16
      %v4380 = vrot.slane %v4378, 5
      %v4381 = vsel %vm1443, %v4376, %v4380
      %v4382 = vshrl.u32 %v4042, 16
      %v4384 = vrot.slane %v4382, 4
      %v4385 = vor.u32 %v4384, %v4380
      %v4386 = vrot.slane %v4385, 4
      %v4388 = vshll.u32 %v4043, 16
      %v4390 = vrot.slane %v4388, 5
      %v4391 = vsel %vm1443, %v4386, %v4390
      %v4393 = vshrl.u32 %v4044, 16
      %v4395 = vrot.slane %v4393, 4
      %v4396 = vshll.u32 %v4044, 16
      %v4398 = vrot.slane %v4396, 5
      %v4399 = vor.u32 %v4395, %v4398
      %v4400 = vrot.slane %v4399, 4
      %v4402 = vshll.u32 %v4045, 16
      %v4404 = vrot.slane %v4402, 5
      %v4405 = vsel %vm1443, %v4400, %v4404
      %v4406 = vshrl.u32 %v4045, 16
      %v4408 = vrot.slane %v4406, 4
      %v4409 = vor.u32 %v4408, %v4404
      %v4410 = vrot.slane %v4409, 4
      %v4412 = vshll.u32 %v4046, 16
      %v4414 = vrot.slane %v4412, 5
      %v4415 = vsel %vm1443, %v4410, %v4414
      %v4417 = vshrl.u32 %v4047, 16
      %v4419 = vrot.slane %v4417, 4
      %v4420 = vshll.u32 %v4047, 16
      %v4422 = vrot.slane %v4420, 5
      %v4423 = vor.u32 %v4419, %v4422
      %v4424 = vrot.slane %v4423, 4
      %v4426 = vshll.u32 %v4048, 16
      %v4428 = vrot.slane %v4426, 5
      %v4429 = vsel %vm1443, %v4424, %v4428
      %v4430 = vshrl.u32 %v4048, 16
      %v4432 = vrot.slane %v4430, 4
      %v4433 = vor.u32 %v4432, %v4428
      %v4434 = vrot.slane %v4433, 4
      %v4436 = vshll.u32 %v4049, 16
      %v4438 = vrot.slane %v4436, 5
      %v4439 = vsel %vm1443, %v4434, %v4438
      %v4488 = vrot.slane %v4002, 5
      %v4489 = vrot.slane %v4488, 4
      %v4490 = vrot.slane %v4003, 5
      %v4491 = vsel %vm1878, %v4489, %v4490
      %v4492 = vrot.slane %v4490, 4
      %v4493 = vrot.slane %v4004, 5
      %v4494 = vsel %vm1878, %v4492, %v4493
      %v4495 = vrot.slane %v4005, 5
      %v4496 = vrot.slane %v4495, 4
      %v4497 = vrot.slane %v4006, 5
      %v4498 = vsel %vm1878, %v4496, %v4497
      %v4499 = vrot.slane %v4497, 4
      %v4500 = vrot.slane %v4007, 5
      %v4501 = vsel %vm1878, %v4499, %v4500
      %v4502 = vrot.slane %v4008, 5
      %v4503 = vrot.slane %v4502, 4
      %v4504 = vrot.slane %v4009, 5
      %v4505 = vsel %vm1878, %v4503, %v4504
      %v4506 = vrot.slane %v4504, 4
      %v4507 = vrot.slane %v4010, 5
      %v4508 = vsel %vm1878, %v4506, %v4507
      %v4509 = vrot.slane %v4011, 5
      %v4510 = vrot.slane %v4509, 4
      %v4511 = vrot.slane %v4012, 5
      %v4512 = vsel %vm1878, %v4510, %v4511
      %v4513 = vrot.slane %v4511, 4
      %v4514 = vrot.slane %v4013, 5
      %v4515 = vsel %vm1878, %v4513, %v4514
      %v4516 = vrot.slane %v4014, 5
      %v4517 = vrot.slane %v4516, 4
      %v4518 = vrot.slane %v4015, 5
      %v4519 = vsel %vm1878, %v4517, %v4518
      %v4520 = vrot.slane %v4518, 4
      %v4521 = vrot.slane %v4016, 5
      %v4522 = vsel %vm1878, %v4520, %v4521
      %v4523 = vrot.slane %v4017, 5
      %v4524 = vrot.slane %v4523, 4
      %v4525 = vrot.slane %v4018, 5
      %v4526 = vsel %vm1878, %v4524, %v4525
      %v4527 = vrot.slane %v4525, 4
      %v4528 = vrot.slane %v4019, 5
      %v4529 = vsel %vm1878, %v4527, %v4528
      %v4530 = vrot.slane %v4020, 5
      %v4531 = vrot.slane %v4530, 4
      %v4532 = vrot.slane %v4021, 5
      %v4533 = vsel %vm1878, %v4531, %v4532
      %v4534 = vrot.slane %v4532, 4
      %v4535 = vrot.slane %v4022, 5
      %v4536 = vsel %vm1878, %v4534, %v4535
      %v4537 = vrot.slane %v4023, 5
      %v4538 = vrot.slane %v4537, 4
      %v4539 = vrot.slane %v4024, 5
      %v4540 = vsel %vm1878, %v4538, %v4539
      %v4541 = vrot.slane %v4539, 4
      %v4542 = vrot.slane %v4025, 5
      %v4543 = vsel %vm1878, %v4541, %v4542
      %v4544 = vrot.slane %v4026, 5
      %v4545 = vrot.slane %v4544, 4
      %v4546 = vrot.slane %v4027, 5
      %v4547 = vsel %vm1878, %v4545, %v4546
      %v4548 = vrot.slane %v4546, 4
      %v4549 = vrot.slane %v4028, 5
      %v4550 = vsel %vm1878, %v4548, %v4549
      %v4551 = vrot.slane %v4029, 5
      %v4552 = vrot.slane %v4551, 4
      %v4553 = vrot.slane %v4030, 5
      %v4554 = vsel %vm1878, %v4552, %v4553
      %v4555 = vrot.slane %v4553, 4
      %v4556 = vrot.slane %v4031, 5
      %v4557 = vsel %vm1878, %v4555, %v4556
      %v4558 = vrot.slane %v4032, 5
      %v4559 = vrot.slane %v4558, 4
      %v4560 = vrot.slane %v4033, 5
      %v4561 = vsel %vm1878, %v4559, %v4560
      %v4562 = vrot.slane %v4560, 4
      %v4563 = vrot.slane %v4034, 5
      %v4564 = vsel %vm1878, %v4562, %v4563
      %v4565 = vrot.slane %v4035, 5
      %v4566 = vrot.slane %v4565, 4
      %v4567 = vrot.slane %v4036, 5
      %v4568 = vsel %vm1878, %v4566, %v4567
      %v4569 = vrot.slane %v4567, 4
      %v4570 = vrot.slane %v4037, 5
      %v4571 = vsel %vm1878, %v4569, %v4570
      %v4572 = vrot.slane %v4038, 5
      %v4573 = vrot.slane %v4572, 4
      %v4574 = vrot.slane %v4039, 5
      %v4575 = vsel %vm1878, %v4573, %v4574
      %v4576 = vrot.slane %v4574, 4
      %v4577 = vrot.slane %v4040, 5
      %v4578 = vsel %vm1878, %v4576, %v4577
      %v4579 = vrot.slane %v4041, 5
      %v4580 = vrot.slane %v4579, 4
      %v4581 = vrot.slane %v4042, 5
      %v4582 = vsel %vm1878, %v4580, %v4581
      %v4583 = vrot.slane %v4581, 4
      %v4584 = vrot.slane %v4043, 5
      %v4585 = vsel %vm1878, %v4583, %v4584
      %v4586 = vrot.slane %v4044, 5
      %v4587 = vrot.slane %v4586, 4
      %v4588 = vrot.slane %v4045, 5
      %v4589 = vsel %vm1878, %v4587, %v4588
      %v4590 = vrot.slane %v4588, 4
      %v4591 = vrot.slane %v4046, 5
      %v4592 = vsel %vm1878, %v4590, %v4591
      %v4593 = vrot.slane %v4047, 5
      %v4594 = vrot.slane %v4593, 4
      %v4595 = vrot.slane %v4048, 5
      %v4596 = vsel %vm1878, %v4594, %v4595
      %v4597 = vrot.slane %v4595, 4
      %v4598 = vrot.slane %v4049, 5
      %v4599 = vsel %vm1878, %v4597, %v4598
      %v4601 = vshrl.u32 %v4050, 16
      %v4603 = vrot.slane %v4601, 4
      %v4604 = vshll.u32 %v4050, 16
      %v4606 = vrot.slane %v4604, 5
      %v4607 = vor.u32 %v4603, %v4606
      %v4608 = vrot.slane %v4607, 4
      %v4610 = vshll.u32 %v4051, 16
      %v4612 = vrot.slane %v4610, 5
      %v4613 = vsel %vm1443, %v4608, %v4612
      %v4614 = vshrl.u32 %v4051, 16
      %v4616 = vrot.slane %v4614, 4
      %v4617 = vor.u32 %v4616, %v4612
      %v4618 = vrot.slane %v4617, 4
      %v4620 = vshll.u32 %v4052, 16
      %v4622 = vrot.slane %v4620, 5
      %v4623 = vsel %vm1443, %v4618, %v4622
      %v4627 = vrot.slane %v4050, 5
      %v4628 = vrot.slane %v4627, 4
      %v4629 = vrot.slane %v4051, 5
      %v4630 = vsel %vm1878, %v4628, %v4629
      %v4631 = vrot.slane %v4629, 4
      %v4632 = vrot.slane %v4052, 5
      %v4633 = vsel %vm1878, %v4631, %v4632
      %v4635 = vshrl.u32 %v4053, 16
      %v4637 = vrot.slane %v4635, 4
      %v4638 = vshll.u32 %v4053, 16
      %v4640 = vrot.slane %v4638, 5
      %v4641 = vor.u32 %v4637, %v4640
      %v4642 = vrot.slane %v4641, 4
      %v4644 = vshll.u32 %v4054, 16
      %v4646 = vrot.slane %v4644, 5
      %v4647 = vsel %vm1443, %v4642, %v4646
      %v4648 = vshrl.u32 %v4054, 16
      %v4650 = vrot.slane %v4648, 4
      %v4651 = vor.u32 %v4650, %v4646
      %v4652 = vrot.slane %v4651, 4
      %v4654 = vshll.u32 %v4055, 16
      %v4656 = vrot.slane %v4654, 5
      %v4657 = vsel %vm1443, %v4652, %v4656
      %v4661 = vrot.slane %v4053, 5
      %v4662 = vrot.slane %v4661, 4
      %v4663 = vrot.slane %v4054, 5
      %v4664 = vsel %vm1878, %v4662, %v4663
      %v4665 = vrot.slane %v4663, 4
      %v4666 = vrot.slane %v4055, 5
      %v4667 = vsel %vm1878, %v4665, %v4666
      %v4668 = vunpack.c.l.b16 %v4002
      %v4669 = vunpack.c.l.b16 %v4003
      %v4670 = vunpack.c.l.b16 %v4005
      %v4671 = vunpack.c.l.b16 %v4006
      %v4672 = vunpack.c.l.b16 %v4008
      %v4673 = vunpack.c.l.b16 %v4009
      %v4674 = vunpack.c.l.b16 %v4011
      %v4675 = vunpack.c.l.b16 %v4012
      %v4676 = vunpack.c.l.b16 %v4014
      %v4677 = vunpack.c.l.b16 %v4015
      %v4678 = vunpack.c.l.b16 %v4017
      %v4679 = vunpack.c.l.b16 %v4018
      %v4680 = vunpack.c.l.b16 %v4020
      %v4681 = vunpack.c.l.b16 %v4021
      %v4682 = vunpack.c.l.b16 %v4023
      %v4683 = vunpack.c.l.b16 %v4024
      %v4684 = vunpack.c.l.b16 %v4026
      %v4685 = vunpack.c.l.b16 %v4027
      %v4686 = vunpack.c.l.b16 %v4029
      %v4687 = vunpack.c.l.b16 %v4030
      %v4688 = vunpack.c.l.b16 %v4032
      %v4689 = vunpack.c.l.b16 %v4033
      %v4690 = vunpack.c.l.b16 %v4035
      %v4691 = vunpack.c.l.b16 %v4036
      %v4692 = vunpack.c.l.b16 %v4038
      %v4693 = vunpack.c.l.b16 %v4039
      %v4694 = vunpack.c.l.b16 %v4041
      %v4695 = vunpack.c.l.b16 %v4042
      %v4696 = vunpack.c.l.b16 %v4044
      %v4697 = vunpack.c.l.b16 %v4045
      %v4698 = vunpack.c.l.b16 %v4047
      %v4699 = vunpack.c.l.b16 %v4048
      %v4700 = vpack.c.b16 %v4669, %v4668
      %v4701 = vpack.c.b16 %v4671, %v4670
      %v4702 = vpack.c.b16 %v4673, %v4672
      %v4703 = vpack.c.b16 %v4675, %v4674
      %v4704 = vpack.c.b16 %v4677, %v4676
      %v4705 = vpack.c.b16 %v4679, %v4678
      %v4706 = vpack.c.b16 %v4681, %v4680
      %v4707 = vpack.c.b16 %v4683, %v4682
      %v4708 = vpack.c.b16 %v4685, %v4684
      %v4709 = vpack.c.b16 %v4687, %v4686
      %v4710 = vpack.c.b16 %v4689, %v4688
      %v4711 = vpack.c.b16 %v4691, %v4690
      %v4712 = vpack.c.b16 %v4693, %v4692
      %v4713 = vpack.c.b16 %v4695, %v4694
      %v4714 = vpack.c.b16 %v4697, %v4696
      %v4715 = vpack.c.b16 %v4699, %v4698
      %v4716 = vunpack.c.l.b16 %v4069
      %v4717 = vunpack.c.l.b16 %v4079
      %v4718 = vunpack.c.l.b16 %v4093
      %v4719 = vunpack.c.l.b16 %v4103
      %v4720 = vunpack.c.l.b16 %v4117
      %v4721 = vunpack.c.l.b16 %v4127
      %v4722 = vunpack.c.l.b16 %v4141
      %v4723 = vunpack.c.l.b16 %v4151
      %v4724 = vunpack.c.l.b16 %v4165
      %v4725 = vunpack.c.l.b16 %v4175
      %v4726 = vunpack.c.l.b16 %v4189
      %v4727 = vunpack.c.l.b16 %v4199
      %v4728 = vunpack.c.l.b16 %v4213
      %v4729 = vunpack.c.l.b16 %v4223
      %v4730 = vunpack.c.l.b16 %v4237
      %v4731 = vunpack.c.l.b16 %v4247
      %v4732 = vunpack.c.l.b16 %v4261
      %v4733 = vunpack.c.l.b16 %v4271
      %v4734 = vunpack.c.l.b16 %v4285
      %v4735 = vunpack.c.l.b16 %v4295
      %v4736 = vunpack.c.l.b16 %v4309
      %v4737 = vunpack.c.l.b16 %v4319
      %v4738 = vunpack.c.l.b16 %v4333
      %v4739 = vunpack.c.l.b16 %v4343
      %v4740 = vunpack.c.l.b16 %v4357
      %v4741 = vunpack.c.l.b16 %v4367
      %v4742 = vunpack.c.l.b16 %v4381
      %v4743 = vunpack.c.l.b16 %v4391
      %v4744 = vunpack.c.l.b16 %v4405
      %v4745 = vunpack.c.l.b16 %v4415
      %v4746 = vunpack.c.l.b16 %v4429
      %v4747 = vunpack.c.l.b16 %v4439
      %v4748 = vpack.c.b16 %v4717, %v4716
      %v4749 = vpack.c.b16 %v4719, %v4718
      %v4750 = vpack.c.b16 %v4721, %v4720
      %v4751 = vpack.c.b16 %v4723, %v4722
      %v4752 = vpack.c.b16 %v4725, %v4724
      %v4753 = vpack.c.b16 %v4727, %v4726
      %v4754 = vpack.c.b16 %v4729, %v4728
      %v4755 = vpack.c.b16 %v4731, %v4730
      %v4756 = vpack.c.b16 %v4733, %v4732
      %v4757 = vpack.c.b16 %v4735, %v4734
      %v4758 = vpack.c.b16 %v4737, %v4736
      %v4759 = vpack.c.b16 %v4739, %v4738
      %v4760 = vpack.c.b16 %v4741, %v4740
      %v4761 = vpack.c.b16 %v4743, %v4742
      %v4762 = vpack.c.b16 %v4745, %v4744
      %v4763 = vpack.c.b16 %v4747, %v4746
      %4764 = vrot.lane.b32.xlu0 %v4748, 16
      %v4765 = vpop.permute.xlu0 %4764
      %4766 = vrot.lane.b32.xlu0 %v4749, 16
      %v4767 = vpop.permute.xlu0 %4766
      %4768 = vrot.lane.b32.xlu0 %v4750, 16
      %v4769 = vpop.permute.xlu0 %4768
      %4770 = vrot.lane.b32.xlu0 %v4751, 16
      %v4771 = vpop.permute.xlu0 %4770
      %4772 = vrot.lane.b32.xlu0 %v4752, 16
      %v4773 = vpop.permute.xlu0 %4772
      %4774 = vrot.lane.b32.xlu0 %v4753, 16
      %v4775 = vpop.permute.xlu0 %4774
      %4776 = vrot.lane.b32.xlu0 %v4754, 16
      %v4777 = vpop.permute.xlu0 %4776
      %4778 = vrot.lane.b32.xlu0 %v4755, 16
      %v4779 = vpop.permute.xlu0 %4778
      %4780 = vrot.lane.b32.xlu0 %v4756, 16
      %v4781 = vpop.permute.xlu0 %4780
      %4782 = vrot.lane.b32.xlu0 %v4757, 16
      %v4783 = vpop.permute.xlu0 %4782
      %4784 = vrot.lane.b32.xlu0 %v4758, 16
      %v4785 = vpop.permute.xlu0 %4784
      %4786 = vrot.lane.b32.xlu0 %v4759, 16
      %v4787 = vpop.permute.xlu0 %4786
      %4788 = vrot.lane.b32.xlu0 %v4760, 16
      %v4789 = vpop.permute.xlu0 %4788
      %4790 = vrot.lane.b32.xlu0 %v4761, 16
      %v4791 = vpop.permute.xlu0 %4790
      %4792 = vrot.lane.b32.xlu0 %v4762, 16
      %v4793 = vpop.permute.xlu0 %4792
      %4794 = vrot.lane.b32.xlu0 %v4763, 16
      %v4795 = vpop.permute.xlu0 %4794
      %v4796 = vunpack.c.l.b16 %v4491
      %v4797 = vunpack.c.l.b16 %v4494
      %v4798 = vunpack.c.l.b16 %v4498
      %v4799 = vunpack.c.l.b16 %v4501
      %v4800 = vunpack.c.l.b16 %v4505
      %v4801 = vunpack.c.l.b16 %v4508
      %v4802 = vunpack.c.l.b16 %v4512
      %v4803 = vunpack.c.l.b16 %v4515
      %v4804 = vunpack.c.l.b16 %v4519
      %v4805 = vunpack.c.l.b16 %v4522
      %v4806 = vunpack.c.l.b16 %v4526
      %v4807 = vunpack.c.l.b16 %v4529
      %v4808 = vunpack.c.l.b16 %v4533
      %v4809 = vunpack.c.l.b16 %v4536
      %v4810 = vunpack.c.l.b16 %v4540
      %v4811 = vunpack.c.l.b16 %v4543
      %v4812 = vunpack.c.l.b16 %v4547
      %v4813 = vunpack.c.l.b16 %v4550
      %v4814 = vunpack.c.l.b16 %v4554
      %v4815 = vunpack.c.l.b16 %v4557
      %v4816 = vunpack.c.l.b16 %v4561
      %v4817 = vunpack.c.l.b16 %v4564
      %v4818 = vunpack.c.l.b16 %v4568
      %v4819 = vunpack.c.l.b16 %v4571
      %v4820 = vunpack.c.l.b16 %v4575
      %v4821 = vunpack.c.l.b16 %v4578
      %v4822 = vunpack.c.l.b16 %v4582
      %v4823 = vunpack.c.l.b16 %v4585
      %v4824 = vunpack.c.l.b16 %v4589
      %v4825 = vunpack.c.l.b16 %v4592
      %v4826 = vunpack.c.l.b16 %v4596
      %v4827 = vunpack.c.l.b16 %v4599
      %v4828 = vpack.c.b16 %v4797, %v4796
      %v4829 = vpack.c.b16 %v4799, %v4798
      %v4830 = vpack.c.b16 %v4801, %v4800
      %v4831 = vpack.c.b16 %v4803, %v4802
      %v4832 = vpack.c.b16 %v4805, %v4804
      %v4833 = vpack.c.b16 %v4807, %v4806
      %v4834 = vpack.c.b16 %v4809, %v4808
      %v4835 = vpack.c.b16 %v4811, %v4810
      %v4836 = vpack.c.b16 %v4813, %v4812
      %v4837 = vpack.c.b16 %v4815, %v4814
      %v4838 = vpack.c.b16 %v4817, %v4816
      %v4839 = vpack.c.b16 %v4819, %v4818
      %v4840 = vpack.c.b16 %v4821, %v4820
      %v4841 = vpack.c.b16 %v4823, %v4822
      %v4842 = vpack.c.b16 %v4825, %v4824
      %v4843 = vpack.c.b16 %v4827, %v4826
      %4844 = vrot.lane.b32.xlu0 %v4828, 32
      %v4845 = vpop.permute.xlu0 %4844
      %4846 = vrot.lane.b32.xlu0 %v4829, 32
      %v4847 = vpop.permute.xlu0 %4846
      %4848 = vrot.lane.b32.xlu0 %v4830, 32
      %v4849 = vpop.permute.xlu0 %4848
      %4850 = vrot.lane.b32.xlu0 %v4831, 32
      %v4851 = vpop.permute.xlu0 %4850
      %4852 = vrot.lane.b32.xlu0 %v4832, 32
      %v4853 = vpop.permute.xlu0 %4852
      %4854 = vrot.lane.b32.xlu0 %v4833, 32
      %v4855 = vpop.permute.xlu0 %4854
      %4856 = vrot.lane.b32.xlu0 %v4834, 32
      %v4857 = vpop.permute.xlu0 %4856
      %4858 = vrot.lane.b32.xlu0 %v4835, 32
      %v4859 = vpop.permute.xlu0 %4858
      %4860 = vrot.lane.b32.xlu0 %v4836, 32
      %v4861 = vpop.permute.xlu0 %4860
      %4862 = vrot.lane.b32.xlu0 %v4837, 32
      %v4863 = vpop.permute.xlu0 %4862
      %4864 = vrot.lane.b32.xlu0 %v4838, 32
      %v4865 = vpop.permute.xlu0 %4864
      %4866 = vrot.lane.b32.xlu0 %v4839, 32
      %v4867 = vpop.permute.xlu0 %4866
      %4868 = vrot.lane.b32.xlu0 %v4840, 32
      %v4869 = vpop.permute.xlu0 %4868
      %4870 = vrot.lane.b32.xlu0 %v4841, 32
      %v4871 = vpop.permute.xlu0 %4870
      %4872 = vrot.lane.b32.xlu0 %v4842, 32
      %v4873 = vpop.permute.xlu0 %4872
      %4874 = vrot.lane.b32.xlu0 %v4843, 32
      %v4875 = vpop.permute.xlu0 %4874
      %v4876 = vunpack.c.l.b16 %v4050
      %v4877 = vunpack.c.l.b16 %v4051
      %v4878 = vpack.c.b16 %v4877, %v4876
      %4879 = vrot.lane.b32.xlu0 %v4701, 48
      %v4880 = vpop.permute.xlu0 %4879
      %4881 = vrot.lane.b32.xlu0 %v4702, 48
      %v4882 = vpop.permute.xlu0 %4881
      %4883 = vrot.lane.b32.xlu0 %v4703, 48
      %v4884 = vpop.permute.xlu0 %4883
      %4885 = vrot.lane.b32.xlu0 %v4704, 48
      %v4886 = vpop.permute.xlu0 %4885
      %4887 = vrot.lane.b32.xlu0 %v4705, 48
      %v4888 = vpop.permute.xlu0 %4887
      %4889 = vrot.lane.b32.xlu0 %v4706, 48
      %v4890 = vpop.permute.xlu0 %4889
      %4891 = vrot.lane.b32.xlu0 %v4707, 48
      %v4892 = vpop.permute.xlu0 %4891
      %4893 = vrot.lane.b32.xlu0 %v4708, 48
      %v4894 = vpop.permute.xlu0 %4893
      %4895 = vrot.lane.b32.xlu0 %v4709, 48
      %v4896 = vpop.permute.xlu0 %4895
      %4897 = vrot.lane.b32.xlu0 %v4710, 48
      %v4898 = vpop.permute.xlu0 %4897
      %4899 = vrot.lane.b32.xlu0 %v4711, 48
      %v4900 = vpop.permute.xlu0 %4899
      %4901 = vrot.lane.b32.xlu0 %v4712, 48
      %v4902 = vpop.permute.xlu0 %4901
      %4903 = vrot.lane.b32.xlu0 %v4713, 48
      %v4904 = vpop.permute.xlu0 %4903
      %4905 = vrot.lane.b32.xlu0 %v4714, 48
      %v4906 = vpop.permute.xlu0 %4905
      %4907 = vrot.lane.b32.xlu0 %v4715, 48
      %v4908 = vpop.permute.xlu0 %4907
      %4909 = vrot.lane.b32.xlu0 %v4878, 48
      %v4910 = vpop.permute.xlu0 %4909
      %v4911 = vunpack.c.l.b16 %v4613
      %v4912 = vunpack.c.l.b16 %v4623
      %v4913 = vpack.c.b16 %v4912, %v4911
      %4914 = vrot.lane.b32.xlu0 %v4749, 64
      %v4915 = vpop.permute.xlu0 %4914
      %4916 = vrot.lane.b32.xlu0 %v4750, 64
      %v4917 = vpop.permute.xlu0 %4916
      %4918 = vrot.lane.b32.xlu0 %v4751, 64
      %v4919 = vpop.permute.xlu0 %4918
      %4920 = vrot.lane.b32.xlu0 %v4752, 64
      %v4921 = vpop.permute.xlu0 %4920
      %4922 = vrot.lane.b32.xlu0 %v4753, 64
      %v4923 = vpop.permute.xlu0 %4922
      %4924 = vrot.lane.b32.xlu0 %v4754, 64
      %v4925 = vpop.permute.xlu0 %4924
      %4926 = vrot.lane.b32.xlu0 %v4755, 64
      %v4927 = vpop.permute.xlu0 %4926
      %4928 = vrot.lane.b32.xlu0 %v4756, 64
      %v4929 = vpop.permute.xlu0 %4928
      %4930 = vrot.lane.b32.xlu0 %v4757, 64
      %v4931 = vpop.permute.xlu0 %4930
      %4932 = vrot.lane.b32.xlu0 %v4758, 64
      %v4933 = vpop.permute.xlu0 %4932
      %4934 = vrot.lane.b32.xlu0 %v4759, 64
      %v4935 = vpop.permute.xlu0 %4934
      %4936 = vrot.lane.b32.xlu0 %v4760, 64
      %v4937 = vpop.permute.xlu0 %4936
      %4938 = vrot.lane.b32.xlu0 %v4761, 64
      %v4939 = vpop.permute.xlu0 %4938
      %4940 = vrot.lane.b32.xlu0 %v4762, 64
      %v4941 = vpop.permute.xlu0 %4940
      %4942 = vrot.lane.b32.xlu0 %v4763, 64
      %v4943 = vpop.permute.xlu0 %4942
      %4944 = vrot.lane.b32.xlu0 %v4913, 64
      %v4945 = vpop.permute.xlu0 %4944
      %v4946 = vunpack.c.l.b16 %v4630
      %v4947 = vunpack.c.l.b16 %v4633
      %v4948 = vpack.c.b16 %v4947, %v4946
      %4949 = vrot.lane.b32.xlu0 %v4829, 80
      %v4950 = vpop.permute.xlu0 %4949
      %4951 = vrot.lane.b32.xlu0 %v4830, 80
      %v4952 = vpop.permute.xlu0 %4951
      %4953 = vrot.lane.b32.xlu0 %v4831, 80
      %v4954 = vpop.permute.xlu0 %4953
      %4955 = vrot.lane.b32.xlu0 %v4832, 80
      %v4956 = vpop.permute.xlu0 %4955
      %4957 = vrot.lane.b32.xlu0 %v4833, 80
      %v4958 = vpop.permute.xlu0 %4957
      %4959 = vrot.lane.b32.xlu0 %v4834, 80
      %v4960 = vpop.permute.xlu0 %4959
      %4961 = vrot.lane.b32.xlu0 %v4835, 80
      %v4962 = vpop.permute.xlu0 %4961
      %4963 = vrot.lane.b32.xlu0 %v4836, 80
      %v4964 = vpop.permute.xlu0 %4963
      %4965 = vrot.lane.b32.xlu0 %v4837, 80
      %v4966 = vpop.permute.xlu0 %4965
      %4967 = vrot.lane.b32.xlu0 %v4838, 80
      %v4968 = vpop.permute.xlu0 %4967
      %4969 = vrot.lane.b32.xlu0 %v4839, 80
      %v4970 = vpop.permute.xlu0 %4969
      %4971 = vrot.lane.b32.xlu0 %v4840, 80
      %v4972 = vpop.permute.xlu0 %4971
      %4973 = vrot.lane.b32.xlu0 %v4841, 80
      %v4974 = vpop.permute.xlu0 %4973
      %4975 = vrot.lane.b32.xlu0 %v4842, 80
      %v4976 = vpop.permute.xlu0 %4975
      %4977 = vrot.lane.b32.xlu0 %v4843, 80
      %v4978 = vpop.permute.xlu0 %4977
      %4979 = vrot.lane.b32.xlu0 %v4948, 80
      %v4980 = vpop.permute.xlu0 %4979
      %v4981 = vunpack.c.l.b16 %v4053
      %v4982 = vunpack.c.l.b16 %v4054
      %v4983 = vpack.c.b16 %v4982, %v4981
      %4984 = vrot.lane.b32.xlu0 %v4702, 96
      %v4985 = vpop.permute.xlu0 %4984
      %4986 = vrot.lane.b32.xlu0 %v4703, 96
      %v4987 = vpop.permute.xlu0 %4986
      %4988 = vrot.lane.b32.xlu0 %v4704, 96
      %v4989 = vpop.permute.xlu0 %4988
      %4990 = vrot.lane.b32.xlu0 %v4705, 96
      %v4991 = vpop.permute.xlu0 %4990
      %4992 = vrot.lane.b32.xlu0 %v4706, 96
      %v4993 = vpop.permute.xlu0 %4992
      %4994 = vrot.lane.b32.xlu0 %v4707, 96
      %v4995 = vpop.permute.xlu0 %4994
      %4996 = vrot.lane.b32.xlu0 %v4708, 96
      %v4997 = vpop.permute.xlu0 %4996
      %4998 = vrot.lane.b32.xlu0 %v4709, 96
      %v4999 = vpop.permute.xlu0 %4998
      %5000 = vrot.lane.b32.xlu0 %v4710, 96
      %v5001 = vpop.permute.xlu0 %5000
      %5002 = vrot.lane.b32.xlu0 %v4711, 96
      %v5003 = vpop.permute.xlu0 %5002
      %5004 = vrot.lane.b32.xlu0 %v4712, 96
      %v5005 = vpop.permute.xlu0 %5004
      %5006 = vrot.lane.b32.xlu0 %v4713, 96
      %v5007 = vpop.permute.xlu0 %5006
      %5008 = vrot.lane.b32.xlu0 %v4714, 96
      %v5009 = vpop.permute.xlu0 %5008
      %5010 = vrot.lane.b32.xlu0 %v4715, 96
      %v5011 = vpop.permute.xlu0 %5010
      %5012 = vrot.lane.b32.xlu0 %v4878, 96
      %v5013 = vpop.permute.xlu0 %5012
      %5014 = vrot.lane.b32.xlu0 %v4983, 96
      %v5015 = vpop.permute.xlu0 %5014
      %v5016 = vunpack.c.l.b16 %v4647
      %v5017 = vunpack.c.l.b16 %v4657
      %v5018 = vpack.c.b16 %v5017, %v5016
      %5019 = vrot.lane.b32.xlu0 %v4750, 112
      %v5020 = vpop.permute.xlu0 %5019
      %5021 = vrot.lane.b32.xlu0 %v4751, 112
      %v5022 = vpop.permute.xlu0 %5021
      %5023 = vrot.lane.b32.xlu0 %v4752, 112
      %v5024 = vpop.permute.xlu0 %5023
      %5025 = vrot.lane.b32.xlu0 %v4753, 112
      %v5026 = vpop.permute.xlu0 %5025
      %5027 = vrot.lane.b32.xlu0 %v4754, 112
      %v5028 = vpop.permute.xlu0 %5027
      %5029 = vrot.lane.b32.xlu0 %v4755, 112
      %v5030 = vpop.permute.xlu0 %5029
      %5031 = vrot.lane.b32.xlu0 %v4756, 112
      %v5032 = vpop.permute.xlu0 %5031
      %5033 = vrot.lane.b32.xlu0 %v4757, 112
      %v5034 = vpop.permute.xlu0 %5033
      %5035 = vrot.lane.b32.xlu0 %v4758, 112
      %v5036 = vpop.permute.xlu0 %5035
      %5037 = vrot.lane.b32.xlu0 %v4759, 112
      %v5038 = vpop.permute.xlu0 %5037
      %5039 = vrot.lane.b32.xlu0 %v4760, 112
      %v5040 = vpop.permute.xlu0 %5039
      %5041 = vrot.lane.b32.xlu0 %v4761, 112
      %v5042 = vpop.permute.xlu0 %5041
      %5043 = vrot.lane.b32.xlu0 %v4762, 112
      %v5044 = vpop.permute.xlu0 %5043
      %5045 = vrot.lane.b32.xlu0 %v4763, 112
      %v5046 = vpop.permute.xlu0 %5045
      %5047 = vrot.lane.b32.xlu0 %v4913, 112
      %v5048 = vpop.permute.xlu0 %5047
      %5049 = vrot.lane.b32.xlu0 %v5018, 112
      %v5050 = vpop.permute.xlu0 %5049
      %v5051 = vunpack.c.l.b16 %v4664
      %v5052 = vunpack.c.l.b16 %v4667
      %v5053 = vpack.c.b16 %v5052, %v5051
      %v5056 = vsel %vm528, %v4700, %v4765
      %v5059 = vsel %vm528, %v4701, %v4767
      %v5062 = vsel %vm528, %v4702, %v4769
      %v5065 = vsel %vm528, %v4703, %v4771
      %v5068 = vsel %vm528, %v4704, %v4773
      %v5071 = vsel %vm528, %v4705, %v4775
      %v5074 = vsel %vm528, %v4706, %v4777
      %v5077 = vsel %vm528, %v4707, %v4779
      %v5080 = vsel %vm528, %v4708, %v4781
      %v5083 = vsel %vm528, %v4709, %v4783
      %v5086 = vsel %vm528, %v4710, %v4785
      %v5089 = vsel %vm528, %v4711, %v4787
      %v5092 = vsel %vm528, %v4712, %v4789
      %v5095 = vsel %vm528, %v4713, %v4791
      %v5098 = vsel %vm528, %v4714, %v4793
      %v5101 = vsel %vm528, %v4715, %v4795
      %v5103 = vsel %vm2493, %v5056, %v4845
      %v5105 = vsel %vm2493, %v5059, %v4847
      %v5107 = vsel %vm2493, %v5062, %v4849
      %v5109 = vsel %vm2493, %v5065, %v4851
      %v5111 = vsel %vm2493, %v5068, %v4853
      %v5113 = vsel %vm2493, %v5071, %v4855
      %v5115 = vsel %vm2493, %v5074, %v4857
      %v5117 = vsel %vm2493, %v5077, %v4859
      %v5119 = vsel %vm2493, %v5080, %v4861
      %v5121 = vsel %vm2493, %v5083, %v4863
      %v5123 = vsel %vm2493, %v5086, %v4865
      %v5125 = vsel %vm2493, %v5089, %v4867
      %v5127 = vsel %vm2493, %v5092, %v4869
      %v5129 = vsel %vm2493, %v5095, %v4871
      %v5131 = vsel %vm2493, %v5098, %v4873
      %v5133 = vsel %vm2493, %v5101, %v4875
      %v5135 = vsel %vm2526, %v5103, %v4880
      %v5137 = vsel %vm2526, %v5105, %v4882
      %v5139 = vsel %vm2526, %v5107, %v4884
      %v5141 = vsel %vm2526, %v5109, %v4886
      %v5143 = vsel %vm2526, %v5111, %v4888
      %v5145 = vsel %vm2526, %v5113, %v4890
      %v5147 = vsel %vm2526, %v5115, %v4892
      %v5149 = vsel %vm2526, %v5117, %v4894
      %v5151 = vsel %vm2526, %v5119, %v4896
      %v5153 = vsel %vm2526, %v5121, %v4898
      %v5155 = vsel %vm2526, %v5123, %v4900
      %v5157 = vsel %vm2526, %v5125, %v4902
      %v5159 = vsel %vm2526, %v5127, %v4904
      %v5161 = vsel %vm2526, %v5129, %v4906
      %v5163 = vsel %vm2526, %v5131, %v4908
      %v5165 = vsel %vm2526, %v5133, %v4910
      %v5167 = vsel %vm2559, %v5135, %v4915
      %v5169 = vsel %vm2559, %v5137, %v4917
      %v5171 = vsel %vm2559, %v5139, %v4919
      %v5173 = vsel %vm2559, %v5141, %v4921
      %v5175 = vsel %vm2559, %v5143, %v4923
      %v5177 = vsel %vm2559, %v5145, %v4925
      %v5179 = vsel %vm2559, %v5147, %v4927
      %v5181 = vsel %vm2559, %v5149, %v4929
      %v5183 = vsel %vm2559, %v5151, %v4931
      %v5185 = vsel %vm2559, %v5153, %v4933
      %v5187 = vsel %vm2559, %v5155, %v4935
      %v5189 = vsel %vm2559, %v5157, %v4937
      %v5191 = vsel %vm2559, %v5159, %v4939
      %v5193 = vsel %vm2559, %v5161, %v4941
      %v5195 = vsel %vm2559, %v5163, %v4943
      %v5197 = vsel %vm2559, %v5165, %v4945
      %v5199 = vsel %vm2592, %v5167, %v4950
      %v5201 = vsel %vm2592, %v5169, %v4952
      %v5203 = vsel %vm2592, %v5171, %v4954
      %v5205 = vsel %vm2592, %v5173, %v4956
      %v5207 = vsel %vm2592, %v5175, %v4958
      %v5209 = vsel %vm2592, %v5177, %v4960
      %v5211 = vsel %vm2592, %v5179, %v4962
      %v5213 = vsel %vm2592, %v5181, %v4964
      %v5215 = vsel %vm2592, %v5183, %v4966
      %v5217 = vsel %vm2592, %v5185, %v4968
      %v5219 = vsel %vm2592, %v5187, %v4970
      %v5221 = vsel %vm2592, %v5189, %v4972
      %v5223 = vsel %vm2592, %v5191, %v4974
      %v5225 = vsel %vm2592, %v5193, %v4976
      %v5227 = vsel %vm2592, %v5195, %v4978
      %v5229 = vsel %vm2592, %v5197, %v4980
      %v5231 = vsel %vm2625, %v5199, %v4985
      %v5233 = vsel %vm2625, %v5201, %v4987
      %v5235 = vsel %vm2625, %v5203, %v4989
      %v5237 = vsel %vm2625, %v5205, %v4991
      %v5239 = vsel %vm2625, %v5207, %v4993
      %v5241 = vsel %vm2625, %v5209, %v4995
      %v5243 = vsel %vm2625, %v5211, %v4997
      %v5245 = vsel %vm2625, %v5213, %v4999
      %v5247 = vsel %vm2625, %v5215, %v5001
      %v5249 = vsel %vm2625, %v5217, %v5003
      %v5251 = vsel %vm2625, %v5219, %v5005
      %v5253 = vsel %vm2625, %v5221, %v5007
      %v5255 = vsel %vm2625, %v5223, %v5009
      %v5257 = vsel %vm2625, %v5225, %v5011
      %v5259 = vsel %vm2625, %v5227, %v5013
      %v5261 = vsel %vm2625, %v5229, %v5015
      %v5263 = vsel %vm2658, %v5231, %v5020
      %v5266 = vsel %vm2658, %v5233, %v5022
      %v5269 = vsel %vm2658, %v5235, %v5024
      %v5272 = vsel %vm2658, %v5237, %v5026
      %v5275 = vsel %vm2658, %v5239, %v5028
      %v5278 = vsel %vm2658, %v5241, %v5030
      %v5281 = vsel %vm2658, %v5243, %v5032
      %v5284 = vsel %vm2658, %v5245, %v5034
      %v5287 = vsel %vm2658, %v5247, %v5036
      %v5290 = vsel %vm2658, %v5249, %v5038
      %v5293 = vsel %vm2658, %v5251, %v5040
      %v5296 = vsel %vm2658, %v5253, %v5042
      %v5299 = vsel %vm2658, %v5255, %v5044
      %v5302 = vsel %vm2658, %v5257, %v5046
      %v5305 = vsel %vm2658, %v5259, %v5048
      %v5308 = vsel %vm2658, %v5261, %v5050
      %v5310 = vld [vmem:[%s8] sm:$0xf]
      %v5311 = vld [vmem:[%s8 + $0x4] sm:$0xf]
      %v5312 = vunpack.c.l.bf16 %v5310
      %v5313 = vunpack.c.l.bf16 %v5311
      %5315 = vrot.lane.b32.xlu0 %v3382, 96
      %v5316 = vpop.permute.xlu0 %5315
      %s5317 = vtos %v5316
      %v5318 = vstv %s5317
      %v5320 = vmul.f32 %v5312, %v5318
      %v5321 = vmul.f32 %v5313, %v5318
      %v5322 = vpack.c.bf16 %v5321, %v5320
      %s5323 = scalar_lea.vmem %s8, 8
      %v5324 = vld [vmem:[%s5323] sm:$0xf]
      %v5325 = vld [vmem:[%s5323 + $0x4] sm:$0xf]
      %v5326 = vunpack.c.l.bf16 %v5324
      %v5327 = vunpack.c.l.bf16 %v5325
      %5328 = vrot.lane.b32.xlu0 %v3382, 95
      %v5329 = vpop.permute.xlu0 %5328
      %s5330 = vtos %v5329
      %v5331 = vstv %s5330
      %v5333 = vmul.f32 %v5326, %v5331
      %v5334 = vmul.f32 %v5327, %v5331
      %v5335 = vpack.c.bf16 %v5334, %v5333
      %s5336 = scalar_lea.vmem %s8, 16
      %v5337 = vld [vmem:[%s5336] sm:$0xf]
      %v5338 = vld [vmem:[%s5336 + $0x4] sm:$0xf]
      %v5339 = vunpack.c.l.bf16 %v5337
      %v5340 = vunpack.c.l.bf16 %v5338
      %5341 = vrot.lane.b32.xlu0 %v3382, 94
      %v5342 = vpop.permute.xlu0 %5341
      %s5343 = vtos %v5342
      %v5344 = vstv %s5343
      %v5346 = vmul.f32 %v5339, %v5344
      %v5347 = vmul.f32 %v5340, %v5344
      %v5348 = vpack.c.bf16 %v5347, %v5346
      %s5349 = scalar_lea.vmem %s8, 24
      %v5350 = vld [vmem:[%s5349] sm:$0xf]
      %v5351 = vld [vmem:[%s5349 + $0x4] sm:$0xf]
      %v5352 = vunpack.c.l.bf16 %v5350
      %v5353 = vunpack.c.l.bf16 %v5351
      %5354 = vrot.lane.b32.xlu0 %v3382, 93
      %v5355 = vpop.permute.xlu0 %5354
      %s5356 = vtos %v5355
      %v5357 = vstv %s5356
      %v5359 = vmul.f32 %v5352, %v5357
      %v5360 = vmul.f32 %v5353, %v5357
      %v5361 = vpack.c.bf16 %v5360, %v5359
      %s5362 = scalar_lea.vmem %s8, 32
      %v5363 = vld [vmem:[%s5362] sm:$0xf]
      %v5364 = vld [vmem:[%s5362 + $0x4] sm:$0xf]
      %v5365 = vunpack.c.l.bf16 %v5363
      %v5366 = vunpack.c.l.bf16 %v5364
      %5367 = vrot.lane.b32.xlu0 %v3382, 92
      %v5368 = vpop.permute.xlu0 %5367
      %s5369 = vtos %v5368
      %v5370 = vstv %s5369
      %v5372 = vmul.f32 %v5365, %v5370
      %v5373 = vmul.f32 %v5366, %v5370
      %v5374 = vpack.c.bf16 %v5373, %v5372
      %s5375 = scalar_lea.vmem %s8, 40
      %v5376 = vld [vmem:[%s5375] sm:$0xf]
      %v5377 = vld [vmem:[%s5375 + $0x4] sm:$0xf]
      %v5378 = vunpack.c.l.bf16 %v5376
      %v5379 = vunpack.c.l.bf16 %v5377
      %5380 = vrot.lane.b32.xlu0 %v3382, 91
      %v5381 = vpop.permute.xlu0 %5380
      %s5382 = vtos %v5381
      %v5383 = vstv %s5382
      %v5385 = vmul.f32 %v5378, %v5383
      %v5386 = vmul.f32 %v5379, %v5383
      %v5387 = vpack.c.bf16 %v5386, %v5385
      %s5388 = scalar_lea.vmem %s8, 48
      %v5389 = vld [vmem:[%s5388] sm:$0xf]
      %v5390 = vld [vmem:[%s5388 + $0x4] sm:$0xf]
      %v5391 = vunpack.c.l.bf16 %v5389
      %v5392 = vunpack.c.l.bf16 %v5390
      %5393 = vrot.lane.b32.xlu0 %v3382, 90
      %v5394 = vpop.permute.xlu0 %5393
      %s5395 = vtos %v5394
      %v5396 = vstv %s5395
      %v5398 = vmul.f32 %v5391, %v5396
      %v5399 = vmul.f32 %v5392, %v5396
      %v5400 = vpack.c.bf16 %v5399, %v5398
      %s5401 = scalar_lea.vmem %s8, 56
      %v5402 = vld [vmem:[%s5401] sm:$0xf]
      %v5403 = vld [vmem:[%s5401 + $0x4] sm:$0xf]
      %v5404 = vunpack.c.l.bf16 %v5402
      %v5405 = vunpack.c.l.bf16 %v5403
      %5406 = vrot.lane.b32.xlu0 %v3382, 89
      %v5407 = vpop.permute.xlu0 %5406
      %s5408 = vtos %v5407
      %v5409 = vstv %s5408
      %v5411 = vmul.f32 %v5404, %v5409
      %v5412 = vmul.f32 %v5405, %v5409
      %v5413 = vpack.c.bf16 %v5412, %v5411
      %s5414 = scalar_lea.vmem %s8, 64
      %v5415 = vld [vmem:[%s5414] sm:$0xf]
      %v5416 = vld [vmem:[%s5414 + $0x4] sm:$0xf]
      %v5417 = vunpack.c.l.bf16 %v5415
      %v5418 = vunpack.c.l.bf16 %v5416
      %5419 = vrot.lane.b32.xlu0 %v3382, 88
      %v5420 = vpop.permute.xlu0 %5419
      %s5421 = vtos %v5420
      %v5422 = vstv %s5421
      %v5424 = vmul.f32 %v5417, %v5422
      %v5425 = vmul.f32 %v5418, %v5422
      %v5426 = vpack.c.bf16 %v5425, %v5424
      %v5428 = vsel %vm528, %v4830, 0
      %v5431 = vsel %vm528, %v4831, 0
      %v5434 = vsel %vm528, %v4832, 0
      %v5437 = vsel %vm528, %v4833, 0
      %v5440 = vsel %vm528, %v4834, 0
      %v5443 = vsel %vm528, %v4835, 0
      %v5446 = vsel %vm528, %v4836, 0
      %v5449 = vsel %vm528, %v4837, 0
      %v5452 = vsel %vm528, %v4838, 0
      %v5455 = vsel %vm528, %v4839, 0
      %v5458 = vsel %vm528, %v4840, 0
      %v5461 = vsel %vm528, %v4841, 0
      %v5464 = vsel %vm528, %v4842, 0
      %v5467 = vsel %vm528, %v4843, 0
      %v5470 = vsel %vm528, %v4948, 0
      %v5473 = vsel %vm528, %v5053, 0
      %5475 = vmatprep.subr.bf16.mxu0 0
      %5476 = vmatpush1.bf16.msra.mxu0 %v5322
      %5477 = vmatprep.subr.bf16.mxu0 0
      %5478 = vmatpush1.bf16.msra.mxu0 %v5335
      %5479 = vmatprep.subr.bf16.mxu0 0
      %5480 = vmatpush1.bf16.msra.mxu0 %v5348
      %5481 = vmatprep.subr.bf16.mxu0 0
      %5482 = vmatpush1.bf16.msra.mxu0 %v5361
      %5483 = vmatprep.subr.bf16.mxu0 0
      %5484 = vmatpush1.bf16.msra.mxu0 %v5374
      %5485 = vmatprep.subr.bf16.mxu0 0
      %5486 = vmatpush1.bf16.msra.mxu0 %v5387
      %5487 = vmatprep.subr.bf16.mxu0 0
      %5488 = vmatpush1.bf16.msra.mxu0 %v5400
      %5489 = vmatprep.subr.bf16.mxu0 0
      %5490 = vmatpush1.bf16.msra.mxu0 %v5413
      %5491 = vmatprep.subr.bf16.mxu0 0
      %5492 = vmatpush1.bf16.msra.mxu0 %v5426
      %5493 = vmatprep.subr.bf16.mxu0 0
      %5494 = vmatpush1.bf16.msra.mxu0 0
      %5495 = vmatprep.subr.bf16.mxu0 0
      %5496 = vmatpush1.bf16.msra.mxu0 0
      %5497 = vmatprep.subr.bf16.mxu0 0
      %5498 = vmatpush1.bf16.msra.mxu0 0
      %5499 = vmatprep.subr.bf16.mxu0 0
      %5500 = vmatpush1.bf16.msra.mxu0 0
      %5501 = vmatprep.subr.bf16.mxu0 0
      %5502 = vmatpush1.bf16.msra.mxu0 0
      %5503 = vmatprep.subr.bf16.mxu0 0
      %5504 = vmatpush1.bf16.msra.mxu0 0
      %5505 = vmatprep.subr.bf16.mxu0 0
      %5506 = vmatpush1.bf16.msra.mxu0 0
      %5507 = vmatprep.mubr.bf16.mxu0 %v5428
      %5508 = vmatmul.mubr.bf16.gmra.mrb[0].mxu0 %v5263
      %v5509 = vpop.f32.mrb[0].mxu0
      %v5510 = vadd.f32 0.0, %v5509
      %v5511 = vpop.f32.mrb[0].mxu0
      %v5512 = vpop.f32.mrb[0].mxu0
      %v5513 = vadd.f32 0.0, %v5512
      %v5514 = vpop.f32.mrb[0].mxu0
      %5515 = vmatprep.mubr.bf16.mxu0 %v5431
      %5516 = vmatmul.mubr.bf16.gmra.mrb[0].mxu0 %v5266
      %v5517 = vpop.f32.mrb[0].mxu0
      %v5518 = vadd.f32 0.0, %v5517
      %v5519 = vpop.f32.mrb[0].mxu0
      %v5520 = vpop.f32.mrb[0].mxu0
      %v5521 = vadd.f32 0.0, %v5520
      %v5522 = vpop.f32.mrb[0].mxu0
      %5523 = vmatprep.mubr.bf16.mxu0 %v5434
      %5524 = vmatmul.mubr.bf16.gmra.mrb[0].mxu0 %v5269
      %v5525 = vpop.f32.mrb[0].mxu0
      %v5526 = vadd.f32 0.0, %v5525
      %v5527 = vpop.f32.mrb[0].mxu0
      %v5528 = vpop.f32.mrb[0].mxu0
      %v5529 = vadd.f32 0.0, %v5528
      %v5530 = vpop.f32.mrb[0].mxu0
      %5531 = vmatprep.mubr.bf16.mxu0 %v5437
      %5532 = vmatmul.mubr.bf16.gmra.mrb[0].mxu0 %v5272
      %v5533 = vpop.f32.mrb[0].mxu0
      %v5534 = vadd.f32 0.0, %v5533
      %v5535 = vpop.f32.mrb[0].mxu0
      %v5536 = vpop.f32.mrb[0].mxu0
      %v5537 = vadd.f32 0.0, %v5536
      %v5538 = vpop.f32.mrb[0].mxu0
      %5539 = vmatprep.mubr.bf16.mxu0 %v5440
      %5540 = vmatmul.mubr.bf16.gmra.mrb[0].mxu0 %v5275
      %v5541 = vpop.f32.mrb[0].mxu0
      %v5542 = vadd.f32 0.0, %v5541
      %v5543 = vpop.f32.mrb[0].mxu0
      %v5544 = vpop.f32.mrb[0].mxu0
      %v5545 = vadd.f32 0.0, %v5544
      %v5546 = vpop.f32.mrb[0].mxu0
      %5547 = vmatprep.mubr.bf16.mxu0 %v5443
      %5548 = vmatmul.mubr.bf16.gmra.mrb[0].mxu0 %v5278
      %v5549 = vpop.f32.mrb[0].mxu0
      %v5550 = vadd.f32 0.0, %v5549
      %v5551 = vpop.f32.mrb[0].mxu0
      %v5552 = vpop.f32.mrb[0].mxu0
      %v5553 = vadd.f32 0.0, %v5552
      %v5554 = vpop.f32.mrb[0].mxu0
      %5555 = vmatprep.mubr.bf16.mxu0 %v5446
      %5556 = vmatmul.mubr.bf16.gmra.mrb[0].mxu0 %v5281
      %v5557 = vpop.f32.mrb[0].mxu0
      %v5558 = vadd.f32 0.0, %v5557
      %v5559 = vpop.f32.mrb[0].mxu0
      %v5560 = vpop.f32.mrb[0].mxu0
      %v5561 = vadd.f32 0.0, %v5560
      %v5562 = vpop.f32.mrb[0].mxu0
      %5563 = vmatprep.mubr.bf16.mxu0 %v5449
      %5564 = vmatmul.mubr.bf16.gmra.mrb[0].mxu0 %v5284
      %v5565 = vpop.f32.mrb[0].mxu0
      %v5566 = vadd.f32 0.0, %v5565
      %v5567 = vpop.f32.mrb[0].mxu0
      %v5568 = vpop.f32.mrb[0].mxu0
      %v5569 = vadd.f32 0.0, %v5568
      %v5570 = vpop.f32.mrb[0].mxu0
      %5571 = vmatprep.mubr.bf16.mxu0 %v5452
      %5572 = vmatmul.mubr.bf16.gmra.mrb[0].mxu0 %v5287
      %v5573 = vpop.f32.mrb[0].mxu0
      %v5574 = vadd.f32 0.0, %v5573
      %v5575 = vpop.f32.mrb[0].mxu0
      %v5576 = vpop.f32.mrb[0].mxu0
      %v5577 = vadd.f32 0.0, %v5576
      %v5578 = vpop.f32.mrb[0].mxu0
      %5579 = vmatprep.mubr.bf16.mxu0 %v5455
      %5580 = vmatmul.mubr.bf16.gmra.mrb[0].mxu0 %v5290
      %v5581 = vpop.f32.mrb[0].mxu0
      %v5582 = vadd.f32 0.0, %v5581
      %v5583 = vpop.f32.mrb[0].mxu0
      %v5584 = vpop.f32.mrb[0].mxu0
      %v5585 = vadd.f32 0.0, %v5584
      %v5586 = vpop.f32.mrb[0].mxu0
      %5587 = vmatprep.mubr.bf16.mxu0 %v5458
      %5588 = vmatmul.mubr.bf16.gmra.mrb[0].mxu0 %v5293
      %v5589 = vpop.f32.mrb[0].mxu0
      %v5590 = vadd.f32 0.0, %v5589
      %v5591 = vpop.f32.mrb[0].mxu0
      %v5592 = vpop.f32.mrb[0].mxu0
      %v5593 = vadd.f32 0.0, %v5592
      %v5594 = vpop.f32.mrb[0].mxu0
      %5595 = vmatprep.mubr.bf16.mxu0 %v5461
      %5596 = vmatmul.mubr.bf16.gmra.mrb[0].mxu0 %v5296
      %v5597 = vpop.f32.mrb[0].mxu0
      %v5598 = vadd.f32 0.0, %v5597
      %v5599 = vpop.f32.mrb[0].mxu0
      %v5600 = vpop.f32.mrb[0].mxu0
      %v5601 = vadd.f32 0.0, %v5600
      %v5602 = vpop.f32.mrb[0].mxu0
      %5603 = vmatprep.mubr.bf16.mxu0 %v5464
      %5604 = vmatmul.mubr.bf16.gmra.mrb[0].mxu0 %v5299
      %v5605 = vpop.f32.mrb[0].mxu0
      %v5606 = vadd.f32 0.0, %v5605
      %v5607 = vpop.f32.mrb[0].mxu0
      %v5608 = vpop.f32.mrb[0].mxu0
      %v5609 = vadd.f32 0.0, %v5608
      %v5610 = vpop.f32.mrb[0].mxu0
      %5611 = vmatprep.mubr.bf16.mxu0 %v5467
      %5612 = vmatmul.mubr.bf16.gmra.mrb[0].mxu0 %v5302
      %v5613 = vpop.f32.mrb[0].mxu0
      %v5614 = vadd.f32 0.0, %v5613
      %v5615 = vpop.f32.mrb[0].mxu0
      %v5616 = vpop.f32.mrb[0].mxu0
      %v5617 = vadd.f32 0.0, %v5616
      %v5618 = vpop.f32.mrb[0].mxu0
      %5619 = vmatprep.mubr.bf16.mxu0 %v5470
      %5620 = vmatmul.mubr.bf16.gmra.mrb[0].mxu0 %v5305
      %v5621 = vpop.f32.mrb[0].mxu0
      %v5622 = vadd.f32 0.0, %v5621
      %v5623 = vpop.f32.mrb[0].mxu0
      %v5624 = vpop.f32.mrb[0].mxu0
      %v5625 = vadd.f32 0.0, %v5624
      %v5626 = vpop.f32.mrb[0].mxu0
      %5627 = vmatprep.mubr.bf16.mxu0 %v5473
      %5628 = vmatmul.mubr.bf16.gmra.mrb[0].mxu0 %v5308
      %v5629 = vpop.f32.mrb[0].mxu0
      %v5630 = vadd.f32 0.0, %v5629
      %v5631 = vpop.f32.mrb[0].mxu0
      %v5632 = vpop.f32.mrb[0].mxu0
      %v5633 = vadd.f32 0.0, %v5632
      %v5634 = vpop.f32.mrb[0].mxu0
      %5635 = vdwg.mxu0
      %v5636 = vld [vmem:[%s13] sm:$0x1]
      %v5638 = vlaneseq
      %v5639 = vshrl.u32 %v5638, 7
      %v5640 = vsub.s32 0, %v5639
      %v5641 = vrot.slane %v5636, %v5640
      %5642 = vrot.lane.b32.xlu0 %v5641, 16
      %v5643 = vpop.permute.xlu0 %5642
      %v5645 = vmul.f32 %v3382, %v5643
      %v5646 = vlaneseq
      %v5647 = vshrl.u32 %v5646, 7
      %v5648 = vsub.s32 0, %v5647
      %v5649 = vrot.slane %v5645, %v5648
      %5651 = vrot.lane.b32.xlu0 %v5649, 112
      %v5652 = vpop.permute.xlu0 %5651
      %v5654 = vmul.f32 %v5510, %v5652
      %v5655 = vmul.f32 %v5513, %v5652
      %v5656 = vmul.f32 %v5518, %v5652
      %v5657 = vmul.f32 %v5521, %v5652
      %v5658 = vmul.f32 %v5526, %v5652
      %v5659 = vmul.f32 %v5529, %v5652
      %v5660 = vmul.f32 %v5534, %v5652
      %v5661 = vmul.f32 %v5537, %v5652
      %v5662 = vmul.f32 %v5542, %v5652
      %v5663 = vmul.f32 %v5545, %v5652
      %v5664 = vmul.f32 %v5550, %v5652
      %v5665 = vmul.f32 %v5553, %v5652
      %v5666 = vmul.f32 %v5558, %v5652
      %v5667 = vmul.f32 %v5561, %v5652
      %v5668 = vmul.f32 %v5566, %v5652
      %v5669 = vmul.f32 %v5569, %v5652
      %v5670 = vmul.f32 %v5574, %v5652
      %v5671 = vmul.f32 %v5577, %v5652
      %v5672 = vmul.f32 %v5582, %v5652
      %v5673 = vmul.f32 %v5585, %v5652
      %v5674 = vmul.f32 %v5590, %v5652
      %v5675 = vmul.f32 %v5593, %v5652
      %v5676 = vmul.f32 %v5598, %v5652
      %v5677 = vmul.f32 %v5601, %v5652
      %v5678 = vmul.f32 %v5606, %v5652
      %v5679 = vmul.f32 %v5609, %v5652
      %v5680 = vmul.f32 %v5614, %v5652
      %v5681 = vmul.f32 %v5617, %v5652
      %v5682 = vmul.f32 %v5622, %v5652
      %v5683 = vmul.f32 %v5625, %v5652
      %v5684 = vmul.f32 %v5630, %v5652
      %v5685 = vmul.f32 %v5633, %v5652
      %v5686 = vld [vmem:[%s14] sm:$0x1]
      %v5688 = vlaneseq
      %v5689 = vshrl.u32 %v5688, 7
      %v5690 = vsub.s32 0, %v5689
      %v5691 = vrot.slane %v5686, %v5690
      %v5693 = vadd.f32 %v5654, %v5691
      %v5694 = vadd.f32 %v5655, %v5691
      %v5695 = vadd.f32 %v5656, %v5691
      %v5696 = vadd.f32 %v5657, %v5691
      %v5697 = vadd.f32 %v5658, %v5691
      %v5698 = vadd.f32 %v5659, %v5691
      %v5699 = vadd.f32 %v5660, %v5691
      %v5700 = vadd.f32 %v5661, %v5691
      %v5701 = vadd.f32 %v5662, %v5691
      %v5702 = vadd.f32 %v5663, %v5691
      %v5703 = vadd.f32 %v5664, %v5691
      %v5704 = vadd.f32 %v5665, %v5691
      %v5705 = vadd.f32 %v5666, %v5691
      %v5706 = vadd.f32 %v5667, %v5691
      %v5707 = vadd.f32 %v5668, %v5691
      %v5708 = vadd.f32 %v5669, %v5691
      %v5709 = vadd.f32 %v5670, %v5691
      %v5710 = vadd.f32 %v5671, %v5691
      %v5711 = vadd.f32 %v5672, %v5691
      %v5712 = vadd.f32 %v5673, %v5691
      %v5713 = vadd.f32 %v5674, %v5691
      %v5714 = vadd.f32 %v5675, %v5691
      %v5715 = vadd.f32 %v5676, %v5691
      %v5716 = vadd.f32 %v5677, %v5691
      %v5717 = vadd.f32 %v5678, %v5691
      %v5718 = vadd.f32 %v5679, %v5691
      %v5719 = vadd.f32 %v5680, %v5691
      %v5720 = vadd.f32 %v5681, %v5691
      %v5721 = vadd.f32 %v5682, %v5691
      %v5722 = vadd.f32 %v5683, %v5691
      %v5723 = vadd.f32 %v5684, %v5691
      %v5724 = vadd.f32 %v5685, %v5691
      %v5725 = vadd.f32 %v5693, %v496
      %v5726 = vadd.f32 %v5694, %v497
      %v5727 = vadd.f32 %v5695, %v498
      %v5728 = vadd.f32 %v5696, %v499
      %v5729 = vadd.f32 %v5697, %v500
      %v5730 = vadd.f32 %v5698, %v501
      %v5731 = vadd.f32 %v5699, %v502
      %v5732 = vadd.f32 %v5700, %v503
      %v5733 = vadd.f32 %v5701, %v504
      %v5734 = vadd.f32 %v5702, %v505
      %v5735 = vadd.f32 %v5703, %v506
      %v5736 = vadd.f32 %v5704, %v507
      %v5737 = vadd.f32 %v5705, %v508
      %v5738 = vadd.f32 %v5706, %v509
      %v5739 = vadd.f32 %v5707, %v510
      %v5740 = vadd.f32 %v5708, %v511
      %v5741 = vadd.f32 %v5709, %v512
      %v5742 = vadd.f32 %v5710, %v513
      %v5743 = vadd.f32 %v5711, %v514
      %v5744 = vadd.f32 %v5712, %v515
      %v5745 = vadd.f32 %v5713, %v516
      %v5746 = vadd.f32 %v5714, %v517
      %v5747 = vadd.f32 %v5715, %v518
      %v5748 = vadd.f32 %v5716, %v519
      %v5749 = vadd.f32 %v5717, %v520
      %v5750 = vadd.f32 %v5718, %v521
      %v5751 = vadd.f32 %v5719, %v522
      %v5752 = vadd.f32 %v5720, %v523
      %v5753 = vadd.f32 %v5721, %v524
      %v5754 = vadd.f32 %v5722, %v525
      %v5755 = vadd.f32 %v5723, %v526
      %v5756 = vadd.f32 %v5724, %v527
      %v5757 = vmax.f32 %v5725, 0.0
      %v5758 = vmax.f32 %v5726, 0.0
      %v5759 = vmax.f32 %v5727, 0.0
      %v5760 = vmax.f32 %v5728, 0.0
      %v5761 = vmax.f32 %v5729, 0.0
      %v5762 = vmax.f32 %v5730, 0.0
      %v5763 = vmax.f32 %v5731, 0.0
      %v5764 = vmax.f32 %v5732, 0.0
      %v5765 = vmax.f32 %v5733, 0.0
      %v5766 = vmax.f32 %v5734, 0.0
      %v5767 = vmax.f32 %v5735, 0.0
      %v5768 = vmax.f32 %v5736, 0.0
      %v5769 = vmax.f32 %v5737, 0.0
      %v5770 = vmax.f32 %v5738, 0.0
      %v5771 = vmax.f32 %v5739, 0.0
      %v5772 = vmax.f32 %v5740, 0.0
      %v5773 = vmax.f32 %v5741, 0.0
      %v5774 = vmax.f32 %v5742, 0.0
      %v5775 = vmax.f32 %v5743, 0.0
      %v5776 = vmax.f32 %v5744, 0.0
      %v5777 = vmax.f32 %v5745, 0.0
      %v5778 = vmax.f32 %v5746, 0.0
      %v5779 = vmax.f32 %v5747, 0.0
      %v5780 = vmax.f32 %v5748, 0.0
      %v5781 = vmax.f32 %v5749, 0.0
      %v5782 = vmax.f32 %v5750, 0.0
      %v5783 = vmax.f32 %v5751, 0.0
      %v5784 = vmax.f32 %v5752, 0.0
      %v5785 = vmax.f32 %v5753, 0.0
      %v5786 = vmax.f32 %v5754, 0.0
      %v5787 = vmax.f32 %v5755, 0.0
      %v5788 = vmax.f32 %v5756, 0.0
      %5789 = vst.msk [vmem:[%s494] sm:$0xff] %vm528, %v5757
      %5790 = vst.msk [vmem:[%s494 + $0x8] sm:$0xff] %vm528, %v5758
      %5791 = vst.msk [vmem:[%s494 + $0x10] sm:$0xff] %vm528, %v5759
      %5792 = vst.msk [vmem:[%s494 + $0x18] sm:$0xff] %vm528, %v5760
      %5793 = vst.msk [vmem:[%s494 + $0x20] sm:$0xff] %vm528, %v5761
      %5794 = vst.msk [vmem:[%s494 + $0x28] sm:$0xff] %vm528, %v5762
      %5795 = vst.msk [vmem:[%s494 + $0x30] sm:$0xff] %vm528, %v5763
      %5796 = vst.msk [vmem:[%s494 + $0x38] sm:$0xff] %vm528, %v5764
      %5797 = vst.msk [vmem:[%s494 + $0x40] sm:$0xff] %vm528, %v5765
      %5798 = vst.msk [vmem:[%s494 + $0x48] sm:$0xff] %vm528, %v5766
      %5799 = vst.msk [vmem:[%s494 + $0x50] sm:$0xff] %vm528, %v5767
      %5800 = vst.msk [vmem:[%s494 + $0x58] sm:$0xff] %vm528, %v5768
      %5801 = vst.msk [vmem:[%s494 + $0x60] sm:$0xff] %vm528, %v5769
      %5802 = vst.msk [vmem:[%s494 + $0x68] sm:$0xff] %vm528, %v5770
      %5803 = vst.msk [vmem:[%s494 + $0x70] sm:$0xff] %vm528, %v5771
      %5804 = vst.msk [vmem:[%s494 + $0x78] sm:$0xff] %vm528, %v5772
      %5805 = vst.msk [vmem:[%s494 + $0x80] sm:$0xff] %vm528, %v5773
      %5806 = vst.msk [vmem:[%s494 + $0x88] sm:$0xff] %vm528, %v5774
      %5807 = vst.msk [vmem:[%s494 + $0x90] sm:$0xff] %vm528, %v5775
      %5808 = vst.msk [vmem:[%s494 + $0x98] sm:$0xff] %vm528, %v5776
      %5809 = vst.msk [vmem:[%s494 + $0xa0] sm:$0xff] %vm528, %v5777
      %5810 = vst.msk [vmem:[%s494 + $0xa8] sm:$0xff] %vm528, %v5778
      %5811 = vst.msk [vmem:[%s494 + $0xb0] sm:$0xff] %vm528, %v5779
      %5812 = vst.msk [vmem:[%s494 + $0xb8] sm:$0xff] %vm528, %v5780
      %5813 = vst.msk [vmem:[%s494 + $0xc0] sm:$0xff] %vm528, %v5781
      %5814 = vst.msk [vmem:[%s494 + $0xc8] sm:$0xff] %vm528, %v5782
      %5815 = vst.msk [vmem:[%s494 + $0xd0] sm:$0xff] %vm528, %v5783
      %5816 = vst.msk [vmem:[%s494 + $0xd8] sm:$0xff] %vm528, %v5784
      %5817 = vst.msk [vmem:[%s494 + $0xe0] sm:$0xff] %vm528, %v5785
      %5818 = vst.msk [vmem:[%s494 + $0xe8] sm:$0xff] %vm528, %v5786
      %5819 = vst.msk [vmem:[%s494 + $0xf0] sm:$0xff] %vm528, %v5787
      %5820 = vst.msk [vmem:[%s494 + $0xf8] sm:$0xff] %vm528, %v5788
      %p5821 = scmp.lt.s32.totalorder %s26, 1
      %s5822 = scalar_select %p5821, %s26, 1
      %s5823 = smul.addr %s5822, 32
      %s5824 = smul.addr %s5823, 8
      %s5825 = scalar_lea.vmem %s15, %s5824
      // Predicated region
      $region81: #{basic_block_forward.1} parent=79 // pred_check
        %p5826 = pneg %p364
      $region82: #{basic_block_forward.1} parent=79 // pred_check_branch
        %5828 = sbr.rel (%p5826) target = $region84
      $region83: #{basic_block_forward.1} parent=79 // pred_region
        _
      $region84: #{basic_block_forward.1} parent=79 // pred_fallthru
        _
    $region80: #{basic_block_forward.1} parent=5 // pred_fallthru
      _
    %p5829 = scmp.le.s32.totalorder 2, %s21
    // Predicated region
    $region85: #{basic_block_forward.1} parent=5 // pred_check
      %p5830 = pneg %p5829
    $region86: #{basic_block_forward.1} parent=5 // pred_check_branch
      %5832 = sbr.rel (%p5830) target = $region88
    $region87: #{basic_block_forward.1} parent=5 // pred_region
      %s5833 = ssub.s32 %s21, 2
      // Predicated region
      $region89: #{basic_block_forward.1} parent=87 // pred_check
        %p5834 = pneg %p370
      $region90: #{basic_block_forward.1} parent=87 // pred_check_branch
        %5836 = sbr.rel (%p5834) target = $region92
      $region91: #{basic_block_forward.1} parent=87 // pred_region
        %p5837 = scmp.lt.s32.totalorder %s27, 1
        %s5838 = scalar_select %p5837, %s27, 1
        %s5839 = smul.addr %s5838, 32
        %s5840 = smul.addr %s5839, 8
        %s5841 = scalar_lea.vmem %s15, %s5840
      $region92: #{basic_block_forward.1} parent=87 // pred_fallthru
        _
    $region88: #{basic_block_forward.1} parent=5 // pred_fallthru
      _
  $region6: #{basic_block_forward.1} parent=0 // loop_footer
    %s25 = sadd.s32 1, %s21
  $region7: #{basic_block_forward.1} parent=0 // loop_footer_branch
    %20 = sbr.rel target = $region3
  $region8: #{basic_block_forward.1} parent=0 // loop_exit
    _

</llo_original>
